<compile_context>
chip_gen: v7x
topology: tpu7x:2x2x1
jax: 0.10.0
libtpu: 0.0.40
codegen_flags: <defaults>
</compile_context>

<pallas_src>
import jax
import jax.numpy as jnp
from jax.experimental import pallas as pl
from jax.experimental.pallas import tpu as pltpu


# ----------------------------------------------------------------------------
# Pallas kernel: 6 matmuls + bias (+relu); BN pre-folded into the weights
# ----------------------------------------------------------------------------
def ann_kernel(x_ref, w1_ref, w2_ref, w3_ref, w4_ref, w5_ref, w6_ref,
               b_ref, out_ref):
    def layer(h, w_ref, row, width):
        z = jnp.dot(h, w_ref[...], preferred_element_type=jnp.float32)
        z = z + b_ref[row:row + 1, :width]            # (1, width) broadcast add
        return jnp.maximum(z, 0.0).astype(jnp.bfloat16)

    h = x_ref[...]                                    # (TB, 2304) bf16
    h = layer(h, w1_ref, 0, 512)
    h = layer(h, w2_ref, 1, 256)
    h = layer(h, w3_ref, 2, 128)
    h = layer(h, w4_ref, 3, 128)                      # 64 padded to 128 lanes
    h = layer(h, w5_ref, 4, 128)                      # 32 padded to 128 lanes

    # final fc6 (7 outputs padded to 128 lanes), no relu / bn
    out = jnp.dot(h, w6_ref[...], preferred_element_type=jnp.float32)
    out = out + b_ref[5:6, :128]
    out_ref[...] = out.astype(out_ref.dtype)


# ----------------------------------------------------------------------------
# Wrapper: BN folding, lane padding, bf16 cast, bias packing, batch tiling
# ----------------------------------------------------------------------------
def _round_up(x, m):
    return (x + m - 1) // m * m


LANE = 128      # lane-dense width for the narrow layers / output
BIAS_W = 512    # width of packed bias slab (max layer width)


def ann_forward(x_nchw, params, *, eps=1e-5, tb=None):
    B = x_nchw.shape[0]
    x = x_nchw.reshape(B, -1).astype(jnp.bfloat16)    # Flatten -> (B, 2304), bf16
    d_in = x.shape[1]
    n_out = params["w6"].shape[1]                     # 7

    # --- fold BN(i) scale/shift into layer i+1's weights/bias (f32 math) ------
    ws = [params["w1"].astype(jnp.float32)]
    bs = [params["b1"].astype(jnp.float32)]
    for i in range(1, 6):
        s = params[f"gamma{i}"] / jnp.sqrt(params[f"rvar{i}"] + eps)
        t = params[f"beta{i}"] - params[f"rmean{i}"] * s
        w_next = params[f"w{i+1}"].astype(jnp.float32)
        b_next = params[f"b{i+1}"].astype(jnp.float32)
        ws.append(s[:, None] * w_next)
        bs.append(b_next + t @ w_next)

    # --- zero-pad narrow layers up to 128 lanes (exactly value-preserving) ----
    # layer widths become [512, 256, 128, 128, 128, 128]; padded activation
    # columns are ReLU(0 + 0) = 0 and hit zero-padded rows of the next weight.
    def pad2(w, rows, cols):
        return jnp.pad(w, ((0, rows - w.shape[0]), (0, cols - w.shape[1])))

    ws[3] = pad2(ws[3], 128, LANE)                    # (128, 64)  -> (128, 128)
    ws[4] = pad2(ws[4], LANE, LANE)                   # (64, 32)   -> (128, 128)
    ws[5] = pad2(ws[5], LANE, LANE)                   # (32, 7)    -> (128, 128)
    bs[3] = jnp.pad(bs[3], (0, LANE - bs[3].shape[0]))
    bs[4] = jnp.pad(bs[4], (0, LANE - bs[4].shape[0]))
    bs[5] = jnp.pad(bs[5], (0, LANE - bs[5].shape[0]))

    # weights in bf16 (one cast, in the wrapper)
    ws = [w.astype(jnp.bfloat16) for w in ws]

    # pack all biases into one (8, 512) f32 slab: one bias per sublane row
    bias_slab = jnp.zeros((8, BIAS_W), jnp.float32)
    for i, b in enumerate(bs):
        bias_slab = bias_slab.at[i, :b.shape[0]].set(b)

    # --- batch tiling: TB rows per grid step, weights resident across steps ---
    if tb is None:
        tb = min(512, _round_up(B, 8))
    b_pad = _round_up(B, tb)
    if b_pad != B:
        x = jnp.pad(x, ((0, b_pad - B), (0, 0)))
    grid = (b_pad // tb,)

    in_specs = [pl.BlockSpec((tb, d_in), lambda i: (i, 0))]
    in_specs += [pl.BlockSpec(w.shape, lambda i: (0, 0)) for w in ws]
    in_specs += [pl.BlockSpec((8, BIAS_W), lambda i: (0, 0))]
    out_specs = pl.BlockSpec((tb, LANE), lambda i: (i, 0))
    out_shape = jax.ShapeDtypeStruct((b_pad, LANE), jnp.float32)

    fn = pl.pallas_call(
        ann_kernel,
        grid=grid,
        in_specs=in_specs,
        out_specs=out_specs,
        out_shape=out_shape,
        compiler_params=pltpu.CompilerParams(
            dimension_semantics=("parallel",),        # megacore shard on v7x
            vmem_limit_bytes=32 << 20,                # safe on v7x (64 MiB VMEM)
        ),
    )
    out = fn(x, *ws, bias_slab)
    return out[:B, :n_out]


# ----------------------------------------------------------------------------
# Deterministic parameter init (PyTorch-style linear init; non-trivial BN
# params so the BN folding is actually exercised)
# ----------------------------------------------------------------------------
def init_params(key):
    dims = [48 * 48, 512, 256, 128, 64, 32, 7]
    params = {}
    for i in range(6):
        fan_in, fan_out = dims[i], dims[i + 1]
        key, kw, kb = jax.random.split(key, 3)
        bound = 1.0 / jnp.sqrt(float(fan_in))
        params[f"w{i+1}"] = jax.random.uniform(
            kw, (fan_in, fan_out), jnp.float32, -bound, bound)   # stored (in, out)
        params[f"b{i+1}"] = jax.random.uniform(
            kb, (fan_out,), jnp.float32, -bound, bound)
        if i < 5:
            key, kg, kbt, km, kv = jax.random.split(key, 5)
            params[f"gamma{i+1}"] = jax.random.uniform(kg, (fan_out,), jnp.float32, 0.5, 1.5)
            params[f"beta{i+1}"] = 0.1 * jax.random.normal(kbt, (fan_out,), jnp.float32)
            params[f"rmean{i+1}"] = 0.1 * jax.random.normal(km, (fan_out,), jnp.float32)
            params[f"rvar{i+1}"] = jax.random.uniform(kv, (fan_out,), jnp.float32, 0.5, 1.5)
    return params


# pure-JAX f32 reference of the original (un-folded) eval-mode forward
def ann_reference(x_nchw, params, eps=1e-5):
    h = x_nchw.reshape(x_nchw.shape[0], -1).astype(jnp.float32)
    for i in range(1, 6):
        h = jnp.maximum(h @ params[f"w{i}"] + params[f"b{i}"], 0.0)
        scale = params[f"gamma{i}"] / jnp.sqrt(params[f"rvar{i}"] + eps)
        shift = params[f"beta{i}"] - params[f"rmean{i}"] * scale
        h = h * scale + shift
    return h @ params["w6"] + params["b6"]


if __name__ == "__main__":
    key = jax.random.PRNGKey(0)
    key, kx = jax.random.split(key)
    B = 16
    x = jax.random.normal(kx, (B, 1, 48, 48), jnp.float32)   # NCHW grayscale 48x48
    params = init_params(key)

    out = ann_forward(x, params)
    out = jax.block_until_ready(out)

    ref = ann_reference(x, params)
    assert out.shape == (B, 7), out.shape
    # bf16 weights/activations -> relaxed tolerance vs. the f32 reference
    assert jnp.allclose(out, ref, atol=3e-2, rtol=3e-2), (
        "mismatch vs reference, max abs diff = "
        f"{float(jnp.max(jnp.abs(out - ref)))}")

    print("KERNEL_OK")
</pallas_src>

<mosaic_0001>
module attributes {stable_mosaic.version = 11 : i64} {
  func.func @ann_kernel(%arg0: i32, %arg1: memref<16x2304xbf16, #tpu.memory_space<vmem>>, %arg2: memref<2304x512xbf16, #tpu.memory_space<vmem>>, %arg3: memref<512x256xbf16, #tpu.memory_space<vmem>>, %arg4: memref<256x128xbf16, #tpu.memory_space<vmem>>, %arg5: memref<128x128xbf16, #tpu.memory_space<vmem>>, %arg6: memref<128x128xbf16, #tpu.memory_space<vmem>>, %arg7: memref<128x128xbf16, #tpu.memory_space<vmem>>, %arg8: memref<8x512xf32, #tpu.memory_space<vmem>>, %arg9: memref<16x128xf32, #tpu.memory_space<vmem>>) attributes {dimension_semantics = [#tpu.dimension_semantics<parallel>], iteration_bounds = array<i64: 1>, scalar_prefetch = 0 : i64, scratch_operands = 0 : i64, tpu.core_type = #tpu.core_type<tc>, window_params = [{transform_indices = @transform_0, window_bounds = array<i64: 16, 2304>}, {pipeline_mode = #tpu.pipeline_mode<synchronous>, transform_indices = @transform_1, window_bounds = array<i64: 2304, 512>}, {pipeline_mode = #tpu.pipeline_mode<synchronous>, transform_indices = @transform_2, window_bounds = array<i64: 512, 256>}, {pipeline_mode = #tpu.pipeline_mode<synchronous>, transform_indices = @transform_3, window_bounds = array<i64: 256, 128>}, {pipeline_mode = #tpu.pipeline_mode<synchronous>, transform_indices = @transform_4, window_bounds = array<i64: 128, 128>}, {pipeline_mode = #tpu.pipeline_mode<synchronous>, transform_indices = @transform_5, window_bounds = array<i64: 128, 128>}, {pipeline_mode = #tpu.pipeline_mode<synchronous>, transform_indices = @transform_6, window_bounds = array<i64: 128, 128>}, {pipeline_mode = #tpu.pipeline_mode<synchronous>, transform_indices = @transform_7, window_bounds = array<i64: 8, 512>}, {transform_indices = @transform_8, window_bounds = array<i64: 16, 128>}]} {
    %c0 = arith.constant 0 : index
    %c0_0 = arith.constant 0 : index
    %0 = vector.load %arg1[%c0, %c0_0] : memref<16x2304xbf16, #tpu.memory_space<vmem>>, vector<16x2304xbf16>
    %c0_1 = arith.constant 0 : index
    %c0_2 = arith.constant 0 : index
    %1 = vector.load %arg2[%c0_1, %c0_2] : memref<2304x512xbf16, #tpu.memory_space<vmem>>, vector<2304x512xbf16>
    %cst = arith.constant dense<0.000000e+00> : vector<16x512xf32>
    %2 = tpu.matmul %0, %1, %cst {dimension_numbers = #tpu.dot_dimension_numbers<[1], [0], [0], [1], [0, 0, 1, 1], [], []>} : vector<16x2304xbf16>, vector<2304x512xbf16>, vector<16x512xf32> -> vector<16x512xf32>
    %c0_3 = arith.constant 0 : index
    %c0_4 = arith.constant 0 : index
    %3 = vector.load %arg8[%c0_3, %c0_4] : memref<8x512xf32, #tpu.memory_space<vmem>>, vector<1x512xf32>
    %4 = vector.broadcast %3 : vector<1x512xf32> to vector<16x512xf32>
    %5 = arith.addf %2, %4 : vector<16x512xf32>
    %cst_5 = arith.constant 0.000000e+00 : f32
    %6 = vector.broadcast %cst_5 : f32 to vector<16x512xf32>
    %7 = arith.maximumf %5, %6 : vector<16x512xf32>
    %8 = arith.truncf %7 : vector<16x512xf32> to vector<16x512xbf16>
    %c0_6 = arith.constant 0 : index
    %c0_7 = arith.constant 0 : index
    %9 = vector.load %arg3[%c0_6, %c0_7] : memref<512x256xbf16, #tpu.memory_space<vmem>>, vector<512x256xbf16>
    %cst_8 = arith.constant dense<0.000000e+00> : vector<16x256xf32>
    %10 = tpu.matmul %8, %9, %cst_8 {dimension_numbers = #tpu.dot_dimension_numbers<[1], [0], [0], [1], [0, 0, 1, 1], [], []>} : vector<16x512xbf16>, vector<512x256xbf16>, vector<16x256xf32> -> vector<16x256xf32>
    %c1 = arith.constant 1 : index
    %c0_9 = arith.constant 0 : index
    %11 = vector.load %arg8[%c1, %c0_9] : memref<8x512xf32, #tpu.memory_space<vmem>>, vector<1x256xf32>
    %12 = vector.broadcast %11 : vector<1x256xf32> to vector<16x256xf32>
    %13 = arith.addf %10, %12 : vector<16x256xf32>
    %cst_10 = arith.constant 0.000000e+00 : f32
    %14 = vector.broadcast %cst_10 : f32 to vector<16x256xf32>
    %15 = arith.maximumf %13, %14 : vector<16x256xf32>
    %16 = arith.truncf %15 : vector<16x256xf32> to vector<16x256xbf16>
    %c0_11 = arith.constant 0 : index
    %c0_12 = arith.constant 0 : index
    %17 = vector.load %arg4[%c0_11, %c0_12] : memref<256x128xbf16, #tpu.memory_space<vmem>>, vector<256x128xbf16>
    %cst_13 = arith.constant dense<0.000000e+00> : vector<16x128xf32>
    %18 = tpu.matmul %16, %17, %cst_13 {dimension_numbers = #tpu.dot_dimension_numbers<[1], [0], [0], [1], [0, 0, 1, 1], [], []>} : vector<16x256xbf16>, vector<256x128xbf16>, vector<16x128xf32> -> vector<16x128xf32>
    %c2 = arith.constant 2 : index
    %c0_14 = arith.constant 0 : index
    %19 = vector.load %arg8[%c2, %c0_14] : memref<8x512xf32, #tpu.memory_space<vmem>>, vector<1x128xf32>
    %20 = vector.broadcast %19 : vector<1x128xf32> to vector<16x128xf32>
    %21 = arith.addf %18, %20 : vector<16x128xf32>
    %cst_15 = arith.constant 0.000000e+00 : f32
    %22 = vector.broadcast %cst_15 : f32 to vector<16x128xf32>
    %23 = arith.maximumf %21, %22 : vector<16x128xf32>
    %24 = arith.truncf %23 : vector<16x128xf32> to vector<16x128xbf16>
    %c0_16 = arith.constant 0 : index
    %c0_17 = arith.constant 0 : index
    %25 = vector.load %arg5[%c0_16, %c0_17] : memref<128x128xbf16, #tpu.memory_space<vmem>>, vector<128x128xbf16>
    %cst_18 = arith.constant dense<0.000000e+00> : vector<16x128xf32>
    %26 = tpu.matmul %24, %25, %cst_18 {dimension_numbers = #tpu.dot_dimension_numbers<[1], [0], [0], [1], [0, 0, 1, 1], [], []>} : vector<16x128xbf16>, vector<128x128xbf16>, vector<16x128xf32> -> vector<16x128xf32>
    %c3 = arith.constant 3 : index
    %c0_19 = arith.constant 0 : index
    %27 = vector.load %arg8[%c3, %c0_19] : memref<8x512xf32, #tpu.memory_space<vmem>>, vector<1x128xf32>
    %28 = vector.broadcast %27 : vector<1x128xf32> to vector<16x128xf32>
    %29 = arith.addf %26, %28 : vector<16x128xf32>
    %cst_20 = arith.constant 0.000000e+00 : f32
    %30 = vector.broadcast %cst_20 : f32 to vector<16x128xf32>
    %31 = arith.maximumf %29, %30 : vector<16x128xf32>
    %32 = arith.truncf %31 : vector<16x128xf32> to vector<16x128xbf16>
    %c0_21 = arith.constant 0 : index
    %c0_22 = arith.constant 0 : index
    %33 = vector.load %arg6[%c0_21, %c0_22] : memref<128x128xbf16, #tpu.memory_space<vmem>>, vector<128x128xbf16>
    %cst_23 = arith.constant dense<0.000000e+00> : vector<16x128xf32>
    %34 = tpu.matmul %32, %33, %cst_23 {dimension_numbers = #tpu.dot_dimension_numbers<[1], [0], [0], [1], [0, 0, 1, 1], [], []>} : vector<16x128xbf16>, vector<128x128xbf16>, vector<16x128xf32> -> vector<16x128xf32>
    %c4 = arith.constant 4 : index
    %c0_24 = arith.constant 0 : index
    %35 = vector.load %arg8[%c4, %c0_24] : memref<8x512xf32, #tpu.memory_space<vmem>>, vector<1x128xf32>
    %36 = vector.broadcast %35 : vector<1x128xf32> to vector<16x128xf32>
    %37 = arith.addf %34, %36 : vector<16x128xf32>
    %cst_25 = arith.constant 0.000000e+00 : f32
    %38 = vector.broadcast %cst_25 : f32 to vector<16x128xf32>
    %39 = arith.maximumf %37, %38 : vector<16x128xf32>
    %40 = arith.truncf %39 : vector<16x128xf32> to vector<16x128xbf16>
    %c0_26 = arith.constant 0 : index
    %c0_27 = arith.constant 0 : index
    %41 = vector.load %arg7[%c0_26, %c0_27] : memref<128x128xbf16, #tpu.memory_space<vmem>>, vector<128x128xbf16>
    %cst_28 = arith.constant dense<0.000000e+00> : vector<16x128xf32>
    %42 = tpu.matmul %40, %41, %cst_28 {dimension_numbers = #tpu.dot_dimension_numbers<[1], [0], [0], [1], [0, 0, 1, 1], [], []>} : vector<16x128xbf16>, vector<128x128xbf16>, vector<16x128xf32> -> vector<16x128xf32>
    %c5 = arith.constant 5 : index
    %c0_29 = arith.constant 0 : index
    %43 = vector.load %arg8[%c5, %c0_29] : memref<8x512xf32, #tpu.memory_space<vmem>>, vector<1x128xf32>
    %44 = vector.broadcast %43 : vector<1x128xf32> to vector<16x128xf32>
    %45 = arith.addf %42, %44 : vector<16x128xf32>
    %c0_30 = arith.constant 0 : index
    %c0_31 = arith.constant 0 : index
    %46 = vector.load %arg9[%c0_30, %c0_31] : memref<16x128xf32, #tpu.memory_space<vmem>>, vector<16x128xf32>
    tpu.vector_store %arg9[%c0_30, %c0_31], %45 {strides = array<i32>} : memref<16x128xf32, #tpu.memory_space<vmem>>, vector<16x128xf32>,
    return
  }
  func.func @transform_0(%arg0: i32) -> (i32, i32) {
    %c0_i32 = arith.constant 0 : i32
    %c0_i32_0 = arith.constant 0 : i32
    return %arg0, %c0_i32 : i32, i32
  }
  func.func @transform_1(%arg0: i32) -> (i32, i32) {
    %c0_i32 = arith.constant 0 : i32
    %c0_i32_0 = arith.constant 0 : i32
    %c0_i32_1 = arith.constant 0 : i32
    return %c0_i32, %c0_i32_0 : i32, i32
  }
  func.func @transform_2(%arg0: i32) -> (i32, i32) {
    %c0_i32 = arith.constant 0 : i32
    %c0_i32_0 = arith.constant 0 : i32
    %c0_i32_1 = arith.constant 0 : i32
    return %c0_i32, %c0_i32_0 : i32, i32
  }
  func.func @transform_3(%arg0: i32) -> (i32, i32) {
    %c0_i32 = arith.constant 0 : i32
    %c0_i32_0 = arith.constant 0 : i32
    %c0_i32_1 = arith.constant 0 : i32
    return %c0_i32, %c0_i32_0 : i32, i32
  }
  func.func @transform_4(%arg0: i32) -> (i32, i32) {
    %c0_i32 = arith.constant 0 : i32
    %c0_i32_0 = arith.constant 0 : i32
    %c0_i32_1 = arith.constant 0 : i32
    return %c0_i32, %c0_i32_0 : i32, i32
  }
  func.func @transform_5(%arg0: i32) -> (i32, i32) {
    %c0_i32 = arith.constant 0 : i32
    %c0_i32_0 = arith.constant 0 : i32
    %c0_i32_1 = arith.constant 0 : i32
    return %c0_i32, %c0_i32_0 : i32, i32
  }
  func.func @transform_6(%arg0: i32) -> (i32, i32) {
    %c0_i32 = arith.constant 0 : i32
    %c0_i32_0 = arith.constant 0 : i32
    %c0_i32_1 = arith.constant 0 : i32
    return %c0_i32, %c0_i32_0 : i32, i32
  }
  func.func @transform_7(%arg0: i32) -> (i32, i32) {
    %c0_i32 = arith.constant 0 : i32
    %c0_i32_0 = arith.constant 0 : i32
    %c0_i32_1 = arith.constant 0 : i32
    return %c0_i32, %c0_i32_0 : i32, i32
  }
  func.func @transform_8(%arg0: i32) -> (i32, i32) {
    %c0_i32 = arith.constant 0 : i32
    %c0_i32_0 = arith.constant 0 : i32
    return %arg0, %c0_i32 : i32, i32
  }
}

</mosaic_0001>

<llo_original>
// kernel: tpu_custom_call.1
$region0: #{tpu_custom_call.1}
  #allocation0 [shape = 'u32[]', space=smem, size = 0x4, offset = 0x4, fixed_abs, tag = 'smem constant byte address 0x4 - core index']
  #allocation1 [shape = 'u32[144,128]{1,0:T(1,128)}', space=vmem, size = 0x12000, scoped, tag = 'internal scratch']
  %s0 = inlined_call_operand.hbm [shape: bf16[16,2304], index: 0, kind: input, shape index: {}]
  %s1 = inlined_call_operand.hbm [shape: bf16[2304,512], index: 1, kind: input, shape index: {}]
  %s2 = inlined_call_operand.hbm [shape: bf16[512,256], index: 2, kind: input, shape index: {}]
  %s3 = inlined_call_operand.hbm [shape: bf16[256,128], index: 3, kind: input, shape index: {}]
  %s4 = inlined_call_operand.hbm [shape: bf16[128,128], index: 4, kind: input, shape index: {}]
  %s5 = inlined_call_operand.hbm [shape: bf16[128,128], index: 5, kind: input, shape index: {}]
  %s6 = inlined_call_operand.hbm [shape: bf16[128,128], index: 6, kind: input, shape index: {}]
  %s7 = inlined_call_operand.hbm [shape: f32[8,512], index: 7, kind: input, shape index: {}]
  %s8 = inlined_call_operand.hbm [shape: f32[16,128], index: 8, kind: output, shape index: {}]
  %s9 = sld [smem:[#allocation0]]
  $region74: #{tpu_custom_call.1} parent=0
    _
  %s11 = ssub.s32 1, %s9
  %s12 = scalar_select 0, %s11, %s9
  $region1: #{tpu_custom_call.1} parent=0
    #allocation2 [shape = 'u8[73728]{0}', space=vmem, size = 0x12000, scoped, tag = 'input window, operand 0, single buffered']
    #allocation3 [shape = 's32[1]{0}', space=sflag, size = 0x4, scoped, tag = 'scoped memory for tpu_custom_call.1']
    #allocation4 [shape = 's32[1]{0}', space=sflag, size = 0x4, scoped, tag = 'scoped memory for tpu_custom_call.1']
    #allocation5 [shape = 'u8[2359296]{0}', space=vmem, size = 0x240000, scoped, tag = 'input window, operand 1, single buffered']
    #allocation6 [shape = 's32[1]{0}', space=sflag, size = 0x4, scoped, tag = 'scoped memory for tpu_custom_call.1']
    #allocation7 [shape = 'u8[262144]{0}', space=vmem, size = 0x40000, scoped, tag = 'input window, operand 2, single buffered']
    #allocation8 [shape = 'u8[65536]{0}', space=vmem, size = 0x10000, scoped, tag = 'input window, operand 3, single buffered']
    #allocation9 [shape = 's32[1]{0}', space=sflag, size = 0x4, scoped, tag = 'scoped memory for tpu_custom_call.1']
    #allocation10 [shape = 'u8[32768]{0}', space=vmem, size = 0x8000, scoped, tag = 'input window, operand 4, single buffered']
    #allocation11 [shape = 'u8[32768]{0}', space=vmem, size = 0x8000, scoped, tag = 'input window, operand 5, single buffered']
    #allocation12 [shape = 's32[1]{0}', space=sflag, size = 0x4, scoped, tag = 'scoped memory for tpu_custom_call.1']
    #allocation13 [shape = 'u8[32768]{0}', space=vmem, size = 0x8000, scoped, tag = 'input window, operand 6, single buffered']
    #allocation14 [shape = 'u8[16384]{0}', space=vmem, size = 0x4000, scoped, tag = 'input window, operand 7, single buffered']
    #allocation15 [shape = 's32[1]{0}', space=sflag, size = 0x4, scoped, tag = 'scoped memory for tpu_custom_call.1']
    #allocation16 [shape = 'u8[8192]{0}', space=vmem, size = 0x2000, scoped, tag = 'output window, operand 0, single buffered']
    %13 = vsyncpa [#allocation3], 0
    %14 = vsyncpa [#allocation6], 0
    %15 = vsyncpa [#allocation9], 0
    %16 = vsyncpa [#allocation12], 0
    %17 = vsyncpa [#allocation15], 0
    %18 = vsyncpa [#allocation4], 0
    // Predicated region
    $region2: #{tpu_custom_call.1} parent=1 // pred_check
      _
    $region3: #{tpu_custom_call.1} parent=1 // pred_check_branch
      %20 = sbr.rel (0) target = $region5
    $region4: #{tpu_custom_call.1} parent=1 // pred_region
      %s22 = ssub.s32 2304, 2304
      %23 = vsyncadd [#allocation3], %s22
      %s24 = sshll.u32 [#allocation2], 4
      %s25 = int_to_ptr.vmem [resolvable:$true] %s24
      %30 = dma.hbm_to_vmem [thread:$0]  %s0, 2304, %s25, [#allocation3], 1152, 1152, 72
    $region5: #{tpu_custom_call.1} parent=1 // pred_fallthru
      _
    // Predicated region
    $region6: #{tpu_custom_call.1} parent=1 // pred_check
      _
    $region7: #{tpu_custom_call.1} parent=1 // pred_check_branch
      %32 = sbr.rel (0) target = $region9
    $region8: #{tpu_custom_call.1} parent=1 // pred_region
      %s34 = ssub.s32 73728, 73728
      %35 = vsyncadd [#allocation6], %s34
      %s36 = sshll.u32 [#allocation5], 4
      %s37 = int_to_ptr.vmem [resolvable:$true] %s36
      %42 = dma.hbm_to_vmem [thread:$0]  %s1, 73728, %s37, [#allocation6], 256, 256, 16
    $region9: #{tpu_custom_call.1} parent=1 // pred_fallthru
      _
    // Predicated region
    $region10: #{tpu_custom_call.1} parent=1 // pred_check
      _
    $region11: #{tpu_custom_call.1} parent=1 // pred_check_branch
      %44 = sbr.rel (0) target = $region13
    $region12: #{tpu_custom_call.1} parent=1 // pred_region
      %s46 = ssub.s32 8192, 8192
      %47 = vsyncadd [#allocation6], %s46
      %s48 = sshll.u32 [#allocation7], 4
      %s49 = int_to_ptr.vmem [resolvable:$true] %s48
      %54 = dma.hbm_to_vmem [thread:$0]  %s2, 8192, %s49, [#allocation6], 128, 128, 8
    $region13: #{tpu_custom_call.1} parent=1 // pred_fallthru
      _
    // Predicated region
    $region14: #{tpu_custom_call.1} parent=1 // pred_check
      _
    $region15: #{tpu_custom_call.1} parent=1 // pred_check_branch
      %56 = sbr.rel (0) target = $region17
    $region16: #{tpu_custom_call.1} parent=1 // pred_region
      %s58 = ssub.s32 2048, 2048
      %59 = vsyncadd [#allocation9], %s58
      %s60 = sshll.u32 [#allocation8], 4
      %s61 = int_to_ptr.vmem [resolvable:$true] %s60
      %66 = dma.hbm_to_vmem [thread:$0]  %s3, 2048, %s61, [#allocation9], 64, 64, 4
    $region17: #{tpu_custom_call.1} parent=1 // pred_fallthru
      _
    // Predicated region
    $region18: #{tpu_custom_call.1} parent=1 // pred_check
      _
    $region19: #{tpu_custom_call.1} parent=1 // pred_check_branch
      %68 = sbr.rel (0) target = $region21
    $region20: #{tpu_custom_call.1} parent=1 // pred_region
      %s70 = ssub.s32 1024, 1024
      %71 = vsyncadd [#allocation9], %s70
      %s72 = sshll.u32 [#allocation10], 4
      %s73 = int_to_ptr.vmem [resolvable:$true] %s72
      %78 = dma.hbm_to_vmem [thread:$0]  %s4, 1024, %s73, [#allocation9], 64, 64, 4
    $region21: #{tpu_custom_call.1} parent=1 // pred_fallthru
      _
    // Predicated region
    $region22: #{tpu_custom_call.1} parent=1 // pred_check
      _
    $region23: #{tpu_custom_call.1} parent=1 // pred_check_branch
      %80 = sbr.rel (0) target = $region25
    $region24: #{tpu_custom_call.1} parent=1 // pred_region
      %s82 = ssub.s32 1024, 1024
      %83 = vsyncadd [#allocation12], %s82
      %s84 = sshll.u32 [#allocation11], 4
      %s85 = int_to_ptr.vmem [resolvable:$true] %s84
      %90 = dma.hbm_to_vmem [thread:$0]  %s5, 1024, %s85, [#allocation12], 64, 64, 4
    $region25: #{tpu_custom_call.1} parent=1 // pred_fallthru
      _
    // Predicated region
    $region26: #{tpu_custom_call.1} parent=1 // pred_check
      _
    $region27: #{tpu_custom_call.1} parent=1 // pred_check_branch
      %92 = sbr.rel (0) target = $region29
    $region28: #{tpu_custom_call.1} parent=1 // pred_region
      %s94 = ssub.s32 1024, 1024
      %95 = vsyncadd [#allocation12], %s94
      %s96 = sshll.u32 [#allocation13], 4
      %s97 = int_to_ptr.vmem [resolvable:$true] %s96
      %102 = dma.hbm_to_vmem [thread:$0]  %s6, 1024, %s97, [#allocation12], 64, 64, 4
    $region29: #{tpu_custom_call.1} parent=1 // pred_fallthru
      _
    // Predicated region
    $region30: #{tpu_custom_call.1} parent=1 // pred_check
      _
    $region31: #{tpu_custom_call.1} parent=1 // pred_check_branch
      %104 = sbr.rel (0) target = $region33
    $region32: #{tpu_custom_call.1} parent=1 // pred_region
      %s106 = ssub.s32 512, 512
      %107 = vsyncadd [#allocation15], %s106
      %s109 = sshll.u32 [#allocation14], 4
      %s110 = int_to_ptr.vmem [resolvable:$true] %s109
      %112 = dma.hbm_to_vmem [thread:$0]  %s7, 512, %s110, [#allocation15]
    $region33: #{tpu_custom_call.1} parent=1 // pred_fallthru
      _
    // Predicated region
    $region34: #{tpu_custom_call.1} parent=1 // pred_check
      _
    $region35: #{tpu_custom_call.1} parent=1 // pred_check_branch
      %114 = sbr.rel (0) target = $region37
    $region36: #{tpu_custom_call.1} parent=1 // pred_region
      %115 = dma.done [#allocation3], 2304
    $region37: #{tpu_custom_call.1} parent=1 // pred_fallthru
      _
    // Predicated region
    $region38: #{tpu_custom_call.1} parent=1 // pred_check
      _
    $region39: #{tpu_custom_call.1} parent=1 // pred_check_branch
      %117 = sbr.rel (0) target = $region41
    $region40: #{tpu_custom_call.1} parent=1 // pred_region
      %118 = dma.done [#allocation6], 73728
    $region41: #{tpu_custom_call.1} parent=1 // pred_fallthru
      _
    // Predicated region
    $region42: #{tpu_custom_call.1} parent=1 // pred_check
      _
    $region43: #{tpu_custom_call.1} parent=1 // pred_check_branch
      %120 = sbr.rel (0) target = $region45
    $region44: #{tpu_custom_call.1} parent=1 // pred_region
      %121 = dma.done [#allocation6], 8192
    $region45: #{tpu_custom_call.1} parent=1 // pred_fallthru
      _
    // Predicated region
    $region46: #{tpu_custom_call.1} parent=1 // pred_check
      _
    $region47: #{tpu_custom_call.1} parent=1 // pred_check_branch
      %123 = sbr.rel (0) target = $region49
    $region48: #{tpu_custom_call.1} parent=1 // pred_region
      %124 = dma.done [#allocation9], 2048
    $region49: #{tpu_custom_call.1} parent=1 // pred_fallthru
      _
    // Predicated region
    $region50: #{tpu_custom_call.1} parent=1 // pred_check
      _
    $region51: #{tpu_custom_call.1} parent=1 // pred_check_branch
      %126 = sbr.rel (0) target = $region53
    $region52: #{tpu_custom_call.1} parent=1 // pred_region
      %127 = dma.done [#allocation9], 1024
    $region53: #{tpu_custom_call.1} parent=1 // pred_fallthru
      _
    // Predicated region
    $region54: #{tpu_custom_call.1} parent=1 // pred_check
      _
    $region55: #{tpu_custom_call.1} parent=1 // pred_check_branch
      %129 = sbr.rel (0) target = $region57
    $region56: #{tpu_custom_call.1} parent=1 // pred_region
      %130 = dma.done [#allocation12], 1024
    $region57: #{tpu_custom_call.1} parent=1 // pred_fallthru
      _
    // Predicated region
    $region58: #{tpu_custom_call.1} parent=1 // pred_check
      _
    $region59: #{tpu_custom_call.1} parent=1 // pred_check_branch
      %132 = sbr.rel (0) target = $region61
    $region60: #{tpu_custom_call.1} parent=1 // pred_region
      %133 = dma.done [#allocation12], 1024
    $region61: #{tpu_custom_call.1} parent=1 // pred_fallthru
      _
    // Predicated region
    $region62: #{tpu_custom_call.1} parent=1 // pred_check
      _
    $region63: #{tpu_custom_call.1} parent=1 // pred_check_branch
      %135 = sbr.rel (0) target = $region65
    $region64: #{tpu_custom_call.1} parent=1 // pred_region
      %136 = dma.done [#allocation15], 512
    $region65: #{tpu_custom_call.1} parent=1 // pred_fallthru
      _
    %v138 = vld [vmem:[#allocation2] sm:$0xff]
    %v139 = vld [vmem:[#allocation2 + $0x8] sm:$0xff]
    %v140 = vld [vmem:[#allocation2 + $0x10] sm:$0xff]
    %v141 = vld [vmem:[#allocation2 + $0x18] sm:$0xff]
    %v142 = vld [vmem:[#allocation2 + $0x20] sm:$0xff]
    %v143 = vld [vmem:[#allocation2 + $0x28] sm:$0xff]
    %v144 = vld [vmem:[#allocation2 + $0x30] sm:$0xff]
    %v145 = vld [vmem:[#allocation2 + $0x38] sm:$0xff]
    %v146 = vld [vmem:[#allocation2 + $0x40] sm:$0xff]
    %v147 = vld [vmem:[#allocation2 + $0x48] sm:$0xff]
    %v148 = vld [vmem:[#allocation2 + $0x50] sm:$0xff]
    %v149 = vld [vmem:[#allocation2 + $0x58] sm:$0xff]
    %v150 = vld [vmem:[#allocation2 + $0x60] sm:$0xff]
    %v151 = vld [vmem:[#allocation2 + $0x68] sm:$0xff]
    %v152 = vld [vmem:[#allocation2 + $0x70] sm:$0xff]
    %v153 = vld [vmem:[#allocation2 + $0x78] sm:$0xff]
    %v154 = vld [vmem:[#allocation2 + $0x80] sm:$0xff]
    %v155 = vld [vmem:[#allocation2 + $0x88] sm:$0xff]
    %v156 = vld [vmem:[#allocation5] sm:$0xff]
    %v157 = vld [vmem:[#allocation5 + $0x8] sm:$0xff]
    %v158 = vld [vmem:[#allocation5 + $0x10] sm:$0xff]
    %v159 = vld [vmem:[#allocation5 + $0x18] sm:$0xff]
    %v160 = vld [vmem:[#allocation5 + $0x20] sm:$0xff]
    %v161 = vld [vmem:[#allocation5 + $0x28] sm:$0xff]
    %v162 = vld [vmem:[#allocation5 + $0x30] sm:$0xff]
    %v163 = vld [vmem:[#allocation5 + $0x38] sm:$0xff]
    %v164 = vld [vmem:[#allocation5 + $0x40] sm:$0xff]
    %v165 = vld [vmem:[#allocation5 + $0x48] sm:$0xff]
    %v166 = vld [vmem:[#allocation5 + $0x50] sm:$0xff]
    %v167 = vld [vmem:[#allocation5 + $0x58] sm:$0xff]
    %v168 = vld [vmem:[#allocation5 + $0x60] sm:$0xff]
    %v169 = vld [vmem:[#allocation5 + $0x68] sm:$0xff]
    %v170 = vld [vmem:[#allocation5 + $0x70] sm:$0xff]
    %v171 = vld [vmem:[#allocation5 + $0x78] sm:$0xff]
    %v172 = vld [vmem:[#allocation5 + $0x80] sm:$0xff]
    %v173 = vld [vmem:[#allocation5 + $0x88] sm:$0xff]
    %v174 = vld [vmem:[#allocation5 + $0x90] sm:$0xff]
    %v175 = vld [vmem:[#allocation5 + $0x98] sm:$0xff]
    %v176 = vld [vmem:[#allocation5 + $0xa0] sm:$0xff]
    %v177 = vld [vmem:[#allocation5 + $0xa8] sm:$0xff]
    %v178 = vld [vmem:[#allocation5 + $0xb0] sm:$0xff]
    %v179 = vld [vmem:[#allocation5 + $0xb8] sm:$0xff]
    %v180 = vld [vmem:[#allocation5 + $0xc0] sm:$0xff]
    %v181 = vld [vmem:[#allocation5 + $0xc8] sm:$0xff]
    %v182 = vld [vmem:[#allocation5 + $0xd0] sm:$0xff]
    %v183 = vld [vmem:[#allocation5 + $0xd8] sm:$0xff]
    %v184 = vld [vmem:[#allocation5 + $0xe0] sm:$0xff]
    %v185 = vld [vmem:[#allocation5 + $0xe8] sm:$0xff]
    %v186 = vld [vmem:[#allocation5 + $0xf0] sm:$0xff]
    %v187 = vld [vmem:[#allocation5 + $0xf8] sm:$0xff]
    %v188 = vld [vmem:[#allocation5 + $0x100] sm:$0xff]
    %v189 = vld [vmem:[#allocation5 + $0x108] sm:$0xff]
    %v190 = vld [vmem:[#allocation5 + $0x110] sm:$0xff]
    %v191 = vld [vmem:[#allocation5 + $0x118] sm:$0xff]
    %v192 = vld [vmem:[#allocation5 + $0x120] sm:$0xff]
    %v193 = vld [vmem:[#allocation5 + $0x128] sm:$0xff]
    %v194 = vld [vmem:[#allocation5 + $0x130] sm:$0xff]
    %v195 = vld [vmem:[#allocation5 + $0x138] sm:$0xff]
    %v196 = vld [vmem:[#allocation5 + $0x140] sm:$0xff]
    %v197 = vld [vmem:[#allocation5 + $0x148] sm:$0xff]
    %v198 = vld [vmem:[#allocation5 + $0x150] sm:$0xff]
    %v199 = vld [vmem:[#allocation5 + $0x158] sm:$0xff]
    %v200 = vld [vmem:[#allocation5 + $0x160] sm:$0xff]
    %v201 = vld [vmem:[#allocation5 + $0x168] sm:$0xff]
    %v202 = vld [vmem:[#allocation5 + $0x170] sm:$0xff]
    %v203 = vld [vmem:[#allocation5 + $0x178] sm:$0xff]
    %v204 = vld [vmem:[#allocation5 + $0x180] sm:$0xff]
    %v205 = vld [vmem:[#allocation5 + $0x188] sm:$0xff]
    %v206 = vld [vmem:[#allocation5 + $0x190] sm:$0xff]
    %v207 = vld [vmem:[#allocation5 + $0x198] sm:$0xff]
    %v208 = vld [vmem:[#allocation5 + $0x1a0] sm:$0xff]
    %v209 = vld [vmem:[#allocation5 + $0x1a8] sm:$0xff]
    %v210 = vld [vmem:[#allocation5 + $0x1b0] sm:$0xff]
    %v211 = vld [vmem:[#allocation5 + $0x1b8] sm:$0xff]
    %v212 = vld [vmem:[#allocation5 + $0x1c0] sm:$0xff]
    %v213 = vld [vmem:[#allocation5 + $0x1c8] sm:$0xff]
    %v214 = vld [vmem:[#allocation5 + $0x1d0] sm:$0xff]
    %v215 = vld [vmem:[#allocation5 + $0x1d8] sm:$0xff]
    %v216 = vld [vmem:[#allocation5 + $0x1e0] sm:$0xff]
    %v217 = vld [vmem:[#allocation5 + $0x1e8] sm:$0xff]
    %v218 = vld [vmem:[#allocation5 + $0x1f0] sm:$0xff]
    %v219 = vld [vmem:[#allocation5 + $0x1f8] sm:$0xff]
    %v220 = vld [vmem:[#allocation5 + $0x200] sm:$0xff]
    %v221 = vld [vmem:[#allocation5 + $0x208] sm:$0xff]
    %v222 = vld [vmem:[#allocation5 + $0x210] sm:$0xff]
    %v223 = vld [vmem:[#allocation5 + $0x218] sm:$0xff]
    %v224 = vld [vmem:[#allocation5 + $0x220] sm:$0xff]
    %v225 = vld [vmem:[#allocation5 + $0x228] sm:$0xff]
    %v226 = vld [vmem:[#allocation5 + $0x230] sm:$0xff]
    %v227 = vld [vmem:[#allocation5 + $0x238] sm:$0xff]
    %v228 = vld [vmem:[#allocation5 + $0x240] sm:$0xff]
    %v229 = vld [vmem:[#allocation5 + $0x248] sm:$0xff]
    %v230 = vld [vmem:[#allocation5 + $0x250] sm:$0xff]
    %v231 = vld [vmem:[#allocation5 + $0x258] sm:$0xff]
    %v232 = vld [vmem:[#allocation5 + $0x260] sm:$0xff]
    %v233 = vld [vmem:[#allocation5 + $0x268] sm:$0xff]
    %v234 = vld [vmem:[#allocation5 + $0x270] sm:$0xff]
    %v235 = vld [vmem:[#allocation5 + $0x278] sm:$0xff]
    %v236 = vld [vmem:[#allocation5 + $0x280] sm:$0xff]
    %v237 = vld [vmem:[#allocation5 + $0x288] sm:$0xff]
    %v238 = vld [vmem:[#allocation5 + $0x290] sm:$0xff]
    %v239 = vld [vmem:[#allocation5 + $0x298] sm:$0xff]
    %v240 = vld [vmem:[#allocation5 + $0x2a0] sm:$0xff]
    %v241 = vld [vmem:[#allocation5 + $0x2a8] sm:$0xff]
    %v242 = vld [vmem:[#allocation5 + $0x2b0] sm:$0xff]
    %v243 = vld [vmem:[#allocation5 + $0x2b8] sm:$0xff]
    %v244 = vld [vmem:[#allocation5 + $0x2c0] sm:$0xff]
    %v245 = vld [vmem:[#allocation5 + $0x2c8] sm:$0xff]
    %v246 = vld [vmem:[#allocation5 + $0x2d0] sm:$0xff]
    %v247 = vld [vmem:[#allocation5 + $0x2d8] sm:$0xff]
    %v248 = vld [vmem:[#allocation5 + $0x2e0] sm:$0xff]
    %v249 = vld [vmem:[#allocation5 + $0x2e8] sm:$0xff]
    %v250 = vld [vmem:[#allocation5 + $0x2f0] sm:$0xff]
    %v251 = vld [vmem:[#allocation5 + $0x2f8] sm:$0xff]
    %v252 = vld [vmem:[#allocation5 + $0x300] sm:$0xff]
    %v253 = vld [vmem:[#allocation5 + $0x308] sm:$0xff]
    %v254 = vld [vmem:[#allocation5 + $0x310] sm:$0xff]
    %v255 = vld [vmem:[#allocation5 + $0x318] sm:$0xff]
    %v256 = vld [vmem:[#allocation5 + $0x320] sm:$0xff]
    %v257 = vld [vmem:[#allocation5 + $0x328] sm:$0xff]
    %v258 = vld [vmem:[#allocation5 + $0x330] sm:$0xff]
    %v259 = vld [vmem:[#allocation5 + $0x338] sm:$0xff]
    %v260 = vld [vmem:[#allocation5 + $0x340] sm:$0xff]
    %v261 = vld [vmem:[#allocation5 + $0x348] sm:$0xff]
    %v262 = vld [vmem:[#allocation5 + $0x350] sm:$0xff]
    %v263 = vld [vmem:[#allocation5 + $0x358] sm:$0xff]
    %v264 = vld [vmem:[#allocation5 + $0x360] sm:$0xff]
    %v265 = vld [vmem:[#allocation5 + $0x368] sm:$0xff]
    %v266 = vld [vmem:[#allocation5 + $0x370] sm:$0xff]
    %v267 = vld [vmem:[#allocation5 + $0x378] sm:$0xff]
    %v268 = vld [vmem:[#allocation5 + $0x380] sm:$0xff]
    %v269 = vld [vmem:[#allocation5 + $0x388] sm:$0xff]
    %v270 = vld [vmem:[#allocation5 + $0x390] sm:$0xff]
    %v271 = vld [vmem:[#allocation5 + $0x398] sm:$0xff]
    %v272 = vld [vmem:[#allocation5 + $0x3a0] sm:$0xff]
    %v273 = vld [vmem:[#allocation5 + $0x3a8] sm:$0xff]
    %v274 = vld [vmem:[#allocation5 + $0x3b0] sm:$0xff]
    %v275 = vld [vmem:[#allocation5 + $0x3b8] sm:$0xff]
    %v276 = vld [vmem:[#allocation5 + $0x3c0] sm:$0xff]
    %v277 = vld [vmem:[#allocation5 + $0x3c8] sm:$0xff]
    %v278 = vld [vmem:[#allocation5 + $0x3d0] sm:$0xff]
    %v279 = vld [vmem:[#allocation5 + $0x3d8] sm:$0xff]
    %v280 = vld [vmem:[#allocation5 + $0x3e0] sm:$0xff]
    %v281 = vld [vmem:[#allocation5 + $0x3e8] sm:$0xff]
    %v282 = vld [vmem:[#allocation5 + $0x3f0] sm:$0xff]
    %v283 = vld [vmem:[#allocation5 + $0x3f8] sm:$0xff]
    %v284 = vld [vmem:[#allocation5 + $0x400] sm:$0xff]
    %v285 = vld [vmem:[#allocation5 + $0x408] sm:$0xff]
    %v286 = vld [vmem:[#allocation5 + $0x410] sm:$0xff]
    %v287 = vld [vmem:[#allocation5 + $0x418] sm:$0xff]
    %v288 = vld [vmem:[#allocation5 + $0x420] sm:$0xff]
    %v289 = vld [vmem:[#allocation5 + $0x428] sm:$0xff]
    %v290 = vld [vmem:[#allocation5 + $0x430] sm:$0xff]
    %v291 = vld [vmem:[#allocation5 + $0x438] sm:$0xff]
    %v292 = vld [vmem:[#allocation5 + $0x440] sm:$0xff]
    %v293 = vld [vmem:[#allocation5 + $0x448] sm:$0xff]
    %v294 = vld [vmem:[#allocation5 + $0x450] sm:$0xff]
    %v295 = vld [vmem:[#allocation5 + $0x458] sm:$0xff]
    %v296 = vld [vmem:[#allocation5 + $0x460] sm:$0xff]
    %v297 = vld [vmem:[#allocation5 + $0x468] sm:$0xff]
    %v298 = vld [vmem:[#allocation5 + $0x470] sm:$0xff]
    %v299 = vld [vmem:[#allocation5 + $0x478] sm:$0xff]
    %v300 = vld [vmem:[#allocation5 + $0x480] sm:$0xff]
    %v301 = vld [vmem:[#allocation5 + $0x488] sm:$0xff]
    %v302 = vld [vmem:[#allocation5 + $0x490] sm:$0xff]
    %v303 = vld [vmem:[#allocation5 + $0x498] sm:$0xff]
    %v304 = vld [vmem:[#allocation5 + $0x4a0] sm:$0xff]
    %v305 = vld [vmem:[#allocation5 + $0x4a8] sm:$0xff]
    %v306 = vld [vmem:[#allocation5 + $0x4b0] sm:$0xff]
    %v307 = vld [vmem:[#allocation5 + $0x4b8] sm:$0xff]
    %v308 = vld [vmem:[#allocation5 + $0x4c0] sm:$0xff]
    %v309 = vld [vmem:[#allocation5 + $0x4c8] sm:$0xff]
    %v310 = vld [vmem:[#allocation5 + $0x4d0] sm:$0xff]
    %v311 = vld [vmem:[#allocation5 + $0x4d8] sm:$0xff]
    %v312 = vld [vmem:[#allocation5 + $0x4e0] sm:$0xff]
    %v313 = vld [vmem:[#allocation5 + $0x4e8] sm:$0xff]
    %v314 = vld [vmem:[#allocation5 + $0x4f0] sm:$0xff]
    %v315 = vld [vmem:[#allocation5 + $0x4f8] sm:$0xff]
    %v316 = vld [vmem:[#allocation5 + $0x500] sm:$0xff]
    %v317 = vld [vmem:[#allocation5 + $0x508] sm:$0xff]
    %v318 = vld [vmem:[#allocation5 + $0x510] sm:$0xff]
    %v319 = vld [vmem:[#allocation5 + $0x518] sm:$0xff]
    %v320 = vld [vmem:[#allocation5 + $0x520] sm:$0xff]
    %v321 = vld [vmem:[#allocation5 + $0x528] sm:$0xff]
    %v322 = vld [vmem:[#allocation5 + $0x530] sm:$0xff]
    %v323 = vld [vmem:[#allocation5 + $0x538] sm:$0xff]
    %v324 = vld [vmem:[#allocation5 + $0x540] sm:$0xff]
    %v325 = vld [vmem:[#allocation5 + $0x548] sm:$0xff]
    %v326 = vld [vmem:[#allocation5 + $0x550] sm:$0xff]
    %v327 = vld [vmem:[#allocation5 + $0x558] sm:$0xff]
    %v328 = vld [vmem:[#allocation5 + $0x560] sm:$0xff]
    %v329 = vld [vmem:[#allocation5 + $0x568] sm:$0xff]
    %v330 = vld [vmem:[#allocation5 + $0x570] sm:$0xff]
    %v331 = vld [vmem:[#allocation5 + $0x578] sm:$0xff]
    %v332 = vld [vmem:[#allocation5 + $0x580] sm:$0xff]
    %v333 = vld [vmem:[#allocation5 + $0x588] sm:$0xff]
    %v334 = vld [vmem:[#allocation5 + $0x590] sm:$0xff]
    %v335 = vld [vmem:[#allocation5 + $0x598] sm:$0xff]
    %v336 = vld [vmem:[#allocation5 + $0x5a0] sm:$0xff]
    %v337 = vld [vmem:[#allocation5 + $0x5a8] sm:$0xff]
    %v338 = vld [vmem:[#allocation5 + $0x5b0] sm:$0xff]
    %v339 = vld [vmem:[#allocation5 + $0x5b8] sm:$0xff]
    %v340 = vld [vmem:[#allocation5 + $0x5c0] sm:$0xff]
    %v341 = vld [vmem:[#allocation5 + $0x5c8] sm:$0xff]
    %v342 = vld [vmem:[#allocation5 + $0x5d0] sm:$0xff]
    %v343 = vld [vmem:[#allocation5 + $0x5d8] sm:$0xff]
    %v344 = vld [vmem:[#allocation5 + $0x5e0] sm:$0xff]
    %v345 = vld [vmem:[#allocation5 + $0x5e8] sm:$0xff]
    %v346 = vld [vmem:[#allocation5 + $0x5f0] sm:$0xff]
    %v347 = vld [vmem:[#allocation5 + $0x5f8] sm:$0xff]
    %v348 = vld [vmem:[#allocation5 + $0x600] sm:$0xff]
    %v349 = vld [vmem:[#allocation5 + $0x608] sm:$0xff]
    %v350 = vld [vmem:[#allocation5 + $0x610] sm:$0xff]
    %v351 = vld [vmem:[#allocation5 + $0x618] sm:$0xff]
    %v352 = vld [vmem:[#allocation5 + $0x620] sm:$0xff]
    %v353 = vld [vmem:[#allocation5 + $0x628] sm:$0xff]
    %v354 = vld [vmem:[#allocation5 + $0x630] sm:$0xff]
    %v355 = vld [vmem:[#allocation5 + $0x638] sm:$0xff]
    %v356 = vld [vmem:[#allocation5 + $0x640] sm:$0xff]
    %v357 = vld [vmem:[#allocation5 + $0x648] sm:$0xff]
    %v358 = vld [vmem:[#allocation5 + $0x650] sm:$0xff]
    %v359 = vld [vmem:[#allocation5 + $0x658] sm:$0xff]
    %v360 = vld [vmem:[#allocation5 + $0x660] sm:$0xff]
    %v361 = vld [vmem:[#allocation5 + $0x668] sm:$0xff]
    %v362 = vld [vmem:[#allocation5 + $0x670] sm:$0xff]
    %v363 = vld [vmem:[#allocation5 + $0x678] sm:$0xff]
    %v364 = vld [vmem:[#allocation5 + $0x680] sm:$0xff]
    %v365 = vld [vmem:[#allocation5 + $0x688] sm:$0xff]
    %v366 = vld [vmem:[#allocation5 + $0x690] sm:$0xff]
    %v367 = vld [vmem:[#allocation5 + $0x698] sm:$0xff]
    %v368 = vld [vmem:[#allocation5 + $0x6a0] sm:$0xff]
    %v369 = vld [vmem:[#allocation5 + $0x6a8] sm:$0xff]
    %v370 = vld [vmem:[#allocation5 + $0x6b0] sm:$0xff]
    %v371 = vld [vmem:[#allocation5 + $0x6b8] sm:$0xff]
    %v372 = vld [vmem:[#allocation5 + $0x6c0] sm:$0xff]
    %v373 = vld [vmem:[#allocation5 + $0x6c8] sm:$0xff]
    %v374 = vld [vmem:[#allocation5 + $0x6d0] sm:$0xff]
    %v375 = vld [vmem:[#allocation5 + $0x6d8] sm:$0xff]
    %v376 = vld [vmem:[#allocation5 + $0x6e0] sm:$0xff]
    %v377 = vld [vmem:[#allocation5 + $0x6e8] sm:$0xff]
    %v378 = vld [vmem:[#allocation5 + $0x6f0] sm:$0xff]
    %v379 = vld [vmem:[#allocation5 + $0x6f8] sm:$0xff]
    %v380 = vld [vmem:[#allocation5 + $0x700] sm:$0xff]
    %v381 = vld [vmem:[#allocation5 + $0x708] sm:$0xff]
    %v382 = vld [vmem:[#allocation5 + $0x710] sm:$0xff]
    %v383 = vld [vmem:[#allocation5 + $0x718] sm:$0xff]
    %v384 = vld [vmem:[#allocation5 + $0x720] sm:$0xff]
    %v385 = vld [vmem:[#allocation5 + $0x728] sm:$0xff]
    %v386 = vld [vmem:[#allocation5 + $0x730] sm:$0xff]
    %v387 = vld [vmem:[#allocation5 + $0x738] sm:$0xff]
    %v388 = vld [vmem:[#allocation5 + $0x740] sm:$0xff]
    %v389 = vld [vmem:[#allocation5 + $0x748] sm:$0xff]
    %v390 = vld [vmem:[#allocation5 + $0x750] sm:$0xff]
    %v391 = vld [vmem:[#allocation5 + $0x758] sm:$0xff]
    %v392 = vld [vmem:[#allocation5 + $0x760] sm:$0xff]
    %v393 = vld [vmem:[#allocation5 + $0x768] sm:$0xff]
    %v394 = vld [vmem:[#allocation5 + $0x770] sm:$0xff]
    %v395 = vld [vmem:[#allocation5 + $0x778] sm:$0xff]
    %v396 = vld [vmem:[#allocation5 + $0x780] sm:$0xff]
    %v397 = vld [vmem:[#allocation5 + $0x788] sm:$0xff]
    %v398 = vld [vmem:[#allocation5 + $0x790] sm:$0xff]
    %v399 = vld [vmem:[#allocation5 + $0x798] sm:$0xff]
    %v400 = vld [vmem:[#allocation5 + $0x7a0] sm:$0xff]
    %v401 = vld [vmem:[#allocation5 + $0x7a8] sm:$0xff]
    %v402 = vld [vmem:[#allocation5 + $0x7b0] sm:$0xff]
    %v403 = vld [vmem:[#allocation5 + $0x7b8] sm:$0xff]
    %v404 = vld [vmem:[#allocation5 + $0x7c0] sm:$0xff]
    %v405 = vld [vmem:[#allocation5 + $0x7c8] sm:$0xff]
    %v406 = vld [vmem:[#allocation5 + $0x7d0] sm:$0xff]
    %v407 = vld [vmem:[#allocation5 + $0x7d8] sm:$0xff]
    %v408 = vld [vmem:[#allocation5 + $0x7e0] sm:$0xff]
    %v409 = vld [vmem:[#allocation5 + $0x7e8] sm:$0xff]
    %v410 = vld [vmem:[#allocation5 + $0x7f0] sm:$0xff]
    %v411 = vld [vmem:[#allocation5 + $0x7f8] sm:$0xff]
    %v412 = vld [vmem:[#allocation5 + $0x800] sm:$0xff]
    %v413 = vld [vmem:[#allocation5 + $0x808] sm:$0xff]
    %v414 = vld [vmem:[#allocation5 + $0x810] sm:$0xff]
    %v415 = vld [vmem:[#allocation5 + $0x818] sm:$0xff]
    %v416 = vld [vmem:[#allocation5 + $0x820] sm:$0xff]
    %v417 = vld [vmem:[#allocation5 + $0x828] sm:$0xff]
    %v418 = vld [vmem:[#allocation5 + $0x830] sm:$0xff]
    %v419 = vld [vmem:[#allocation5 + $0x838] sm:$0xff]
    %v420 = vld [vmem:[#allocation5 + $0x840] sm:$0xff]
    %v421 = vld [vmem:[#allocation5 + $0x848] sm:$0xff]
    %v422 = vld [vmem:[#allocation5 + $0x850] sm:$0xff]
    %v423 = vld [vmem:[#allocation5 + $0x858] sm:$0xff]
    %v424 = vld [vmem:[#allocation5 + $0x860] sm:$0xff]
    %v425 = vld [vmem:[#allocation5 + $0x868] sm:$0xff]
    %v426 = vld [vmem:[#allocation5 + $0x870] sm:$0xff]
    %v427 = vld [vmem:[#allocation5 + $0x878] sm:$0xff]
    %v428 = vld [vmem:[#allocation5 + $0x880] sm:$0xff]
    %v429 = vld [vmem:[#allocation5 + $0x888] sm:$0xff]
    %v430 = vld [vmem:[#allocation5 + $0x890] sm:$0xff]
    %v431 = vld [vmem:[#allocation5 + $0x898] sm:$0xff]
    %v432 = vld [vmem:[#allocation5 + $0x8a0] sm:$0xff]
    %v433 = vld [vmem:[#allocation5 + $0x8a8] sm:$0xff]
    %v434 = vld [vmem:[#allocation5 + $0x8b0] sm:$0xff]
    %v435 = vld [vmem:[#allocation5 + $0x8b8] sm:$0xff]
    %v436 = vld [vmem:[#allocation5 + $0x8c0] sm:$0xff]
    %v437 = vld [vmem:[#allocation5 + $0x8c8] sm:$0xff]
    %v438 = vld [vmem:[#allocation5 + $0x8d0] sm:$0xff]
    %v439 = vld [vmem:[#allocation5 + $0x8d8] sm:$0xff]
    %v440 = vld [vmem:[#allocation5 + $0x8e0] sm:$0xff]
    %v441 = vld [vmem:[#allocation5 + $0x8e8] sm:$0xff]
    %v442 = vld [vmem:[#allocation5 + $0x8f0] sm:$0xff]
    %v443 = vld [vmem:[#allocation5 + $0x8f8] sm:$0xff]
    %v444 = vld [vmem:[#allocation5 + $0x900] sm:$0xff]
    %v445 = vld [vmem:[#allocation5 + $0x908] sm:$0xff]
    %v446 = vld [vmem:[#allocation5 + $0x910] sm:$0xff]
    %v447 = vld [vmem:[#allocation5 + $0x918] sm:$0xff]
    %v448 = vld [vmem:[#allocation5 + $0x920] sm:$0xff]
    %v449 = vld [vmem:[#allocation5 + $0x928] sm:$0xff]
    %v450 = vld [vmem:[#allocation5 + $0x930] sm:$0xff]
    %v451 = vld [vmem:[#allocation5 + $0x938] sm:$0xff]
    %v452 = vld [vmem:[#allocation5 + $0x940] sm:$0xff]
    %v453 = vld [vmem:[#allocation5 + $0x948] sm:$0xff]
    %v454 = vld [vmem:[#allocation5 + $0x950] sm:$0xff]
    %v455 = vld [vmem:[#allocation5 + $0x958] sm:$0xff]
    %v456 = vld [vmem:[#allocation5 + $0x960] sm:$0xff]
    %v457 = vld [vmem:[#allocation5 + $0x968] sm:$0xff]
    %v458 = vld [vmem:[#allocation5 + $0x970] sm:$0xff]
    %v459 = vld [vmem:[#allocation5 + $0x978] sm:$0xff]
    %v460 = vld [vmem:[#allocation5 + $0x980] sm:$0xff]
    %v461 = vld [vmem:[#allocation5 + $0x988] sm:$0xff]
    %v462 = vld [vmem:[#allocation5 + $0x990] sm:$0xff]
    %v463 = vld [vmem:[#allocation5 + $0x998] sm:$0xff]
    %v464 = vld [vmem:[#allocation5 + $0x9a0] sm:$0xff]
    %v465 = vld [vmem:[#allocation5 + $0x9a8] sm:$0xff]
    %v466 = vld [vmem:[#allocation5 + $0x9b0] sm:$0xff]
    %v467 = vld [vmem:[#allocation5 + $0x9b8] sm:$0xff]
    %v468 = vld [vmem:[#allocation5 + $0x9c0] sm:$0xff]
    %v469 = vld [vmem:[#allocation5 + $0x9c8] sm:$0xff]
    %v470 = vld [vmem:[#allocation5 + $0x9d0] sm:$0xff]
    %v471 = vld [vmem:[#allocation5 + $0x9d8] sm:$0xff]
    %v472 = vld [vmem:[#allocation5 + $0x9e0] sm:$0xff]
    %v473 = vld [vmem:[#allocation5 + $0x9e8] sm:$0xff]
    %v474 = vld [vmem:[#allocation5 + $0x9f0] sm:$0xff]
    %v475 = vld [vmem:[#allocation5 + $0x9f8] sm:$0xff]
    %v476 = vld [vmem:[#allocation5 + $0xa00] sm:$0xff]
    %v477 = vld [vmem:[#allocation5 + $0xa08] sm:$0xff]
    %v478 = vld [vmem:[#allocation5 + $0xa10] sm:$0xff]
    %v479 = vld [vmem:[#allocation5 + $0xa18] sm:$0xff]
    %v480 = vld [vmem:[#allocation5 + $0xa20] sm:$0xff]
    %v481 = vld [vmem:[#allocation5 + $0xa28] sm:$0xff]
    %v482 = vld [vmem:[#allocation5 + $0xa30] sm:$0xff]
    %v483 = vld [vmem:[#allocation5 + $0xa38] sm:$0xff]
    %v484 = vld [vmem:[#allocation5 + $0xa40] sm:$0xff]
    %v485 = vld [vmem:[#allocation5 + $0xa48] sm:$0xff]
    %v486 = vld [vmem:[#allocation5 + $0xa50] sm:$0xff]
    %v487 = vld [vmem:[#allocation5 + $0xa58] sm:$0xff]
    %v488 = vld [vmem:[#allocation5 + $0xa60] sm:$0xff]
    %v489 = vld [vmem:[#allocation5 + $0xa68] sm:$0xff]
    %v490 = vld [vmem:[#allocation5 + $0xa70] sm:$0xff]
    %v491 = vld [vmem:[#allocation5 + $0xa78] sm:$0xff]
    %v492 = vld [vmem:[#allocation5 + $0xa80] sm:$0xff]
    %v493 = vld [vmem:[#allocation5 + $0xa88] sm:$0xff]
    %v494 = vld [vmem:[#allocation5 + $0xa90] sm:$0xff]
    %v495 = vld [vmem:[#allocation5 + $0xa98] sm:$0xff]
    %v496 = vld [vmem:[#allocation5 + $0xaa0] sm:$0xff]
    %v497 = vld [vmem:[#allocation5 + $0xaa8] sm:$0xff]
    %v498 = vld [vmem:[#allocation5 + $0xab0] sm:$0xff]
    %v499 = vld [vmem:[#allocation5 + $0xab8] sm:$0xff]
    %v500 = vld [vmem:[#allocation5 + $0xac0] sm:$0xff]
    %v501 = vld [vmem:[#allocation5 + $0xac8] sm:$0xff]
    %v502 = vld [vmem:[#allocation5 + $0xad0] sm:$0xff]
    %v503 = vld [vmem:[#allocation5 + $0xad8] sm:$0xff]
    %v504 = vld [vmem:[#allocation5 + $0xae0] sm:$0xff]
    %v505 = vld [vmem:[#allocation5 + $0xae8] sm:$0xff]
    %v506 = vld [vmem:[#allocation5 + $0xaf0] sm:$0xff]
    %v507 = vld [vmem:[#allocation5 + $0xaf8] sm:$0xff]
    %v508 = vld [vmem:[#allocation5 + $0xb00] sm:$0xff]
    %v509 = vld [vmem:[#allocation5 + $0xb08] sm:$0xff]
    %v510 = vld [vmem:[#allocation5 + $0xb10] sm:$0xff]
    %v511 = vld [vmem:[#allocation5 + $0xb18] sm:$0xff]
    %v512 = vld [vmem:[#allocation5 + $0xb20] sm:$0xff]
    %v513 = vld [vmem:[#allocation5 + $0xb28] sm:$0xff]
    %v514 = vld [vmem:[#allocation5 + $0xb30] sm:$0xff]
    %v515 = vld [vmem:[#allocation5 + $0xb38] sm:$0xff]
    %v516 = vld [vmem:[#allocation5 + $0xb40] sm:$0xff]
    %v517 = vld [vmem:[#allocation5 + $0xb48] sm:$0xff]
    %v518 = vld [vmem:[#allocation5 + $0xb50] sm:$0xff]
    %v519 = vld [vmem:[#allocation5 + $0xb58] sm:$0xff]
    %v520 = vld [vmem:[#allocation5 + $0xb60] sm:$0xff]
    %v521 = vld [vmem:[#allocation5 + $0xb68] sm:$0xff]
    %v522 = vld [vmem:[#allocation5 + $0xb70] sm:$0xff]
    %v523 = vld [vmem:[#allocation5 + $0xb78] sm:$0xff]
    %v524 = vld [vmem:[#allocation5 + $0xb80] sm:$0xff]
    %v525 = vld [vmem:[#allocation5 + $0xb88] sm:$0xff]
    %v526 = vld [vmem:[#allocation5 + $0xb90] sm:$0xff]
    %v527 = vld [vmem:[#allocation5 + $0xb98] sm:$0xff]
    %v528 = vld [vmem:[#allocation5 + $0xba0] sm:$0xff]
    %v529 = vld [vmem:[#allocation5 + $0xba8] sm:$0xff]
    %v530 = vld [vmem:[#allocation5 + $0xbb0] sm:$0xff]
    %v531 = vld [vmem:[#allocation5 + $0xbb8] sm:$0xff]
    %v532 = vld [vmem:[#allocation5 + $0xbc0] sm:$0xff]
    %v533 = vld [vmem:[#allocation5 + $0xbc8] sm:$0xff]
    %v534 = vld [vmem:[#allocation5 + $0xbd0] sm:$0xff]
    %v535 = vld [vmem:[#allocation5 + $0xbd8] sm:$0xff]
    %v536 = vld [vmem:[#allocation5 + $0xbe0] sm:$0xff]
    %v537 = vld [vmem:[#allocation5 + $0xbe8] sm:$0xff]
    %v538 = vld [vmem:[#allocation5 + $0xbf0] sm:$0xff]
    %v539 = vld [vmem:[#allocation5 + $0xbf8] sm:$0xff]
    %v540 = vld [vmem:[#allocation5 + $0xc00] sm:$0xff]
    %v541 = vld [vmem:[#allocation5 + $0xc08] sm:$0xff]
    %v542 = vld [vmem:[#allocation5 + $0xc10] sm:$0xff]
    %v543 = vld [vmem:[#allocation5 + $0xc18] sm:$0xff]
    %v544 = vld [vmem:[#allocation5 + $0xc20] sm:$0xff]
    %v545 = vld [vmem:[#allocation5 + $0xc28] sm:$0xff]
    %v546 = vld [vmem:[#allocation5 + $0xc30] sm:$0xff]
    %v547 = vld [vmem:[#allocation5 + $0xc38] sm:$0xff]
    %v548 = vld [vmem:[#allocation5 + $0xc40] sm:$0xff]
    %v549 = vld [vmem:[#allocation5 + $0xc48] sm:$0xff]
    %v550 = vld [vmem:[#allocation5 + $0xc50] sm:$0xff]
    %v551 = vld [vmem:[#allocation5 + $0xc58] sm:$0xff]
    %v552 = vld [vmem:[#allocation5 + $0xc60] sm:$0xff]
    %v553 = vld [vmem:[#allocation5 + $0xc68] sm:$0xff]
    %v554 = vld [vmem:[#allocation5 + $0xc70] sm:$0xff]
    %v555 = vld [vmem:[#allocation5 + $0xc78] sm:$0xff]
    %v556 = vld [vmem:[#allocation5 + $0xc80] sm:$0xff]
    %v557 = vld [vmem:[#allocation5 + $0xc88] sm:$0xff]
    %v558 = vld [vmem:[#allocation5 + $0xc90] sm:$0xff]
    %v559 = vld [vmem:[#allocation5 + $0xc98] sm:$0xff]
    %v560 = vld [vmem:[#allocation5 + $0xca0] sm:$0xff]
    %v561 = vld [vmem:[#allocation5 + $0xca8] sm:$0xff]
    %v562 = vld [vmem:[#allocation5 + $0xcb0] sm:$0xff]
    %v563 = vld [vmem:[#allocation5 + $0xcb8] sm:$0xff]
    %v564 = vld [vmem:[#allocation5 + $0xcc0] sm:$0xff]
    %v565 = vld [vmem:[#allocation5 + $0xcc8] sm:$0xff]
    %v566 = vld [vmem:[#allocation5 + $0xcd0] sm:$0xff]
    %v567 = vld [vmem:[#allocation5 + $0xcd8] sm:$0xff]
    %v568 = vld [vmem:[#allocation5 + $0xce0] sm:$0xff]
    %v569 = vld [vmem:[#allocation5 + $0xce8] sm:$0xff]
    %v570 = vld [vmem:[#allocation5 + $0xcf0] sm:$0xff]
    %v571 = vld [vmem:[#allocation5 + $0xcf8] sm:$0xff]
    %v572 = vld [vmem:[#allocation5 + $0xd00] sm:$0xff]
    %v573 = vld [vmem:[#allocation5 + $0xd08] sm:$0xff]
    %v574 = vld [vmem:[#allocation5 + $0xd10] sm:$0xff]
    %v575 = vld [vmem:[#allocation5 + $0xd18] sm:$0xff]
    %v576 = vld [vmem:[#allocation5 + $0xd20] sm:$0xff]
    %v577 = vld [vmem:[#allocation5 + $0xd28] sm:$0xff]
    %v578 = vld [vmem:[#allocation5 + $0xd30] sm:$0xff]
    %v579 = vld [vmem:[#allocation5 + $0xd38] sm:$0xff]
    %v580 = vld [vmem:[#allocation5 + $0xd40] sm:$0xff]
    %v581 = vld [vmem:[#allocation5 + $0xd48] sm:$0xff]
    %v582 = vld [vmem:[#allocation5 + $0xd50] sm:$0xff]
    %v583 = vld [vmem:[#allocation5 + $0xd58] sm:$0xff]
    %v584 = vld [vmem:[#allocation5 + $0xd60] sm:$0xff]
    %v585 = vld [vmem:[#allocation5 + $0xd68] sm:$0xff]
    %v586 = vld [vmem:[#allocation5 + $0xd70] sm:$0xff]
    %v587 = vld [vmem:[#allocation5 + $0xd78] sm:$0xff]
    %v588 = vld [vmem:[#allocation5 + $0xd80] sm:$0xff]
    %v589 = vld [vmem:[#allocation5 + $0xd88] sm:$0xff]
    %v590 = vld [vmem:[#allocation5 + $0xd90] sm:$0xff]
    %v591 = vld [vmem:[#allocation5 + $0xd98] sm:$0xff]
    %v592 = vld [vmem:[#allocation5 + $0xda0] sm:$0xff]
    %v593 = vld [vmem:[#allocation5 + $0xda8] sm:$0xff]
    %v594 = vld [vmem:[#allocation5 + $0xdb0] sm:$0xff]
    %v595 = vld [vmem:[#allocation5 + $0xdb8] sm:$0xff]
    %v596 = vld [vmem:[#allocation5 + $0xdc0] sm:$0xff]
    %v597 = vld [vmem:[#allocation5 + $0xdc8] sm:$0xff]
    %v598 = vld [vmem:[#allocation5 + $0xdd0] sm:$0xff]
    %v599 = vld [vmem:[#allocation5 + $0xdd8] sm:$0xff]
    %v600 = vld [vmem:[#allocation5 + $0xde0] sm:$0xff]
    %v601 = vld [vmem:[#allocation5 + $0xde8] sm:$0xff]
    %v602 = vld [vmem:[#allocation5 + $0xdf0] sm:$0xff]
    %v603 = vld [vmem:[#allocation5 + $0xdf8] sm:$0xff]
    %v604 = vld [vmem:[#allocation5 + $0xe00] sm:$0xff]
    %v605 = vld [vmem:[#allocation5 + $0xe08] sm:$0xff]
    %v606 = vld [vmem:[#allocation5 + $0xe10] sm:$0xff]
    %v607 = vld [vmem:[#allocation5 + $0xe18] sm:$0xff]
    %v608 = vld [vmem:[#allocation5 + $0xe20] sm:$0xff]
    %v609 = vld [vmem:[#allocation5 + $0xe28] sm:$0xff]
    %v610 = vld [vmem:[#allocation5 + $0xe30] sm:$0xff]
    %v611 = vld [vmem:[#allocation5 + $0xe38] sm:$0xff]
    %v612 = vld [vmem:[#allocation5 + $0xe40] sm:$0xff]
    %v613 = vld [vmem:[#allocation5 + $0xe48] sm:$0xff]
    %v614 = vld [vmem:[#allocation5 + $0xe50] sm:$0xff]
    %v615 = vld [vmem:[#allocation5 + $0xe58] sm:$0xff]
    %v616 = vld [vmem:[#allocation5 + $0xe60] sm:$0xff]
    %v617 = vld [vmem:[#allocation5 + $0xe68] sm:$0xff]
    %v618 = vld [vmem:[#allocation5 + $0xe70] sm:$0xff]
    %v619 = vld [vmem:[#allocation5 + $0xe78] sm:$0xff]
    %v620 = vld [vmem:[#allocation5 + $0xe80] sm:$0xff]
    %v621 = vld [vmem:[#allocation5 + $0xe88] sm:$0xff]
    %v622 = vld [vmem:[#allocation5 + $0xe90] sm:$0xff]
    %v623 = vld [vmem:[#allocation5 + $0xe98] sm:$0xff]
    %v624 = vld [vmem:[#allocation5 + $0xea0] sm:$0xff]
    %v625 = vld [vmem:[#allocation5 + $0xea8] sm:$0xff]
    %v626 = vld [vmem:[#allocation5 + $0xeb0] sm:$0xff]
    %v627 = vld [vmem:[#allocation5 + $0xeb8] sm:$0xff]
    %v628 = vld [vmem:[#allocation5 + $0xec0] sm:$0xff]
    %v629 = vld [vmem:[#allocation5 + $0xec8] sm:$0xff]
    %v630 = vld [vmem:[#allocation5 + $0xed0] sm:$0xff]
    %v631 = vld [vmem:[#allocation5 + $0xed8] sm:$0xff]
    %v632 = vld [vmem:[#allocation5 + $0xee0] sm:$0xff]
    %v633 = vld [vmem:[#allocation5 + $0xee8] sm:$0xff]
    %v634 = vld [vmem:[#allocation5 + $0xef0] sm:$0xff]
    %v635 = vld [vmem:[#allocation5 + $0xef8] sm:$0xff]
    %v636 = vld [vmem:[#allocation5 + $0xf00] sm:$0xff]
    %v637 = vld [vmem:[#allocation5 + $0xf08] sm:$0xff]
    %v638 = vld [vmem:[#allocation5 + $0xf10] sm:$0xff]
    %v639 = vld [vmem:[#allocation5 + $0xf18] sm:$0xff]
    %v640 = vld [vmem:[#allocation5 + $0xf20] sm:$0xff]
    %v641 = vld [vmem:[#allocation5 + $0xf28] sm:$0xff]
    %v642 = vld [vmem:[#allocation5 + $0xf30] sm:$0xff]
    %v643 = vld [vmem:[#allocation5 + $0xf38] sm:$0xff]
    %v644 = vld [vmem:[#allocation5 + $0xf40] sm:$0xff]
    %v645 = vld [vmem:[#allocation5 + $0xf48] sm:$0xff]
    %v646 = vld [vmem:[#allocation5 + $0xf50] sm:$0xff]
    %v647 = vld [vmem:[#allocation5 + $0xf58] sm:$0xff]
    %v648 = vld [vmem:[#allocation5 + $0xf60] sm:$0xff]
    %v649 = vld [vmem:[#allocation5 + $0xf68] sm:$0xff]
    %v650 = vld [vmem:[#allocation5 + $0xf70] sm:$0xff]
    %v651 = vld [vmem:[#allocation5 + $0xf78] sm:$0xff]
    %v652 = vld [vmem:[#allocation5 + $0xf80] sm:$0xff]
    %v653 = vld [vmem:[#allocation5 + $0xf88] sm:$0xff]
    %v654 = vld [vmem:[#allocation5 + $0xf90] sm:$0xff]
    %v655 = vld [vmem:[#allocation5 + $0xf98] sm:$0xff]
    %v656 = vld [vmem:[#allocation5 + $0xfa0] sm:$0xff]
    %v657 = vld [vmem:[#allocation5 + $0xfa8] sm:$0xff]
    %v658 = vld [vmem:[#allocation5 + $0xfb0] sm:$0xff]
    %v659 = vld [vmem:[#allocation5 + $0xfb8] sm:$0xff]
    %v660 = vld [vmem:[#allocation5 + $0xfc0] sm:$0xff]
    %v661 = vld [vmem:[#allocation5 + $0xfc8] sm:$0xff]
    %v662 = vld [vmem:[#allocation5 + $0xfd0] sm:$0xff]
    %v663 = vld [vmem:[#allocation5 + $0xfd8] sm:$0xff]
    %v664 = vld [vmem:[#allocation5 + $0xfe0] sm:$0xff]
    %v665 = vld [vmem:[#allocation5 + $0xfe8] sm:$0xff]
    %v666 = vld [vmem:[#allocation5 + $0xff0] sm:$0xff]
    %v667 = vld [vmem:[#allocation5 + $0xff8] sm:$0xff]
    %v668 = vld [vmem:[#allocation5 + $0x1000] sm:$0xff]
    %v669 = vld [vmem:[#allocation5 + $0x1008] sm:$0xff]
    %v670 = vld [vmem:[#allocation5 + $0x1010] sm:$0xff]
    %v671 = vld [vmem:[#allocation5 + $0x1018] sm:$0xff]
    %v672 = vld [vmem:[#allocation5 + $0x1020] sm:$0xff]
    %v673 = vld [vmem:[#allocation5 + $0x1028] sm:$0xff]
    %v674 = vld [vmem:[#allocation5 + $0x1030] sm:$0xff]
    %v675 = vld [vmem:[#allocation5 + $0x1038] sm:$0xff]
    %v676 = vld [vmem:[#allocation5 + $0x1040] sm:$0xff]
    %v677 = vld [vmem:[#allocation5 + $0x1048] sm:$0xff]
    %v678 = vld [vmem:[#allocation5 + $0x1050] sm:$0xff]
    %v679 = vld [vmem:[#allocation5 + $0x1058] sm:$0xff]
    %v680 = vld [vmem:[#allocation5 + $0x1060] sm:$0xff]
    %v681 = vld [vmem:[#allocation5 + $0x1068] sm:$0xff]
    %v682 = vld [vmem:[#allocation5 + $0x1070] sm:$0xff]
    %v683 = vld [vmem:[#allocation5 + $0x1078] sm:$0xff]
    %v684 = vld [vmem:[#allocation5 + $0x1080] sm:$0xff]
    %v685 = vld [vmem:[#allocation5 + $0x1088] sm:$0xff]
    %v686 = vld [vmem:[#allocation5 + $0x1090] sm:$0xff]
    %v687 = vld [vmem:[#allocation5 + $0x1098] sm:$0xff]
    %v688 = vld [vmem:[#allocation5 + $0x10a0] sm:$0xff]
    %v689 = vld [vmem:[#allocation5 + $0x10a8] sm:$0xff]
    %v690 = vld [vmem:[#allocation5 + $0x10b0] sm:$0xff]
    %v691 = vld [vmem:[#allocation5 + $0x10b8] sm:$0xff]
    %v692 = vld [vmem:[#allocation5 + $0x10c0] sm:$0xff]
    %v693 = vld [vmem:[#allocation5 + $0x10c8] sm:$0xff]
    %v694 = vld [vmem:[#allocation5 + $0x10d0] sm:$0xff]
    %v695 = vld [vmem:[#allocation5 + $0x10d8] sm:$0xff]
    %v696 = vld [vmem:[#allocation5 + $0x10e0] sm:$0xff]
    %v697 = vld [vmem:[#allocation5 + $0x10e8] sm:$0xff]
    %v698 = vld [vmem:[#allocation5 + $0x10f0] sm:$0xff]
    %v699 = vld [vmem:[#allocation5 + $0x10f8] sm:$0xff]
    %v700 = vld [vmem:[#allocation5 + $0x1100] sm:$0xff]
    %v701 = vld [vmem:[#allocation5 + $0x1108] sm:$0xff]
    %v702 = vld [vmem:[#allocation5 + $0x1110] sm:$0xff]
    %v703 = vld [vmem:[#allocation5 + $0x1118] sm:$0xff]
    %v704 = vld [vmem:[#allocation5 + $0x1120] sm:$0xff]
    %v705 = vld [vmem:[#allocation5 + $0x1128] sm:$0xff]
    %v706 = vld [vmem:[#allocation5 + $0x1130] sm:$0xff]
    %v707 = vld [vmem:[#allocation5 + $0x1138] sm:$0xff]
    %v708 = vld [vmem:[#allocation5 + $0x1140] sm:$0xff]
    %v709 = vld [vmem:[#allocation5 + $0x1148] sm:$0xff]
    %v710 = vld [vmem:[#allocation5 + $0x1150] sm:$0xff]
    %v711 = vld [vmem:[#allocation5 + $0x1158] sm:$0xff]
    %v712 = vld [vmem:[#allocation5 + $0x1160] sm:$0xff]
    %v713 = vld [vmem:[#allocation5 + $0x1168] sm:$0xff]
    %v714 = vld [vmem:[#allocation5 + $0x1170] sm:$0xff]
    %v715 = vld [vmem:[#allocation5 + $0x1178] sm:$0xff]
    %v716 = vld [vmem:[#allocation5 + $0x1180] sm:$0xff]
    %v717 = vld [vmem:[#allocation5 + $0x1188] sm:$0xff]
    %v718 = vld [vmem:[#allocation5 + $0x1190] sm:$0xff]
    %v719 = vld [vmem:[#allocation5 + $0x1198] sm:$0xff]
    %v720 = vld [vmem:[#allocation5 + $0x11a0] sm:$0xff]
    %v721 = vld [vmem:[#allocation5 + $0x11a8] sm:$0xff]
    %v722 = vld [vmem:[#allocation5 + $0x11b0] sm:$0xff]
    %v723 = vld [vmem:[#allocation5 + $0x11b8] sm:$0xff]
    %v724 = vld [vmem:[#allocation5 + $0x11c0] sm:$0xff]
    %v725 = vld [vmem:[#allocation5 + $0x11c8] sm:$0xff]
    %v726 = vld [vmem:[#allocation5 + $0x11d0] sm:$0xff]
    %v727 = vld [vmem:[#allocation5 + $0x11d8] sm:$0xff]
    %v728 = vld [vmem:[#allocation5 + $0x11e0] sm:$0xff]
    %v729 = vld [vmem:[#allocation5 + $0x11e8] sm:$0xff]
    %v730 = vld [vmem:[#allocation5 + $0x11f0] sm:$0xff]
    %v731 = vld [vmem:[#allocation5 + $0x11f8] sm:$0xff]
    %v732 = vld [vmem:[#allocation14] ss:$8 sm:$0xf]
    %v734 = vlaneseq
    %v735 = vshrl.u32 %v734, 7
    %v736 = vsub.s32 0, %v735
    %v737 = vrot.slane %v732, %v736
    %v738 = vlaneseq
    %v739 = vshrl.u32 %v738, 7
    %v740 = vsub.s32 1, %v739
    %v741 = vrot.slane %v732, %v740
    %v742 = vlaneseq
    %v743 = vshrl.u32 %v742, 7
    %v744 = vsub.s32 2, %v743
    %v745 = vrot.slane %v732, %v744
    %v746 = vlaneseq
    %v747 = vshrl.u32 %v746, 7
    %v748 = vsub.s32 3, %v747
    %v749 = vrot.slane %v732, %v748
    %v772 = vunpack.c.l.b16 %v138
    %v773 = vunpack.c.h.b16 %v138
    %v774 = vunpack.c.l.b16 %v139
    %v775 = vunpack.c.h.b16 %v139
    %v776 = vunpack.c.l.b16 %v140
    %v777 = vunpack.c.h.b16 %v140
    %v778 = vunpack.c.l.b16 %v141
    %v779 = vunpack.c.h.b16 %v141
    %v780 = vunpack.c.l.b16 %v142
    %v781 = vunpack.c.h.b16 %v142
    %v782 = vunpack.c.l.b16 %v143
    %v783 = vunpack.c.h.b16 %v143
    %v784 = vunpack.c.l.b16 %v144
    %v785 = vunpack.c.h.b16 %v144
    %v786 = vunpack.c.l.b16 %v145
    %v787 = vunpack.c.h.b16 %v145
    %v788 = vunpack.c.l.b16 %v146
    %v789 = vunpack.c.h.b16 %v146
    %v790 = vunpack.c.l.b16 %v147
    %v791 = vunpack.c.h.b16 %v147
    %v792 = vunpack.c.l.b16 %v148
    %v793 = vunpack.c.h.b16 %v148
    %v794 = vunpack.c.l.b16 %v149
    %v795 = vunpack.c.h.b16 %v149
    %v796 = vunpack.c.l.b16 %v150
    %v797 = vunpack.c.h.b16 %v150
    %v798 = vunpack.c.l.b16 %v151
    %v799 = vunpack.c.h.b16 %v151
    %v800 = vunpack.c.l.b16 %v152
    %v801 = vunpack.c.h.b16 %v152
    %v802 = vunpack.c.l.b16 %v153
    %v803 = vunpack.c.h.b16 %v153
    %v804 = vunpack.c.l.b16 %v154
    %v805 = vunpack.c.h.b16 %v154
    %v806 = vunpack.c.l.b16 %v155
    %v807 = vunpack.c.h.b16 %v155
    %v808 = vpack.c.b16 %v790, %v772
    %v809 = vpack.c.b16 %v791, %v773
    %v810 = vpack.c.b16 %v792, %v774
    %v811 = vpack.c.b16 %v793, %v775
    %v812 = vpack.c.b16 %v794, %v776
    %v813 = vpack.c.b16 %v795, %v777
    %v814 = vpack.c.b16 %v796, %v778
    %v815 = vpack.c.b16 %v797, %v779
    %v816 = vpack.c.b16 %v798, %v780
    %v817 = vpack.c.b16 %v799, %v781
    %v818 = vpack.c.b16 %v800, %v782
    %v819 = vpack.c.b16 %v801, %v783
    %v820 = vpack.c.b16 %v802, %v784
    %v821 = vpack.c.b16 %v803, %v785
    %v822 = vpack.c.b16 %v804, %v786
    %v823 = vpack.c.b16 %v805, %v787
    %v824 = vpack.c.b16 %v806, %v788
    %v825 = vpack.c.b16 %v807, %v789
    %v1420 = vunpack.c.l.b16 %v156
    %v1421 = vunpack.c.h.b16 %v156
    %v1422 = vunpack.c.l.b16 %v157
    %v1423 = vunpack.c.h.b16 %v157
    %v1424 = vunpack.c.l.b16 %v158
    %v1425 = vunpack.c.h.b16 %v158
    %v1426 = vunpack.c.l.b16 %v159
    %v1427 = vunpack.c.h.b16 %v159
    %v1428 = vunpack.c.l.b16 %v160
    %v1429 = vunpack.c.h.b16 %v160
    %v1430 = vunpack.c.l.b16 %v161
    %v1431 = vunpack.c.h.b16 %v161
    %v1432 = vunpack.c.l.b16 %v162
    %v1433 = vunpack.c.h.b16 %v162
    %v1434 = vunpack.c.l.b16 %v163
    %v1435 = vunpack.c.h.b16 %v163
    %v1436 = vunpack.c.l.b16 %v164
    %v1437 = vunpack.c.h.b16 %v164
    %v1438 = vunpack.c.l.b16 %v165
    %v1439 = vunpack.c.h.b16 %v165
    %v1440 = vunpack.c.l.b16 %v166
    %v1441 = vunpack.c.h.b16 %v166
    %v1442 = vunpack.c.l.b16 %v167
    %v1443 = vunpack.c.h.b16 %v167
    %v1444 = vunpack.c.l.b16 %v168
    %v1445 = vunpack.c.h.b16 %v168
    %v1446 = vunpack.c.l.b16 %v169
    %v1447 = vunpack.c.h.b16 %v169
    %v1448 = vunpack.c.l.b16 %v170
    %v1449 = vunpack.c.h.b16 %v170
    %v1450 = vunpack.c.l.b16 %v171
    %v1451 = vunpack.c.h.b16 %v171
    %v1452 = vunpack.c.l.b16 %v172
    %v1453 = vunpack.c.h.b16 %v172
    %v1454 = vunpack.c.l.b16 %v173
    %v1455 = vunpack.c.h.b16 %v173
    %v1456 = vunpack.c.l.b16 %v174
    %v1457 = vunpack.c.h.b16 %v174
    %v1458 = vunpack.c.l.b16 %v175
    %v1459 = vunpack.c.h.b16 %v175
    %v1460 = vunpack.c.l.b16 %v176
    %v1461 = vunpack.c.h.b16 %v176
    %v1462 = vunpack.c.l.b16 %v177
    %v1463 = vunpack.c.h.b16 %v177
    %v1464 = vunpack.c.l.b16 %v178
    %v1465 = vunpack.c.h.b16 %v178
    %v1466 = vunpack.c.l.b16 %v179
    %v1467 = vunpack.c.h.b16 %v179
    %v1468 = vunpack.c.l.b16 %v180
    %v1469 = vunpack.c.h.b16 %v180
    %v1470 = vunpack.c.l.b16 %v181
    %v1471 = vunpack.c.h.b16 %v181
    %v1472 = vunpack.c.l.b16 %v182
    %v1473 = vunpack.c.h.b16 %v182
    %v1474 = vunpack.c.l.b16 %v183
    %v1475 = vunpack.c.h.b16 %v183
    %v1476 = vunpack.c.l.b16 %v184
    %v1477 = vunpack.c.h.b16 %v184
    %v1478 = vunpack.c.l.b16 %v185
    %v1479 = vunpack.c.h.b16 %v185
    %v1480 = vunpack.c.l.b16 %v186
    %v1481 = vunpack.c.h.b16 %v186
    %v1482 = vunpack.c.l.b16 %v187
    %v1483 = vunpack.c.h.b16 %v187
    %v1484 = vunpack.c.l.b16 %v188
    %v1485 = vunpack.c.h.b16 %v188
    %v1486 = vunpack.c.l.b16 %v189
    %v1487 = vunpack.c.h.b16 %v189
    %v1488 = vunpack.c.l.b16 %v190
    %v1489 = vunpack.c.h.b16 %v190
    %v1490 = vunpack.c.l.b16 %v191
    %v1491 = vunpack.c.h.b16 %v191
    %v1492 = vunpack.c.l.b16 %v192
    %v1493 = vunpack.c.h.b16 %v192
    %v1494 = vunpack.c.l.b16 %v193
    %v1495 = vunpack.c.h.b16 %v193
    %v1496 = vunpack.c.l.b16 %v194
    %v1497 = vunpack.c.h.b16 %v194
    %v1498 = vunpack.c.l.b16 %v195
    %v1499 = vunpack.c.h.b16 %v195
    %v1500 = vunpack.c.l.b16 %v196
    %v1501 = vunpack.c.h.b16 %v196
    %v1502 = vunpack.c.l.b16 %v197
    %v1503 = vunpack.c.h.b16 %v197
    %v1504 = vunpack.c.l.b16 %v198
    %v1505 = vunpack.c.h.b16 %v198
    %v1506 = vunpack.c.l.b16 %v199
    %v1507 = vunpack.c.h.b16 %v199
    %v1508 = vunpack.c.l.b16 %v200
    %v1509 = vunpack.c.h.b16 %v200
    %v1510 = vunpack.c.l.b16 %v201
    %v1511 = vunpack.c.h.b16 %v201
    %v1512 = vunpack.c.l.b16 %v202
    %v1513 = vunpack.c.h.b16 %v202
    %v1514 = vunpack.c.l.b16 %v203
    %v1515 = vunpack.c.h.b16 %v203
    %v1516 = vunpack.c.l.b16 %v204
    %v1517 = vunpack.c.h.b16 %v204
    %v1518 = vunpack.c.l.b16 %v205
    %v1519 = vunpack.c.h.b16 %v205
    %v1520 = vunpack.c.l.b16 %v206
    %v1521 = vunpack.c.h.b16 %v206
    %v1522 = vunpack.c.l.b16 %v207
    %v1523 = vunpack.c.h.b16 %v207
    %v1524 = vunpack.c.l.b16 %v208
    %v1525 = vunpack.c.h.b16 %v208
    %v1526 = vunpack.c.l.b16 %v209
    %v1527 = vunpack.c.h.b16 %v209
    %v1528 = vunpack.c.l.b16 %v210
    %v1529 = vunpack.c.h.b16 %v210
    %v1530 = vunpack.c.l.b16 %v211
    %v1531 = vunpack.c.h.b16 %v211
    %v1532 = vunpack.c.l.b16 %v212
    %v1533 = vunpack.c.h.b16 %v212
    %v1534 = vunpack.c.l.b16 %v213
    %v1535 = vunpack.c.h.b16 %v213
    %v1536 = vunpack.c.l.b16 %v214
    %v1537 = vunpack.c.h.b16 %v214
    %v1538 = vunpack.c.l.b16 %v215
    %v1539 = vunpack.c.h.b16 %v215
    %v1540 = vunpack.c.l.b16 %v216
    %v1541 = vunpack.c.h.b16 %v216
    %v1542 = vunpack.c.l.b16 %v217
    %v1543 = vunpack.c.h.b16 %v217
    %v1544 = vunpack.c.l.b16 %v218
    %v1545 = vunpack.c.h.b16 %v218
    %v1546 = vunpack.c.l.b16 %v219
    %v1547 = vunpack.c.h.b16 %v219
    %v1548 = vunpack.c.l.b16 %v220
    %v1549 = vunpack.c.h.b16 %v220
    %v1550 = vunpack.c.l.b16 %v221
    %v1551 = vunpack.c.h.b16 %v221
    %v1552 = vunpack.c.l.b16 %v222
    %v1553 = vunpack.c.h.b16 %v222
    %v1554 = vunpack.c.l.b16 %v223
    %v1555 = vunpack.c.h.b16 %v223
    %v1556 = vunpack.c.l.b16 %v224
    %v1557 = vunpack.c.h.b16 %v224
    %v1558 = vunpack.c.l.b16 %v225
    %v1559 = vunpack.c.h.b16 %v225
    %v1560 = vunpack.c.l.b16 %v226
    %v1561 = vunpack.c.h.b16 %v226
    %v1562 = vunpack.c.l.b16 %v227
    %v1563 = vunpack.c.h.b16 %v227
    %v1564 = vunpack.c.l.b16 %v228
    %v1565 = vunpack.c.h.b16 %v228
    %v1566 = vunpack.c.l.b16 %v229
    %v1567 = vunpack.c.h.b16 %v229
    %v1568 = vunpack.c.l.b16 %v230
    %v1569 = vunpack.c.h.b16 %v230
    %v1570 = vunpack.c.l.b16 %v231
    %v1571 = vunpack.c.h.b16 %v231
    %v1572 = vunpack.c.l.b16 %v232
    %v1573 = vunpack.c.h.b16 %v232
    %v1574 = vunpack.c.l.b16 %v233
    %v1575 = vunpack.c.h.b16 %v233
    %v1576 = vunpack.c.l.b16 %v234
    %v1577 = vunpack.c.h.b16 %v234
    %v1578 = vunpack.c.l.b16 %v235
    %v1579 = vunpack.c.h.b16 %v235
    %v1580 = vunpack.c.l.b16 %v236
    %v1581 = vunpack.c.h.b16 %v236
    %v1582 = vunpack.c.l.b16 %v237
    %v1583 = vunpack.c.h.b16 %v237
    %v1584 = vunpack.c.l.b16 %v238
    %v1585 = vunpack.c.h.b16 %v238
    %v1586 = vunpack.c.l.b16 %v239
    %v1587 = vunpack.c.h.b16 %v239
    %v1588 = vunpack.c.l.b16 %v240
    %v1589 = vunpack.c.h.b16 %v240
    %v1590 = vunpack.c.l.b16 %v241
    %v1591 = vunpack.c.h.b16 %v241
    %v1592 = vunpack.c.l.b16 %v242
    %v1593 = vunpack.c.h.b16 %v242
    %v1594 = vunpack.c.l.b16 %v243
    %v1595 = vunpack.c.h.b16 %v243
    %v1596 = vunpack.c.l.b16 %v244
    %v1597 = vunpack.c.h.b16 %v244
    %v1598 = vunpack.c.l.b16 %v245
    %v1599 = vunpack.c.h.b16 %v245
    %v1600 = vunpack.c.l.b16 %v246
    %v1601 = vunpack.c.h.b16 %v246
    %v1602 = vunpack.c.l.b16 %v247
    %v1603 = vunpack.c.h.b16 %v247
    %v1604 = vunpack.c.l.b16 %v248
    %v1605 = vunpack.c.h.b16 %v248
    %v1606 = vunpack.c.l.b16 %v249
    %v1607 = vunpack.c.h.b16 %v249
    %v1608 = vunpack.c.l.b16 %v250
    %v1609 = vunpack.c.h.b16 %v250
    %v1610 = vunpack.c.l.b16 %v251
    %v1611 = vunpack.c.h.b16 %v251
    %v1612 = vunpack.c.l.b16 %v252
    %v1613 = vunpack.c.h.b16 %v252
    %v1614 = vunpack.c.l.b16 %v253
    %v1615 = vunpack.c.h.b16 %v253
    %v1616 = vunpack.c.l.b16 %v254
    %v1617 = vunpack.c.h.b16 %v254
    %v1618 = vunpack.c.l.b16 %v255
    %v1619 = vunpack.c.h.b16 %v255
    %v1620 = vunpack.c.l.b16 %v256
    %v1621 = vunpack.c.h.b16 %v256
    %v1622 = vunpack.c.l.b16 %v257
    %v1623 = vunpack.c.h.b16 %v257
    %v1624 = vunpack.c.l.b16 %v258
    %v1625 = vunpack.c.h.b16 %v258
    %v1626 = vunpack.c.l.b16 %v259
    %v1627 = vunpack.c.h.b16 %v259
    %v1628 = vunpack.c.l.b16 %v260
    %v1629 = vunpack.c.h.b16 %v260
    %v1630 = vunpack.c.l.b16 %v261
    %v1631 = vunpack.c.h.b16 %v261
    %v1632 = vunpack.c.l.b16 %v262
    %v1633 = vunpack.c.h.b16 %v262
    %v1634 = vunpack.c.l.b16 %v263
    %v1635 = vunpack.c.h.b16 %v263
    %v1636 = vunpack.c.l.b16 %v264
    %v1637 = vunpack.c.h.b16 %v264
    %v1638 = vunpack.c.l.b16 %v265
    %v1639 = vunpack.c.h.b16 %v265
    %v1640 = vunpack.c.l.b16 %v266
    %v1641 = vunpack.c.h.b16 %v266
    %v1642 = vunpack.c.l.b16 %v267
    %v1643 = vunpack.c.h.b16 %v267
    %v1644 = vunpack.c.l.b16 %v268
    %v1645 = vunpack.c.h.b16 %v268
    %v1646 = vunpack.c.l.b16 %v269
    %v1647 = vunpack.c.h.b16 %v269
    %v1648 = vunpack.c.l.b16 %v270
    %v1649 = vunpack.c.h.b16 %v270
    %v1650 = vunpack.c.l.b16 %v271
    %v1651 = vunpack.c.h.b16 %v271
    %v1652 = vunpack.c.l.b16 %v272
    %v1653 = vunpack.c.h.b16 %v272
    %v1654 = vunpack.c.l.b16 %v273
    %v1655 = vunpack.c.h.b16 %v273
    %v1656 = vunpack.c.l.b16 %v274
    %v1657 = vunpack.c.h.b16 %v274
    %v1658 = vunpack.c.l.b16 %v275
    %v1659 = vunpack.c.h.b16 %v275
    %v1660 = vunpack.c.l.b16 %v276
    %v1661 = vunpack.c.h.b16 %v276
    %v1662 = vunpack.c.l.b16 %v277
    %v1663 = vunpack.c.h.b16 %v277
    %v1664 = vunpack.c.l.b16 %v278
    %v1665 = vunpack.c.h.b16 %v278
    %v1666 = vunpack.c.l.b16 %v279
    %v1667 = vunpack.c.h.b16 %v279
    %v1668 = vunpack.c.l.b16 %v280
    %v1669 = vunpack.c.h.b16 %v280
    %v1670 = vunpack.c.l.b16 %v281
    %v1671 = vunpack.c.h.b16 %v281
    %v1672 = vunpack.c.l.b16 %v282
    %v1673 = vunpack.c.h.b16 %v282
    %v1674 = vunpack.c.l.b16 %v283
    %v1675 = vunpack.c.h.b16 %v283
    %v1676 = vunpack.c.l.b16 %v284
    %v1677 = vunpack.c.h.b16 %v284
    %v1678 = vunpack.c.l.b16 %v285
    %v1679 = vunpack.c.h.b16 %v285
    %v1680 = vunpack.c.l.b16 %v286
    %v1681 = vunpack.c.h.b16 %v286
    %v1682 = vunpack.c.l.b16 %v287
    %v1683 = vunpack.c.h.b16 %v287
    %v1684 = vunpack.c.l.b16 %v288
    %v1685 = vunpack.c.h.b16 %v288
    %v1686 = vunpack.c.l.b16 %v289
    %v1687 = vunpack.c.h.b16 %v289
    %v1688 = vunpack.c.l.b16 %v290
    %v1689 = vunpack.c.h.b16 %v290
    %v1690 = vunpack.c.l.b16 %v291
    %v1691 = vunpack.c.h.b16 %v291
    %v1692 = vunpack.c.l.b16 %v292
    %v1693 = vunpack.c.h.b16 %v292
    %v1694 = vunpack.c.l.b16 %v293
    %v1695 = vunpack.c.h.b16 %v293
    %v1696 = vunpack.c.l.b16 %v294
    %v1697 = vunpack.c.h.b16 %v294
    %v1698 = vunpack.c.l.b16 %v295
    %v1699 = vunpack.c.h.b16 %v295
    %v1700 = vunpack.c.l.b16 %v296
    %v1701 = vunpack.c.h.b16 %v296
    %v1702 = vunpack.c.l.b16 %v297
    %v1703 = vunpack.c.h.b16 %v297
    %v1704 = vunpack.c.l.b16 %v298
    %v1705 = vunpack.c.h.b16 %v298
    %v1706 = vunpack.c.l.b16 %v299
    %v1707 = vunpack.c.h.b16 %v299
    %v1708 = vunpack.c.l.b16 %v300
    %v1709 = vunpack.c.h.b16 %v300
    %v1710 = vunpack.c.l.b16 %v301
    %v1711 = vunpack.c.h.b16 %v301
    %v1712 = vunpack.c.l.b16 %v302
    %v1713 = vunpack.c.h.b16 %v302
    %v1714 = vunpack.c.l.b16 %v303
    %v1715 = vunpack.c.h.b16 %v303
    %v1716 = vunpack.c.l.b16 %v304
    %v1717 = vunpack.c.h.b16 %v304
    %v1718 = vunpack.c.l.b16 %v305
    %v1719 = vunpack.c.h.b16 %v305
    %v1720 = vunpack.c.l.b16 %v306
    %v1721 = vunpack.c.h.b16 %v306
    %v1722 = vunpack.c.l.b16 %v307
    %v1723 = vunpack.c.h.b16 %v307
    %v1724 = vunpack.c.l.b16 %v308
    %v1725 = vunpack.c.h.b16 %v308
    %v1726 = vunpack.c.l.b16 %v309
    %v1727 = vunpack.c.h.b16 %v309
    %v1728 = vunpack.c.l.b16 %v310
    %v1729 = vunpack.c.h.b16 %v310
    %v1730 = vunpack.c.l.b16 %v311
    %v1731 = vunpack.c.h.b16 %v311
    %v1732 = vunpack.c.l.b16 %v312
    %v1733 = vunpack.c.h.b16 %v312
    %v1734 = vunpack.c.l.b16 %v313
    %v1735 = vunpack.c.h.b16 %v313
    %v1736 = vunpack.c.l.b16 %v314
    %v1737 = vunpack.c.h.b16 %v314
    %v1738 = vunpack.c.l.b16 %v315
    %v1739 = vunpack.c.h.b16 %v315
    %v1740 = vunpack.c.l.b16 %v316
    %v1741 = vunpack.c.h.b16 %v316
    %v1742 = vunpack.c.l.b16 %v317
    %v1743 = vunpack.c.h.b16 %v317
    %v1744 = vunpack.c.l.b16 %v318
    %v1745 = vunpack.c.h.b16 %v318
    %v1746 = vunpack.c.l.b16 %v319
    %v1747 = vunpack.c.h.b16 %v319
    %v1748 = vunpack.c.l.b16 %v320
    %v1749 = vunpack.c.h.b16 %v320
    %v1750 = vunpack.c.l.b16 %v321
    %v1751 = vunpack.c.h.b16 %v321
    %v1752 = vunpack.c.l.b16 %v322
    %v1753 = vunpack.c.h.b16 %v322
    %v1754 = vunpack.c.l.b16 %v323
    %v1755 = vunpack.c.h.b16 %v323
    %v1756 = vunpack.c.l.b16 %v324
    %v1757 = vunpack.c.h.b16 %v324
    %v1758 = vunpack.c.l.b16 %v325
    %v1759 = vunpack.c.h.b16 %v325
    %v1760 = vunpack.c.l.b16 %v326
    %v1761 = vunpack.c.h.b16 %v326
    %v1762 = vunpack.c.l.b16 %v327
    %v1763 = vunpack.c.h.b16 %v327
    %v1764 = vunpack.c.l.b16 %v328
    %v1765 = vunpack.c.h.b16 %v328
    %v1766 = vunpack.c.l.b16 %v329
    %v1767 = vunpack.c.h.b16 %v329
    %v1768 = vunpack.c.l.b16 %v330
    %v1769 = vunpack.c.h.b16 %v330
    %v1770 = vunpack.c.l.b16 %v331
    %v1771 = vunpack.c.h.b16 %v331
    %v1772 = vunpack.c.l.b16 %v332
    %v1773 = vunpack.c.h.b16 %v332
    %v1774 = vunpack.c.l.b16 %v333
    %v1775 = vunpack.c.h.b16 %v333
    %v1776 = vunpack.c.l.b16 %v334
    %v1777 = vunpack.c.h.b16 %v334
    %v1778 = vunpack.c.l.b16 %v335
    %v1779 = vunpack.c.h.b16 %v335
    %v1780 = vunpack.c.l.b16 %v336
    %v1781 = vunpack.c.h.b16 %v336
    %v1782 = vunpack.c.l.b16 %v337
    %v1783 = vunpack.c.h.b16 %v337
    %v1784 = vunpack.c.l.b16 %v338
    %v1785 = vunpack.c.h.b16 %v338
    %v1786 = vunpack.c.l.b16 %v339
    %v1787 = vunpack.c.h.b16 %v339
    %v1788 = vunpack.c.l.b16 %v340
    %v1789 = vunpack.c.h.b16 %v340
    %v1790 = vunpack.c.l.b16 %v341
    %v1791 = vunpack.c.h.b16 %v341
    %v1792 = vunpack.c.l.b16 %v342
    %v1793 = vunpack.c.h.b16 %v342
    %v1794 = vunpack.c.l.b16 %v343
    %v1795 = vunpack.c.h.b16 %v343
    %v1796 = vunpack.c.l.b16 %v344
    %v1797 = vunpack.c.h.b16 %v344
    %v1798 = vunpack.c.l.b16 %v345
    %v1799 = vunpack.c.h.b16 %v345
    %v1800 = vunpack.c.l.b16 %v346
    %v1801 = vunpack.c.h.b16 %v346
    %v1802 = vunpack.c.l.b16 %v347
    %v1803 = vunpack.c.h.b16 %v347
    %v1804 = vunpack.c.l.b16 %v348
    %v1805 = vunpack.c.h.b16 %v348
    %v1806 = vunpack.c.l.b16 %v349
    %v1807 = vunpack.c.h.b16 %v349
    %v1808 = vunpack.c.l.b16 %v350
    %v1809 = vunpack.c.h.b16 %v350
    %v1810 = vunpack.c.l.b16 %v351
    %v1811 = vunpack.c.h.b16 %v351
    %v1812 = vunpack.c.l.b16 %v352
    %v1813 = vunpack.c.h.b16 %v352
    %v1814 = vunpack.c.l.b16 %v353
    %v1815 = vunpack.c.h.b16 %v353
    %v1816 = vunpack.c.l.b16 %v354
    %v1817 = vunpack.c.h.b16 %v354
    %v1818 = vunpack.c.l.b16 %v355
    %v1819 = vunpack.c.h.b16 %v355
    %v1820 = vunpack.c.l.b16 %v356
    %v1821 = vunpack.c.h.b16 %v356
    %v1822 = vunpack.c.l.b16 %v357
    %v1823 = vunpack.c.h.b16 %v357
    %v1824 = vunpack.c.l.b16 %v358
    %v1825 = vunpack.c.h.b16 %v358
    %v1826 = vunpack.c.l.b16 %v359
    %v1827 = vunpack.c.h.b16 %v359
    %v1828 = vunpack.c.l.b16 %v360
    %v1829 = vunpack.c.h.b16 %v360
    %v1830 = vunpack.c.l.b16 %v361
    %v1831 = vunpack.c.h.b16 %v361
    %v1832 = vunpack.c.l.b16 %v362
    %v1833 = vunpack.c.h.b16 %v362
    %v1834 = vunpack.c.l.b16 %v363
    %v1835 = vunpack.c.h.b16 %v363
    %v1836 = vunpack.c.l.b16 %v364
    %v1837 = vunpack.c.h.b16 %v364
    %v1838 = vunpack.c.l.b16 %v365
    %v1839 = vunpack.c.h.b16 %v365
    %v1840 = vunpack.c.l.b16 %v366
    %v1841 = vunpack.c.h.b16 %v366
    %v1842 = vunpack.c.l.b16 %v367
    %v1843 = vunpack.c.h.b16 %v367
    %v1844 = vunpack.c.l.b16 %v368
    %v1845 = vunpack.c.h.b16 %v368
    %v1846 = vunpack.c.l.b16 %v369
    %v1847 = vunpack.c.h.b16 %v369
    %v1848 = vunpack.c.l.b16 %v370
    %v1849 = vunpack.c.h.b16 %v370
    %v1850 = vunpack.c.l.b16 %v371
    %v1851 = vunpack.c.h.b16 %v371
    %v1852 = vunpack.c.l.b16 %v372
    %v1853 = vunpack.c.h.b16 %v372
    %v1854 = vunpack.c.l.b16 %v373
    %v1855 = vunpack.c.h.b16 %v373
    %v1856 = vunpack.c.l.b16 %v374
    %v1857 = vunpack.c.h.b16 %v374
    %v1858 = vunpack.c.l.b16 %v375
    %v1859 = vunpack.c.h.b16 %v375
    %v1860 = vunpack.c.l.b16 %v376
    %v1861 = vunpack.c.h.b16 %v376
    %v1862 = vunpack.c.l.b16 %v377
    %v1863 = vunpack.c.h.b16 %v377
    %v1864 = vunpack.c.l.b16 %v378
    %v1865 = vunpack.c.h.b16 %v378
    %v1866 = vunpack.c.l.b16 %v379
    %v1867 = vunpack.c.h.b16 %v379
    %v1868 = vunpack.c.l.b16 %v380
    %v1869 = vunpack.c.h.b16 %v380
    %v1870 = vunpack.c.l.b16 %v381
    %v1871 = vunpack.c.h.b16 %v381
    %v1872 = vunpack.c.l.b16 %v382
    %v1873 = vunpack.c.h.b16 %v382
    %v1874 = vunpack.c.l.b16 %v383
    %v1875 = vunpack.c.h.b16 %v383
    %v1876 = vunpack.c.l.b16 %v384
    %v1877 = vunpack.c.h.b16 %v384
    %v1878 = vunpack.c.l.b16 %v385
    %v1879 = vunpack.c.h.b16 %v385
    %v1880 = vunpack.c.l.b16 %v386
    %v1881 = vunpack.c.h.b16 %v386
    %v1882 = vunpack.c.l.b16 %v387
    %v1883 = vunpack.c.h.b16 %v387
    %v1884 = vunpack.c.l.b16 %v388
    %v1885 = vunpack.c.h.b16 %v388
    %v1886 = vunpack.c.l.b16 %v389
    %v1887 = vunpack.c.h.b16 %v389
    %v1888 = vunpack.c.l.b16 %v390
    %v1889 = vunpack.c.h.b16 %v390
    %v1890 = vunpack.c.l.b16 %v391
    %v1891 = vunpack.c.h.b16 %v391
    %v1892 = vunpack.c.l.b16 %v392
    %v1893 = vunpack.c.h.b16 %v392
    %v1894 = vunpack.c.l.b16 %v393
    %v1895 = vunpack.c.h.b16 %v393
    %v1896 = vunpack.c.l.b16 %v394
    %v1897 = vunpack.c.h.b16 %v394
    %v1898 = vunpack.c.l.b16 %v395
    %v1899 = vunpack.c.h.b16 %v395
    %v1900 = vunpack.c.l.b16 %v396
    %v1901 = vunpack.c.h.b16 %v396
    %v1902 = vunpack.c.l.b16 %v397
    %v1903 = vunpack.c.h.b16 %v397
    %v1904 = vunpack.c.l.b16 %v398
    %v1905 = vunpack.c.h.b16 %v398
    %v1906 = vunpack.c.l.b16 %v399
    %v1907 = vunpack.c.h.b16 %v399
    %v1908 = vunpack.c.l.b16 %v400
    %v1909 = vunpack.c.h.b16 %v400
    %v1910 = vunpack.c.l.b16 %v401
    %v1911 = vunpack.c.h.b16 %v401
    %v1912 = vunpack.c.l.b16 %v402
    %v1913 = vunpack.c.h.b16 %v402
    %v1914 = vunpack.c.l.b16 %v403
    %v1915 = vunpack.c.h.b16 %v403
    %v1916 = vunpack.c.l.b16 %v404
    %v1917 = vunpack.c.h.b16 %v404
    %v1918 = vunpack.c.l.b16 %v405
    %v1919 = vunpack.c.h.b16 %v405
    %v1920 = vunpack.c.l.b16 %v406
    %v1921 = vunpack.c.h.b16 %v406
    %v1922 = vunpack.c.l.b16 %v407
    %v1923 = vunpack.c.h.b16 %v407
    %v1924 = vunpack.c.l.b16 %v408
    %v1925 = vunpack.c.h.b16 %v408
    %v1926 = vunpack.c.l.b16 %v409
    %v1927 = vunpack.c.h.b16 %v409
    %v1928 = vunpack.c.l.b16 %v410
    %v1929 = vunpack.c.h.b16 %v410
    %v1930 = vunpack.c.l.b16 %v411
    %v1931 = vunpack.c.h.b16 %v411
    %v1932 = vunpack.c.l.b16 %v412
    %v1933 = vunpack.c.h.b16 %v412
    %v1934 = vunpack.c.l.b16 %v413
    %v1935 = vunpack.c.h.b16 %v413
    %v1936 = vunpack.c.l.b16 %v414
    %v1937 = vunpack.c.h.b16 %v414
    %v1938 = vunpack.c.l.b16 %v415
    %v1939 = vunpack.c.h.b16 %v415
    %v1940 = vunpack.c.l.b16 %v416
    %v1941 = vunpack.c.h.b16 %v416
    %v1942 = vunpack.c.l.b16 %v417
    %v1943 = vunpack.c.h.b16 %v417
    %v1944 = vunpack.c.l.b16 %v418
    %v1945 = vunpack.c.h.b16 %v418
    %v1946 = vunpack.c.l.b16 %v419
    %v1947 = vunpack.c.h.b16 %v419
    %v1948 = vunpack.c.l.b16 %v420
    %v1949 = vunpack.c.h.b16 %v420
    %v1950 = vunpack.c.l.b16 %v421
    %v1951 = vunpack.c.h.b16 %v421
    %v1952 = vunpack.c.l.b16 %v422
    %v1953 = vunpack.c.h.b16 %v422
    %v1954 = vunpack.c.l.b16 %v423
    %v1955 = vunpack.c.h.b16 %v423
    %v1956 = vunpack.c.l.b16 %v424
    %v1957 = vunpack.c.h.b16 %v424
    %v1958 = vunpack.c.l.b16 %v425
    %v1959 = vunpack.c.h.b16 %v425
    %v1960 = vunpack.c.l.b16 %v426
    %v1961 = vunpack.c.h.b16 %v426
    %v1962 = vunpack.c.l.b16 %v427
    %v1963 = vunpack.c.h.b16 %v427
    %v1964 = vunpack.c.l.b16 %v428
    %v1965 = vunpack.c.h.b16 %v428
    %v1966 = vunpack.c.l.b16 %v429
    %v1967 = vunpack.c.h.b16 %v429
    %v1968 = vunpack.c.l.b16 %v430
    %v1969 = vunpack.c.h.b16 %v430
    %v1970 = vunpack.c.l.b16 %v431
    %v1971 = vunpack.c.h.b16 %v431
    %v1972 = vunpack.c.l.b16 %v432
    %v1973 = vunpack.c.h.b16 %v432
    %v1974 = vunpack.c.l.b16 %v433
    %v1975 = vunpack.c.h.b16 %v433
    %v1976 = vunpack.c.l.b16 %v434
    %v1977 = vunpack.c.h.b16 %v434
    %v1978 = vunpack.c.l.b16 %v435
    %v1979 = vunpack.c.h.b16 %v435
    %v1980 = vunpack.c.l.b16 %v436
    %v1981 = vunpack.c.h.b16 %v436
    %v1982 = vunpack.c.l.b16 %v437
    %v1983 = vunpack.c.h.b16 %v437
    %v1984 = vunpack.c.l.b16 %v438
    %v1985 = vunpack.c.h.b16 %v438
    %v1986 = vunpack.c.l.b16 %v439
    %v1987 = vunpack.c.h.b16 %v439
    %v1988 = vunpack.c.l.b16 %v440
    %v1989 = vunpack.c.h.b16 %v440
    %v1990 = vunpack.c.l.b16 %v441
    %v1991 = vunpack.c.h.b16 %v441
    %v1992 = vunpack.c.l.b16 %v442
    %v1993 = vunpack.c.h.b16 %v442
    %v1994 = vunpack.c.l.b16 %v443
    %v1995 = vunpack.c.h.b16 %v443
    %v1996 = vunpack.c.l.b16 %v444
    %v1997 = vunpack.c.h.b16 %v444
    %v1998 = vunpack.c.l.b16 %v445
    %v1999 = vunpack.c.h.b16 %v445
    %v2000 = vunpack.c.l.b16 %v446
    %v2001 = vunpack.c.h.b16 %v446
    %v2002 = vunpack.c.l.b16 %v447
    %v2003 = vunpack.c.h.b16 %v447
    %v2004 = vunpack.c.l.b16 %v448
    %v2005 = vunpack.c.h.b16 %v448
    %v2006 = vunpack.c.l.b16 %v449
    %v2007 = vunpack.c.h.b16 %v449
    %v2008 = vunpack.c.l.b16 %v450
    %v2009 = vunpack.c.h.b16 %v450
    %v2010 = vunpack.c.l.b16 %v451
    %v2011 = vunpack.c.h.b16 %v451
    %v2012 = vunpack.c.l.b16 %v452
    %v2013 = vunpack.c.h.b16 %v452
    %v2014 = vunpack.c.l.b16 %v453
    %v2015 = vunpack.c.h.b16 %v453
    %v2016 = vunpack.c.l.b16 %v454
    %v2017 = vunpack.c.h.b16 %v454
    %v2018 = vunpack.c.l.b16 %v455
    %v2019 = vunpack.c.h.b16 %v455
    %v2020 = vunpack.c.l.b16 %v456
    %v2021 = vunpack.c.h.b16 %v456
    %v2022 = vunpack.c.l.b16 %v457
    %v2023 = vunpack.c.h.b16 %v457
    %v2024 = vunpack.c.l.b16 %v458
    %v2025 = vunpack.c.h.b16 %v458
    %v2026 = vunpack.c.l.b16 %v459
    %v2027 = vunpack.c.h.b16 %v459
    %v2028 = vunpack.c.l.b16 %v460
    %v2029 = vunpack.c.h.b16 %v460
    %v2030 = vunpack.c.l.b16 %v461
    %v2031 = vunpack.c.h.b16 %v461
    %v2032 = vunpack.c.l.b16 %v462
    %v2033 = vunpack.c.h.b16 %v462
    %v2034 = vunpack.c.l.b16 %v463
    %v2035 = vunpack.c.h.b16 %v463
    %v2036 = vunpack.c.l.b16 %v464
    %v2037 = vunpack.c.h.b16 %v464
    %v2038 = vunpack.c.l.b16 %v465
    %v2039 = vunpack.c.h.b16 %v465
    %v2040 = vunpack.c.l.b16 %v466
    %v2041 = vunpack.c.h.b16 %v466
    %v2042 = vunpack.c.l.b16 %v467
    %v2043 = vunpack.c.h.b16 %v467
    %v2044 = vunpack.c.l.b16 %v468
    %v2045 = vunpack.c.h.b16 %v468
    %v2046 = vunpack.c.l.b16 %v469
    %v2047 = vunpack.c.h.b16 %v469
    %v2048 = vunpack.c.l.b16 %v470
    %v2049 = vunpack.c.h.b16 %v470
    %v2050 = vunpack.c.l.b16 %v471
    %v2051 = vunpack.c.h.b16 %v471
    %v2052 = vunpack.c.l.b16 %v472
    %v2053 = vunpack.c.h.b16 %v472
    %v2054 = vunpack.c.l.b16 %v473
    %v2055 = vunpack.c.h.b16 %v473
    %v2056 = vunpack.c.l.b16 %v474
    %v2057 = vunpack.c.h.b16 %v474
    %v2058 = vunpack.c.l.b16 %v475
    %v2059 = vunpack.c.h.b16 %v475
    %v2060 = vunpack.c.l.b16 %v476
    %v2061 = vunpack.c.h.b16 %v476
    %v2062 = vunpack.c.l.b16 %v477
    %v2063 = vunpack.c.h.b16 %v477
    %v2064 = vunpack.c.l.b16 %v478
    %v2065 = vunpack.c.h.b16 %v478
    %v2066 = vunpack.c.l.b16 %v479
    %v2067 = vunpack.c.h.b16 %v479
    %v2068 = vunpack.c.l.b16 %v480
    %v2069 = vunpack.c.h.b16 %v480
    %v2070 = vunpack.c.l.b16 %v481
    %v2071 = vunpack.c.h.b16 %v481
    %v2072 = vunpack.c.l.b16 %v482
    %v2073 = vunpack.c.h.b16 %v482
    %v2074 = vunpack.c.l.b16 %v483
    %v2075 = vunpack.c.h.b16 %v483
    %v2076 = vunpack.c.l.b16 %v484
    %v2077 = vunpack.c.h.b16 %v484
    %v2078 = vunpack.c.l.b16 %v485
    %v2079 = vunpack.c.h.b16 %v485
    %v2080 = vunpack.c.l.b16 %v486
    %v2081 = vunpack.c.h.b16 %v486
    %v2082 = vunpack.c.l.b16 %v487
    %v2083 = vunpack.c.h.b16 %v487
    %v2084 = vunpack.c.l.b16 %v488
    %v2085 = vunpack.c.h.b16 %v488
    %v2086 = vunpack.c.l.b16 %v489
    %v2087 = vunpack.c.h.b16 %v489
    %v2088 = vunpack.c.l.b16 %v490
    %v2089 = vunpack.c.h.b16 %v490
    %v2090 = vunpack.c.l.b16 %v491
    %v2091 = vunpack.c.h.b16 %v491
    %v2092 = vunpack.c.l.b16 %v492
    %v2093 = vunpack.c.h.b16 %v492
    %v2094 = vunpack.c.l.b16 %v493
    %v2095 = vunpack.c.h.b16 %v493
    %v2096 = vunpack.c.l.b16 %v494
    %v2097 = vunpack.c.h.b16 %v494
    %v2098 = vunpack.c.l.b16 %v495
    %v2099 = vunpack.c.h.b16 %v495
    %v2100 = vunpack.c.l.b16 %v496
    %v2101 = vunpack.c.h.b16 %v496
    %v2102 = vunpack.c.l.b16 %v497
    %v2103 = vunpack.c.h.b16 %v497
    %v2104 = vunpack.c.l.b16 %v498
    %v2105 = vunpack.c.h.b16 %v498
    %v2106 = vunpack.c.l.b16 %v499
    %v2107 = vunpack.c.h.b16 %v499
    %v2108 = vunpack.c.l.b16 %v500
    %v2109 = vunpack.c.h.b16 %v500
    %v2110 = vunpack.c.l.b16 %v501
    %v2111 = vunpack.c.h.b16 %v501
    %v2112 = vunpack.c.l.b16 %v502
    %v2113 = vunpack.c.h.b16 %v502
    %v2114 = vunpack.c.l.b16 %v503
    %v2115 = vunpack.c.h.b16 %v503
    %v2116 = vunpack.c.l.b16 %v504
    %v2117 = vunpack.c.h.b16 %v504
    %v2118 = vunpack.c.l.b16 %v505
    %v2119 = vunpack.c.h.b16 %v505
    %v2120 = vunpack.c.l.b16 %v506
    %v2121 = vunpack.c.h.b16 %v506
    %v2122 = vunpack.c.l.b16 %v507
    %v2123 = vunpack.c.h.b16 %v507
    %v2124 = vunpack.c.l.b16 %v508
    %v2125 = vunpack.c.h.b16 %v508
    %v2126 = vunpack.c.l.b16 %v509
    %v2127 = vunpack.c.h.b16 %v509
    %v2128 = vunpack.c.l.b16 %v510
    %v2129 = vunpack.c.h.b16 %v510
    %v2130 = vunpack.c.l.b16 %v511
    %v2131 = vunpack.c.h.b16 %v511
    %v2132 = vunpack.c.l.b16 %v512
    %v2133 = vunpack.c.h.b16 %v512
    %v2134 = vunpack.c.l.b16 %v513
    %v2135 = vunpack.c.h.b16 %v513
    %v2136 = vunpack.c.l.b16 %v514
    %v2137 = vunpack.c.h.b16 %v514
    %v2138 = vunpack.c.l.b16 %v515
    %v2139 = vunpack.c.h.b16 %v515
    %v2140 = vunpack.c.l.b16 %v516
    %v2141 = vunpack.c.h.b16 %v516
    %v2142 = vunpack.c.l.b16 %v517
    %v2143 = vunpack.c.h.b16 %v517
    %v2144 = vunpack.c.l.b16 %v518
    %v2145 = vunpack.c.h.b16 %v518
    %v2146 = vunpack.c.l.b16 %v519
    %v2147 = vunpack.c.h.b16 %v519
    %v2148 = vunpack.c.l.b16 %v520
    %v2149 = vunpack.c.h.b16 %v520
    %v2150 = vunpack.c.l.b16 %v521
    %v2151 = vunpack.c.h.b16 %v521
    %v2152 = vunpack.c.l.b16 %v522
    %v2153 = vunpack.c.h.b16 %v522
    %v2154 = vunpack.c.l.b16 %v523
    %v2155 = vunpack.c.h.b16 %v523
    %v2156 = vunpack.c.l.b16 %v524
    %v2157 = vunpack.c.h.b16 %v524
    %v2158 = vunpack.c.l.b16 %v525
    %v2159 = vunpack.c.h.b16 %v525
    %v2160 = vunpack.c.l.b16 %v526
    %v2161 = vunpack.c.h.b16 %v526
    %v2162 = vunpack.c.l.b16 %v527
    %v2163 = vunpack.c.h.b16 %v527
    %v2164 = vunpack.c.l.b16 %v528
    %v2165 = vunpack.c.h.b16 %v528
    %v2166 = vunpack.c.l.b16 %v529
    %v2167 = vunpack.c.h.b16 %v529
    %v2168 = vunpack.c.l.b16 %v530
    %v2169 = vunpack.c.h.b16 %v530
    %v2170 = vunpack.c.l.b16 %v531
    %v2171 = vunpack.c.h.b16 %v531
    %v2172 = vunpack.c.l.b16 %v532
    %v2173 = vunpack.c.h.b16 %v532
    %v2174 = vunpack.c.l.b16 %v533
    %v2175 = vunpack.c.h.b16 %v533
    %v2176 = vunpack.c.l.b16 %v534
    %v2177 = vunpack.c.h.b16 %v534
    %v2178 = vunpack.c.l.b16 %v535
    %v2179 = vunpack.c.h.b16 %v535
    %v2180 = vunpack.c.l.b16 %v536
    %v2181 = vunpack.c.h.b16 %v536
    %v2182 = vunpack.c.l.b16 %v537
    %v2183 = vunpack.c.h.b16 %v537
    %v2184 = vunpack.c.l.b16 %v538
    %v2185 = vunpack.c.h.b16 %v538
    %v2186 = vunpack.c.l.b16 %v539
    %v2187 = vunpack.c.h.b16 %v539
    %v2188 = vunpack.c.l.b16 %v540
    %v2189 = vunpack.c.h.b16 %v540
    %v2190 = vunpack.c.l.b16 %v541
    %v2191 = vunpack.c.h.b16 %v541
    %v2192 = vunpack.c.l.b16 %v542
    %v2193 = vunpack.c.h.b16 %v542
    %v2194 = vunpack.c.l.b16 %v543
    %v2195 = vunpack.c.h.b16 %v543
    %v2196 = vunpack.c.l.b16 %v544
    %v2197 = vunpack.c.h.b16 %v544
    %v2198 = vunpack.c.l.b16 %v545
    %v2199 = vunpack.c.h.b16 %v545
    %v2200 = vunpack.c.l.b16 %v546
    %v2201 = vunpack.c.h.b16 %v546
    %v2202 = vunpack.c.l.b16 %v547
    %v2203 = vunpack.c.h.b16 %v547
    %v2204 = vunpack.c.l.b16 %v548
    %v2205 = vunpack.c.h.b16 %v548
    %v2206 = vunpack.c.l.b16 %v549
    %v2207 = vunpack.c.h.b16 %v549
    %v2208 = vunpack.c.l.b16 %v550
    %v2209 = vunpack.c.h.b16 %v550
    %v2210 = vunpack.c.l.b16 %v551
    %v2211 = vunpack.c.h.b16 %v551
    %v2212 = vunpack.c.l.b16 %v552
    %v2213 = vunpack.c.h.b16 %v552
    %v2214 = vunpack.c.l.b16 %v553
    %v2215 = vunpack.c.h.b16 %v553
    %v2216 = vunpack.c.l.b16 %v554
    %v2217 = vunpack.c.h.b16 %v554
    %v2218 = vunpack.c.l.b16 %v555
    %v2219 = vunpack.c.h.b16 %v555
    %v2220 = vunpack.c.l.b16 %v556
    %v2221 = vunpack.c.h.b16 %v556
    %v2222 = vunpack.c.l.b16 %v557
    %v2223 = vunpack.c.h.b16 %v557
    %v2224 = vunpack.c.l.b16 %v558
    %v2225 = vunpack.c.h.b16 %v558
    %v2226 = vunpack.c.l.b16 %v559
    %v2227 = vunpack.c.h.b16 %v559
    %v2228 = vunpack.c.l.b16 %v560
    %v2229 = vunpack.c.h.b16 %v560
    %v2230 = vunpack.c.l.b16 %v561
    %v2231 = vunpack.c.h.b16 %v561
    %v2232 = vunpack.c.l.b16 %v562
    %v2233 = vunpack.c.h.b16 %v562
    %v2234 = vunpack.c.l.b16 %v563
    %v2235 = vunpack.c.h.b16 %v563
    %v2236 = vunpack.c.l.b16 %v564
    %v2237 = vunpack.c.h.b16 %v564
    %v2238 = vunpack.c.l.b16 %v565
    %v2239 = vunpack.c.h.b16 %v565
    %v2240 = vunpack.c.l.b16 %v566
    %v2241 = vunpack.c.h.b16 %v566
    %v2242 = vunpack.c.l.b16 %v567
    %v2243 = vunpack.c.h.b16 %v567
    %v2244 = vunpack.c.l.b16 %v568
    %v2245 = vunpack.c.h.b16 %v568
    %v2246 = vunpack.c.l.b16 %v569
    %v2247 = vunpack.c.h.b16 %v569
    %v2248 = vunpack.c.l.b16 %v570
    %v2249 = vunpack.c.h.b16 %v570
    %v2250 = vunpack.c.l.b16 %v571
    %v2251 = vunpack.c.h.b16 %v571
    %v2252 = vunpack.c.l.b16 %v572
    %v2253 = vunpack.c.h.b16 %v572
    %v2254 = vunpack.c.l.b16 %v573
    %v2255 = vunpack.c.h.b16 %v573
    %v2256 = vunpack.c.l.b16 %v574
    %v2257 = vunpack.c.h.b16 %v574
    %v2258 = vunpack.c.l.b16 %v575
    %v2259 = vunpack.c.h.b16 %v575
    %v2260 = vunpack.c.l.b16 %v576
    %v2261 = vunpack.c.h.b16 %v576
    %v2262 = vunpack.c.l.b16 %v577
    %v2263 = vunpack.c.h.b16 %v577
    %v2264 = vunpack.c.l.b16 %v578
    %v2265 = vunpack.c.h.b16 %v578
    %v2266 = vunpack.c.l.b16 %v579
    %v2267 = vunpack.c.h.b16 %v579
    %v2268 = vunpack.c.l.b16 %v580
    %v2269 = vunpack.c.h.b16 %v580
    %v2270 = vunpack.c.l.b16 %v581
    %v2271 = vunpack.c.h.b16 %v581
    %v2272 = vunpack.c.l.b16 %v582
    %v2273 = vunpack.c.h.b16 %v582
    %v2274 = vunpack.c.l.b16 %v583
    %v2275 = vunpack.c.h.b16 %v583
    %v2276 = vunpack.c.l.b16 %v584
    %v2277 = vunpack.c.h.b16 %v584
    %v2278 = vunpack.c.l.b16 %v585
    %v2279 = vunpack.c.h.b16 %v585
    %v2280 = vunpack.c.l.b16 %v586
    %v2281 = vunpack.c.h.b16 %v586
    %v2282 = vunpack.c.l.b16 %v587
    %v2283 = vunpack.c.h.b16 %v587
    %v2284 = vunpack.c.l.b16 %v588
    %v2285 = vunpack.c.h.b16 %v588
    %v2286 = vunpack.c.l.b16 %v589
    %v2287 = vunpack.c.h.b16 %v589
    %v2288 = vunpack.c.l.b16 %v590
    %v2289 = vunpack.c.h.b16 %v590
    %v2290 = vunpack.c.l.b16 %v591
    %v2291 = vunpack.c.h.b16 %v591
    %v2292 = vunpack.c.l.b16 %v592
    %v2293 = vunpack.c.h.b16 %v592
    %v2294 = vunpack.c.l.b16 %v593
    %v2295 = vunpack.c.h.b16 %v593
    %v2296 = vunpack.c.l.b16 %v594
    %v2297 = vunpack.c.h.b16 %v594
    %v2298 = vunpack.c.l.b16 %v595
    %v2299 = vunpack.c.h.b16 %v595
    %v2300 = vunpack.c.l.b16 %v596
    %v2301 = vunpack.c.h.b16 %v596
    %v2302 = vunpack.c.l.b16 %v597
    %v2303 = vunpack.c.h.b16 %v597
    %v2304 = vunpack.c.l.b16 %v598
    %v2305 = vunpack.c.h.b16 %v598
    %v2306 = vunpack.c.l.b16 %v599
    %v2307 = vunpack.c.h.b16 %v599
    %v2308 = vunpack.c.l.b16 %v600
    %v2309 = vunpack.c.h.b16 %v600
    %v2310 = vunpack.c.l.b16 %v601
    %v2311 = vunpack.c.h.b16 %v601
    %v2312 = vunpack.c.l.b16 %v602
    %v2313 = vunpack.c.h.b16 %v602
    %v2314 = vunpack.c.l.b16 %v603
    %v2315 = vunpack.c.h.b16 %v603
    %v2316 = vunpack.c.l.b16 %v604
    %v2317 = vunpack.c.h.b16 %v604
    %v2318 = vunpack.c.l.b16 %v605
    %v2319 = vunpack.c.h.b16 %v605
    %v2320 = vunpack.c.l.b16 %v606
    %v2321 = vunpack.c.h.b16 %v606
    %v2322 = vunpack.c.l.b16 %v607
    %v2323 = vunpack.c.h.b16 %v607
    %v2324 = vunpack.c.l.b16 %v608
    %v2325 = vunpack.c.h.b16 %v608
    %v2326 = vunpack.c.l.b16 %v609
    %v2327 = vunpack.c.h.b16 %v609
    %v2328 = vunpack.c.l.b16 %v610
    %v2329 = vunpack.c.h.b16 %v610
    %v2330 = vunpack.c.l.b16 %v611
    %v2331 = vunpack.c.h.b16 %v611
    %v2332 = vunpack.c.l.b16 %v612
    %v2333 = vunpack.c.h.b16 %v612
    %v2334 = vunpack.c.l.b16 %v613
    %v2335 = vunpack.c.h.b16 %v613
    %v2336 = vunpack.c.l.b16 %v614
    %v2337 = vunpack.c.h.b16 %v614
    %v2338 = vunpack.c.l.b16 %v615
    %v2339 = vunpack.c.h.b16 %v615
    %v2340 = vunpack.c.l.b16 %v616
    %v2341 = vunpack.c.h.b16 %v616
    %v2342 = vunpack.c.l.b16 %v617
    %v2343 = vunpack.c.h.b16 %v617
    %v2344 = vunpack.c.l.b16 %v618
    %v2345 = vunpack.c.h.b16 %v618
    %v2346 = vunpack.c.l.b16 %v619
    %v2347 = vunpack.c.h.b16 %v619
    %v2348 = vunpack.c.l.b16 %v620
    %v2349 = vunpack.c.h.b16 %v620
    %v2350 = vunpack.c.l.b16 %v621
    %v2351 = vunpack.c.h.b16 %v621
    %v2352 = vunpack.c.l.b16 %v622
    %v2353 = vunpack.c.h.b16 %v622
    %v2354 = vunpack.c.l.b16 %v623
    %v2355 = vunpack.c.h.b16 %v623
    %v2356 = vunpack.c.l.b16 %v624
    %v2357 = vunpack.c.h.b16 %v624
    %v2358 = vunpack.c.l.b16 %v625
    %v2359 = vunpack.c.h.b16 %v625
    %v2360 = vunpack.c.l.b16 %v626
    %v2361 = vunpack.c.h.b16 %v626
    %v2362 = vunpack.c.l.b16 %v627
    %v2363 = vunpack.c.h.b16 %v627
    %v2364 = vunpack.c.l.b16 %v628
    %v2365 = vunpack.c.h.b16 %v628
    %v2366 = vunpack.c.l.b16 %v629
    %v2367 = vunpack.c.h.b16 %v629
    %v2368 = vunpack.c.l.b16 %v630
    %v2369 = vunpack.c.h.b16 %v630
    %v2370 = vunpack.c.l.b16 %v631
    %v2371 = vunpack.c.h.b16 %v631
    %v2372 = vunpack.c.l.b16 %v632
    %v2373 = vunpack.c.h.b16 %v632
    %v2374 = vunpack.c.l.b16 %v633
    %v2375 = vunpack.c.h.b16 %v633
    %v2376 = vunpack.c.l.b16 %v634
    %v2377 = vunpack.c.h.b16 %v634
    %v2378 = vunpack.c.l.b16 %v635
    %v2379 = vunpack.c.h.b16 %v635
    %v2380 = vunpack.c.l.b16 %v636
    %v2381 = vunpack.c.h.b16 %v636
    %v2382 = vunpack.c.l.b16 %v637
    %v2383 = vunpack.c.h.b16 %v637
    %v2384 = vunpack.c.l.b16 %v638
    %v2385 = vunpack.c.h.b16 %v638
    %v2386 = vunpack.c.l.b16 %v639
    %v2387 = vunpack.c.h.b16 %v639
    %v2388 = vunpack.c.l.b16 %v640
    %v2389 = vunpack.c.h.b16 %v640
    %v2390 = vunpack.c.l.b16 %v641
    %v2391 = vunpack.c.h.b16 %v641
    %v2392 = vunpack.c.l.b16 %v642
    %v2393 = vunpack.c.h.b16 %v642
    %v2394 = vunpack.c.l.b16 %v643
    %v2395 = vunpack.c.h.b16 %v643
    %v2396 = vunpack.c.l.b16 %v644
    %v2397 = vunpack.c.h.b16 %v644
    %v2398 = vunpack.c.l.b16 %v645
    %v2399 = vunpack.c.h.b16 %v645
    %v2400 = vunpack.c.l.b16 %v646
    %v2401 = vunpack.c.h.b16 %v646
    %v2402 = vunpack.c.l.b16 %v647
    %v2403 = vunpack.c.h.b16 %v647
    %v2404 = vunpack.c.l.b16 %v648
    %v2405 = vunpack.c.h.b16 %v648
    %v2406 = vunpack.c.l.b16 %v649
    %v2407 = vunpack.c.h.b16 %v649
    %v2408 = vunpack.c.l.b16 %v650
    %v2409 = vunpack.c.h.b16 %v650
    %v2410 = vunpack.c.l.b16 %v651
    %v2411 = vunpack.c.h.b16 %v651
    %v2412 = vunpack.c.l.b16 %v652
    %v2413 = vunpack.c.h.b16 %v652
    %v2414 = vunpack.c.l.b16 %v653
    %v2415 = vunpack.c.h.b16 %v653
    %v2416 = vunpack.c.l.b16 %v654
    %v2417 = vunpack.c.h.b16 %v654
    %v2418 = vunpack.c.l.b16 %v655
    %v2419 = vunpack.c.h.b16 %v655
    %v2420 = vunpack.c.l.b16 %v656
    %v2421 = vunpack.c.h.b16 %v656
    %v2422 = vunpack.c.l.b16 %v657
    %v2423 = vunpack.c.h.b16 %v657
    %v2424 = vunpack.c.l.b16 %v658
    %v2425 = vunpack.c.h.b16 %v658
    %v2426 = vunpack.c.l.b16 %v659
    %v2427 = vunpack.c.h.b16 %v659
    %v2428 = vunpack.c.l.b16 %v660
    %v2429 = vunpack.c.h.b16 %v660
    %v2430 = vunpack.c.l.b16 %v661
    %v2431 = vunpack.c.h.b16 %v661
    %v2432 = vunpack.c.l.b16 %v662
    %v2433 = vunpack.c.h.b16 %v662
    %v2434 = vunpack.c.l.b16 %v663
    %v2435 = vunpack.c.h.b16 %v663
    %v2436 = vunpack.c.l.b16 %v664
    %v2437 = vunpack.c.h.b16 %v664
    %v2438 = vunpack.c.l.b16 %v665
    %v2439 = vunpack.c.h.b16 %v665
    %v2440 = vunpack.c.l.b16 %v666
    %v2441 = vunpack.c.h.b16 %v666
    %v2442 = vunpack.c.l.b16 %v667
    %v2443 = vunpack.c.h.b16 %v667
    %v2444 = vunpack.c.l.b16 %v668
    %v2445 = vunpack.c.h.b16 %v668
    %v2446 = vunpack.c.l.b16 %v669
    %v2447 = vunpack.c.h.b16 %v669
    %v2448 = vunpack.c.l.b16 %v670
    %v2449 = vunpack.c.h.b16 %v670
    %v2450 = vunpack.c.l.b16 %v671
    %v2451 = vunpack.c.h.b16 %v671
    %v2452 = vunpack.c.l.b16 %v672
    %v2453 = vunpack.c.h.b16 %v672
    %v2454 = vunpack.c.l.b16 %v673
    %v2455 = vunpack.c.h.b16 %v673
    %v2456 = vunpack.c.l.b16 %v674
    %v2457 = vunpack.c.h.b16 %v674
    %v2458 = vunpack.c.l.b16 %v675
    %v2459 = vunpack.c.h.b16 %v675
    %v2460 = vunpack.c.l.b16 %v676
    %v2461 = vunpack.c.h.b16 %v676
    %v2462 = vunpack.c.l.b16 %v677
    %v2463 = vunpack.c.h.b16 %v677
    %v2464 = vunpack.c.l.b16 %v678
    %v2465 = vunpack.c.h.b16 %v678
    %v2466 = vunpack.c.l.b16 %v679
    %v2467 = vunpack.c.h.b16 %v679
    %v2468 = vunpack.c.l.b16 %v680
    %v2469 = vunpack.c.h.b16 %v680
    %v2470 = vunpack.c.l.b16 %v681
    %v2471 = vunpack.c.h.b16 %v681
    %v2472 = vunpack.c.l.b16 %v682
    %v2473 = vunpack.c.h.b16 %v682
    %v2474 = vunpack.c.l.b16 %v683
    %v2475 = vunpack.c.h.b16 %v683
    %v2476 = vunpack.c.l.b16 %v684
    %v2477 = vunpack.c.h.b16 %v684
    %v2478 = vunpack.c.l.b16 %v685
    %v2479 = vunpack.c.h.b16 %v685
    %v2480 = vunpack.c.l.b16 %v686
    %v2481 = vunpack.c.h.b16 %v686
    %v2482 = vunpack.c.l.b16 %v687
    %v2483 = vunpack.c.h.b16 %v687
    %v2484 = vunpack.c.l.b16 %v688
    %v2485 = vunpack.c.h.b16 %v688
    %v2486 = vunpack.c.l.b16 %v689
    %v2487 = vunpack.c.h.b16 %v689
    %v2488 = vunpack.c.l.b16 %v690
    %v2489 = vunpack.c.h.b16 %v690
    %v2490 = vunpack.c.l.b16 %v691
    %v2491 = vunpack.c.h.b16 %v691
    %v2492 = vunpack.c.l.b16 %v692
    %v2493 = vunpack.c.h.b16 %v692
    %v2494 = vunpack.c.l.b16 %v693
    %v2495 = vunpack.c.h.b16 %v693
    %v2496 = vunpack.c.l.b16 %v694
    %v2497 = vunpack.c.h.b16 %v694
    %v2498 = vunpack.c.l.b16 %v695
    %v2499 = vunpack.c.h.b16 %v695
    %v2500 = vunpack.c.l.b16 %v696
    %v2501 = vunpack.c.h.b16 %v696
    %v2502 = vunpack.c.l.b16 %v697
    %v2503 = vunpack.c.h.b16 %v697
    %v2504 = vunpack.c.l.b16 %v698
    %v2505 = vunpack.c.h.b16 %v698
    %v2506 = vunpack.c.l.b16 %v699
    %v2507 = vunpack.c.h.b16 %v699
    %v2508 = vunpack.c.l.b16 %v700
    %v2509 = vunpack.c.h.b16 %v700
    %v2510 = vunpack.c.l.b16 %v701
    %v2511 = vunpack.c.h.b16 %v701
    %v2512 = vunpack.c.l.b16 %v702
    %v2513 = vunpack.c.h.b16 %v702
    %v2514 = vunpack.c.l.b16 %v703
    %v2515 = vunpack.c.h.b16 %v703
    %v2516 = vunpack.c.l.b16 %v704
    %v2517 = vunpack.c.h.b16 %v704
    %v2518 = vunpack.c.l.b16 %v705
    %v2519 = vunpack.c.h.b16 %v705
    %v2520 = vunpack.c.l.b16 %v706
    %v2521 = vunpack.c.h.b16 %v706
    %v2522 = vunpack.c.l.b16 %v707
    %v2523 = vunpack.c.h.b16 %v707
    %v2524 = vunpack.c.l.b16 %v708
    %v2525 = vunpack.c.h.b16 %v708
    %v2526 = vunpack.c.l.b16 %v709
    %v2527 = vunpack.c.h.b16 %v709
    %v2528 = vunpack.c.l.b16 %v710
    %v2529 = vunpack.c.h.b16 %v710
    %v2530 = vunpack.c.l.b16 %v711
    %v2531 = vunpack.c.h.b16 %v711
    %v2532 = vunpack.c.l.b16 %v712
    %v2533 = vunpack.c.h.b16 %v712
    %v2534 = vunpack.c.l.b16 %v713
    %v2535 = vunpack.c.h.b16 %v713
    %v2536 = vunpack.c.l.b16 %v714
    %v2537 = vunpack.c.h.b16 %v714
    %v2538 = vunpack.c.l.b16 %v715
    %v2539 = vunpack.c.h.b16 %v715
    %v2540 = vunpack.c.l.b16 %v716
    %v2541 = vunpack.c.h.b16 %v716
    %v2542 = vunpack.c.l.b16 %v717
    %v2543 = vunpack.c.h.b16 %v717
    %v2544 = vunpack.c.l.b16 %v718
    %v2545 = vunpack.c.h.b16 %v718
    %v2546 = vunpack.c.l.b16 %v719
    %v2547 = vunpack.c.h.b16 %v719
    %v2548 = vunpack.c.l.b16 %v720
    %v2549 = vunpack.c.h.b16 %v720
    %v2550 = vunpack.c.l.b16 %v721
    %v2551 = vunpack.c.h.b16 %v721
    %v2552 = vunpack.c.l.b16 %v722
    %v2553 = vunpack.c.h.b16 %v722
    %v2554 = vunpack.c.l.b16 %v723
    %v2555 = vunpack.c.h.b16 %v723
    %v2556 = vunpack.c.l.b16 %v724
    %v2557 = vunpack.c.h.b16 %v724
    %v2558 = vunpack.c.l.b16 %v725
    %v2559 = vunpack.c.h.b16 %v725
    %v2560 = vunpack.c.l.b16 %v726
    %v2561 = vunpack.c.h.b16 %v726
    %v2562 = vunpack.c.l.b16 %v727
    %v2563 = vunpack.c.h.b16 %v727
    %v2564 = vunpack.c.l.b16 %v728
    %v2565 = vunpack.c.h.b16 %v728
    %v2566 = vunpack.c.l.b16 %v729
    %v2567 = vunpack.c.h.b16 %v729
    %v2568 = vunpack.c.l.b16 %v730
    %v2569 = vunpack.c.h.b16 %v730
    %v2570 = vunpack.c.l.b16 %v731
    %v2571 = vunpack.c.h.b16 %v731
    %v2572 = vpack.c.b16 %v1424, %v1420
    %v2573 = vpack.c.b16 %v1425, %v1421
    %v2574 = vpack.c.b16 %v1426, %v1422
    %v2575 = vpack.c.b16 %v1427, %v1423
    %v2576 = vpack.c.b16 %v1432, %v1428
    %v2577 = vpack.c.b16 %v1433, %v1429
    %v2578 = vpack.c.b16 %v1434, %v1430
    %v2579 = vpack.c.b16 %v1435, %v1431
    %v2580 = vpack.c.b16 %v1440, %v1436
    %v2581 = vpack.c.b16 %v1441, %v1437
    %v2582 = vpack.c.b16 %v1442, %v1438
    %v2583 = vpack.c.b16 %v1443, %v1439
    %v2584 = vpack.c.b16 %v1448, %v1444
    %v2585 = vpack.c.b16 %v1449, %v1445
    %v2586 = vpack.c.b16 %v1450, %v1446
    %v2587 = vpack.c.b16 %v1451, %v1447
    %v2588 = vpack.c.b16 %v1456, %v1452
    %v2589 = vpack.c.b16 %v1457, %v1453
    %v2590 = vpack.c.b16 %v1458, %v1454
    %v2591 = vpack.c.b16 %v1459, %v1455
    %v2592 = vpack.c.b16 %v1464, %v1460
    %v2593 = vpack.c.b16 %v1465, %v1461
    %v2594 = vpack.c.b16 %v1466, %v1462
    %v2595 = vpack.c.b16 %v1467, %v1463
    %v2596 = vpack.c.b16 %v1472, %v1468
    %v2597 = vpack.c.b16 %v1473, %v1469
    %v2598 = vpack.c.b16 %v1474, %v1470
    %v2599 = vpack.c.b16 %v1475, %v1471
    %v2600 = vpack.c.b16 %v1480, %v1476
    %v2601 = vpack.c.b16 %v1481, %v1477
    %v2602 = vpack.c.b16 %v1482, %v1478
    %v2603 = vpack.c.b16 %v1483, %v1479
    %v2604 = vpack.c.b16 %v1488, %v1484
    %v2605 = vpack.c.b16 %v1489, %v1485
    %v2606 = vpack.c.b16 %v1490, %v1486
    %v2607 = vpack.c.b16 %v1491, %v1487
    %v2608 = vpack.c.b16 %v1496, %v1492
    %v2609 = vpack.c.b16 %v1497, %v1493
    %v2610 = vpack.c.b16 %v1498, %v1494
    %v2611 = vpack.c.b16 %v1499, %v1495
    %v2612 = vpack.c.b16 %v1504, %v1500
    %v2613 = vpack.c.b16 %v1505, %v1501
    %v2614 = vpack.c.b16 %v1506, %v1502
    %v2615 = vpack.c.b16 %v1507, %v1503
    %v2616 = vpack.c.b16 %v1512, %v1508
    %v2617 = vpack.c.b16 %v1513, %v1509
    %v2618 = vpack.c.b16 %v1514, %v1510
    %v2619 = vpack.c.b16 %v1515, %v1511
    %v2620 = vpack.c.b16 %v1520, %v1516
    %v2621 = vpack.c.b16 %v1521, %v1517
    %v2622 = vpack.c.b16 %v1522, %v1518
    %v2623 = vpack.c.b16 %v1523, %v1519
    %v2624 = vpack.c.b16 %v1528, %v1524
    %v2625 = vpack.c.b16 %v1529, %v1525
    %v2626 = vpack.c.b16 %v1530, %v1526
    %v2627 = vpack.c.b16 %v1531, %v1527
    %v2628 = vpack.c.b16 %v1536, %v1532
    %v2629 = vpack.c.b16 %v1537, %v1533
    %v2630 = vpack.c.b16 %v1538, %v1534
    %v2631 = vpack.c.b16 %v1539, %v1535
    %v2632 = vpack.c.b16 %v1544, %v1540
    %v2633 = vpack.c.b16 %v1545, %v1541
    %v2634 = vpack.c.b16 %v1546, %v1542
    %v2635 = vpack.c.b16 %v1547, %v1543
    %v2636 = vpack.c.b16 %v1552, %v1548
    %v2637 = vpack.c.b16 %v1553, %v1549
    %v2638 = vpack.c.b16 %v1554, %v1550
    %v2639 = vpack.c.b16 %v1555, %v1551
    %v2640 = vpack.c.b16 %v1560, %v1556
    %v2641 = vpack.c.b16 %v1561, %v1557
    %v2642 = vpack.c.b16 %v1562, %v1558
    %v2643 = vpack.c.b16 %v1563, %v1559
    %v2644 = vpack.c.b16 %v1568, %v1564
    %v2645 = vpack.c.b16 %v1569, %v1565
    %v2646 = vpack.c.b16 %v1570, %v1566
    %v2647 = vpack.c.b16 %v1571, %v1567
    %v2648 = vpack.c.b16 %v1576, %v1572
    %v2649 = vpack.c.b16 %v1577, %v1573
    %v2650 = vpack.c.b16 %v1578, %v1574
    %v2651 = vpack.c.b16 %v1579, %v1575
    %v2652 = vpack.c.b16 %v1584, %v1580
    %v2653 = vpack.c.b16 %v1585, %v1581
    %v2654 = vpack.c.b16 %v1586, %v1582
    %v2655 = vpack.c.b16 %v1587, %v1583
    %v2656 = vpack.c.b16 %v1592, %v1588
    %v2657 = vpack.c.b16 %v1593, %v1589
    %v2658 = vpack.c.b16 %v1594, %v1590
    %v2659 = vpack.c.b16 %v1595, %v1591
    %v2660 = vpack.c.b16 %v1600, %v1596
    %v2661 = vpack.c.b16 %v1601, %v1597
    %v2662 = vpack.c.b16 %v1602, %v1598
    %v2663 = vpack.c.b16 %v1603, %v1599
    %v2664 = vpack.c.b16 %v1608, %v1604
    %v2665 = vpack.c.b16 %v1609, %v1605
    %v2666 = vpack.c.b16 %v1610, %v1606
    %v2667 = vpack.c.b16 %v1611, %v1607
    %v2668 = vpack.c.b16 %v1616, %v1612
    %v2669 = vpack.c.b16 %v1617, %v1613
    %v2670 = vpack.c.b16 %v1618, %v1614
    %v2671 = vpack.c.b16 %v1619, %v1615
    %v2672 = vpack.c.b16 %v1624, %v1620
    %v2673 = vpack.c.b16 %v1625, %v1621
    %v2674 = vpack.c.b16 %v1626, %v1622
    %v2675 = vpack.c.b16 %v1627, %v1623
    %v2676 = vpack.c.b16 %v1632, %v1628
    %v2677 = vpack.c.b16 %v1633, %v1629
    %v2678 = vpack.c.b16 %v1634, %v1630
    %v2679 = vpack.c.b16 %v1635, %v1631
    %v2680 = vpack.c.b16 %v1640, %v1636
    %v2681 = vpack.c.b16 %v1641, %v1637
    %v2682 = vpack.c.b16 %v1642, %v1638
    %v2683 = vpack.c.b16 %v1643, %v1639
    %v2684 = vpack.c.b16 %v1648, %v1644
    %v2685 = vpack.c.b16 %v1649, %v1645
    %v2686 = vpack.c.b16 %v1650, %v1646
    %v2687 = vpack.c.b16 %v1651, %v1647
    %v2688 = vpack.c.b16 %v1656, %v1652
    %v2689 = vpack.c.b16 %v1657, %v1653
    %v2690 = vpack.c.b16 %v1658, %v1654
    %v2691 = vpack.c.b16 %v1659, %v1655
    %v2692 = vpack.c.b16 %v1664, %v1660
    %v2693 = vpack.c.b16 %v1665, %v1661
    %v2694 = vpack.c.b16 %v1666, %v1662
    %v2695 = vpack.c.b16 %v1667, %v1663
    %v2696 = vpack.c.b16 %v1672, %v1668
    %v2697 = vpack.c.b16 %v1673, %v1669
    %v2698 = vpack.c.b16 %v1674, %v1670
    %v2699 = vpack.c.b16 %v1675, %v1671
    %v2700 = vpack.c.b16 %v1680, %v1676
    %v2701 = vpack.c.b16 %v1681, %v1677
    %v2702 = vpack.c.b16 %v1682, %v1678
    %v2703 = vpack.c.b16 %v1683, %v1679
    %v2704 = vpack.c.b16 %v1688, %v1684
    %v2705 = vpack.c.b16 %v1689, %v1685
    %v2706 = vpack.c.b16 %v1690, %v1686
    %v2707 = vpack.c.b16 %v1691, %v1687
    %v2708 = vpack.c.b16 %v1696, %v1692
    %v2709 = vpack.c.b16 %v1697, %v1693
    %v2710 = vpack.c.b16 %v1698, %v1694
    %v2711 = vpack.c.b16 %v1699, %v1695
    %v2712 = vpack.c.b16 %v1704, %v1700
    %v2713 = vpack.c.b16 %v1705, %v1701
    %v2714 = vpack.c.b16 %v1706, %v1702
    %v2715 = vpack.c.b16 %v1707, %v1703
    %v2716 = vpack.c.b16 %v1712, %v1708
    %v2717 = vpack.c.b16 %v1713, %v1709
    %v2718 = vpack.c.b16 %v1714, %v1710
    %v2719 = vpack.c.b16 %v1715, %v1711
    %v2720 = vpack.c.b16 %v1720, %v1716
    %v2721 = vpack.c.b16 %v1721, %v1717
    %v2722 = vpack.c.b16 %v1722, %v1718
    %v2723 = vpack.c.b16 %v1723, %v1719
    %v2724 = vpack.c.b16 %v1728, %v1724
    %v2725 = vpack.c.b16 %v1729, %v1725
    %v2726 = vpack.c.b16 %v1730, %v1726
    %v2727 = vpack.c.b16 %v1731, %v1727
    %v2728 = vpack.c.b16 %v1736, %v1732
    %v2729 = vpack.c.b16 %v1737, %v1733
    %v2730 = vpack.c.b16 %v1738, %v1734
    %v2731 = vpack.c.b16 %v1739, %v1735
    %v2732 = vpack.c.b16 %v1744, %v1740
    %v2733 = vpack.c.b16 %v1745, %v1741
    %v2734 = vpack.c.b16 %v1746, %v1742
    %v2735 = vpack.c.b16 %v1747, %v1743
    %v2736 = vpack.c.b16 %v1752, %v1748
    %v2737 = vpack.c.b16 %v1753, %v1749
    %v2738 = vpack.c.b16 %v1754, %v1750
    %v2739 = vpack.c.b16 %v1755, %v1751
    %v2740 = vpack.c.b16 %v1760, %v1756
    %v2741 = vpack.c.b16 %v1761, %v1757
    %v2742 = vpack.c.b16 %v1762, %v1758
    %v2743 = vpack.c.b16 %v1763, %v1759
    %v2744 = vpack.c.b16 %v1768, %v1764
    %v2745 = vpack.c.b16 %v1769, %v1765
    %v2746 = vpack.c.b16 %v1770, %v1766
    %v2747 = vpack.c.b16 %v1771, %v1767
    %v2748 = vpack.c.b16 %v1776, %v1772
    %v2749 = vpack.c.b16 %v1777, %v1773
    %v2750 = vpack.c.b16 %v1778, %v1774
    %v2751 = vpack.c.b16 %v1779, %v1775
    %v2752 = vpack.c.b16 %v1784, %v1780
    %v2753 = vpack.c.b16 %v1785, %v1781
    %v2754 = vpack.c.b16 %v1786, %v1782
    %v2755 = vpack.c.b16 %v1787, %v1783
    %v2756 = vpack.c.b16 %v1792, %v1788
    %v2757 = vpack.c.b16 %v1793, %v1789
    %v2758 = vpack.c.b16 %v1794, %v1790
    %v2759 = vpack.c.b16 %v1795, %v1791
    %v2760 = vpack.c.b16 %v1800, %v1796
    %v2761 = vpack.c.b16 %v1801, %v1797
    %v2762 = vpack.c.b16 %v1802, %v1798
    %v2763 = vpack.c.b16 %v1803, %v1799
    %v2764 = vpack.c.b16 %v1808, %v1804
    %v2765 = vpack.c.b16 %v1809, %v1805
    %v2766 = vpack.c.b16 %v1810, %v1806
    %v2767 = vpack.c.b16 %v1811, %v1807
    %v2768 = vpack.c.b16 %v1816, %v1812
    %v2769 = vpack.c.b16 %v1817, %v1813
    %v2770 = vpack.c.b16 %v1818, %v1814
    %v2771 = vpack.c.b16 %v1819, %v1815
    %v2772 = vpack.c.b16 %v1824, %v1820
    %v2773 = vpack.c.b16 %v1825, %v1821
    %v2774 = vpack.c.b16 %v1826, %v1822
    %v2775 = vpack.c.b16 %v1827, %v1823
    %v2776 = vpack.c.b16 %v1832, %v1828
    %v2777 = vpack.c.b16 %v1833, %v1829
    %v2778 = vpack.c.b16 %v1834, %v1830
    %v2779 = vpack.c.b16 %v1835, %v1831
    %v2780 = vpack.c.b16 %v1840, %v1836
    %v2781 = vpack.c.b16 %v1841, %v1837
    %v2782 = vpack.c.b16 %v1842, %v1838
    %v2783 = vpack.c.b16 %v1843, %v1839
    %v2784 = vpack.c.b16 %v1848, %v1844
    %v2785 = vpack.c.b16 %v1849, %v1845
    %v2786 = vpack.c.b16 %v1850, %v1846
    %v2787 = vpack.c.b16 %v1851, %v1847
    %v2788 = vpack.c.b16 %v1856, %v1852
    %v2789 = vpack.c.b16 %v1857, %v1853
    %v2790 = vpack.c.b16 %v1858, %v1854
    %v2791 = vpack.c.b16 %v1859, %v1855
    %v2792 = vpack.c.b16 %v1864, %v1860
    %v2793 = vpack.c.b16 %v1865, %v1861
    %v2794 = vpack.c.b16 %v1866, %v1862
    %v2795 = vpack.c.b16 %v1867, %v1863
    %v2796 = vpack.c.b16 %v1872, %v1868
    %v2797 = vpack.c.b16 %v1873, %v1869
    %v2798 = vpack.c.b16 %v1874, %v1870
    %v2799 = vpack.c.b16 %v1875, %v1871
    %v2800 = vpack.c.b16 %v1880, %v1876
    %v2801 = vpack.c.b16 %v1881, %v1877
    %v2802 = vpack.c.b16 %v1882, %v1878
    %v2803 = vpack.c.b16 %v1883, %v1879
    %v2804 = vpack.c.b16 %v1888, %v1884
    %v2805 = vpack.c.b16 %v1889, %v1885
    %v2806 = vpack.c.b16 %v1890, %v1886
    %v2807 = vpack.c.b16 %v1891, %v1887
    %v2808 = vpack.c.b16 %v1896, %v1892
    %v2809 = vpack.c.b16 %v1897, %v1893
    %v2810 = vpack.c.b16 %v1898, %v1894
    %v2811 = vpack.c.b16 %v1899, %v1895
    %v2812 = vpack.c.b16 %v1904, %v1900
    %v2813 = vpack.c.b16 %v1905, %v1901
    %v2814 = vpack.c.b16 %v1906, %v1902
    %v2815 = vpack.c.b16 %v1907, %v1903
    %v2816 = vpack.c.b16 %v1912, %v1908
    %v2817 = vpack.c.b16 %v1913, %v1909
    %v2818 = vpack.c.b16 %v1914, %v1910
    %v2819 = vpack.c.b16 %v1915, %v1911
    %v2820 = vpack.c.b16 %v1920, %v1916
    %v2821 = vpack.c.b16 %v1921, %v1917
    %v2822 = vpack.c.b16 %v1922, %v1918
    %v2823 = vpack.c.b16 %v1923, %v1919
    %v2824 = vpack.c.b16 %v1928, %v1924
    %v2825 = vpack.c.b16 %v1929, %v1925
    %v2826 = vpack.c.b16 %v1930, %v1926
    %v2827 = vpack.c.b16 %v1931, %v1927
    %v2828 = vpack.c.b16 %v1936, %v1932
    %v2829 = vpack.c.b16 %v1937, %v1933
    %v2830 = vpack.c.b16 %v1938, %v1934
    %v2831 = vpack.c.b16 %v1939, %v1935
    %v2832 = vpack.c.b16 %v1944, %v1940
    %v2833 = vpack.c.b16 %v1945, %v1941
    %v2834 = vpack.c.b16 %v1946, %v1942
    %v2835 = vpack.c.b16 %v1947, %v1943
    %v2836 = vpack.c.b16 %v1952, %v1948
    %v2837 = vpack.c.b16 %v1953, %v1949
    %v2838 = vpack.c.b16 %v1954, %v1950
    %v2839 = vpack.c.b16 %v1955, %v1951
    %v2840 = vpack.c.b16 %v1960, %v1956
    %v2841 = vpack.c.b16 %v1961, %v1957
    %v2842 = vpack.c.b16 %v1962, %v1958
    %v2843 = vpack.c.b16 %v1963, %v1959
    %v2844 = vpack.c.b16 %v1968, %v1964
    %v2845 = vpack.c.b16 %v1969, %v1965
    %v2846 = vpack.c.b16 %v1970, %v1966
    %v2847 = vpack.c.b16 %v1971, %v1967
    %v2848 = vpack.c.b16 %v1976, %v1972
    %v2849 = vpack.c.b16 %v1977, %v1973
    %v2850 = vpack.c.b16 %v1978, %v1974
    %v2851 = vpack.c.b16 %v1979, %v1975
    %v2852 = vpack.c.b16 %v1984, %v1980
    %v2853 = vpack.c.b16 %v1985, %v1981
    %v2854 = vpack.c.b16 %v1986, %v1982
    %v2855 = vpack.c.b16 %v1987, %v1983
    %v2856 = vpack.c.b16 %v1992, %v1988
    %v2857 = vpack.c.b16 %v1993, %v1989
    %v2858 = vpack.c.b16 %v1994, %v1990
    %v2859 = vpack.c.b16 %v1995, %v1991
    %v2860 = vpack.c.b16 %v2000, %v1996
    %v2861 = vpack.c.b16 %v2001, %v1997
    %v2862 = vpack.c.b16 %v2002, %v1998
    %v2863 = vpack.c.b16 %v2003, %v1999
    %v2864 = vpack.c.b16 %v2008, %v2004
    %v2865 = vpack.c.b16 %v2009, %v2005
    %v2866 = vpack.c.b16 %v2010, %v2006
    %v2867 = vpack.c.b16 %v2011, %v2007
    %v2868 = vpack.c.b16 %v2016, %v2012
    %v2869 = vpack.c.b16 %v2017, %v2013
    %v2870 = vpack.c.b16 %v2018, %v2014
    %v2871 = vpack.c.b16 %v2019, %v2015
    %v2872 = vpack.c.b16 %v2024, %v2020
    %v2873 = vpack.c.b16 %v2025, %v2021
    %v2874 = vpack.c.b16 %v2026, %v2022
    %v2875 = vpack.c.b16 %v2027, %v2023
    %v2876 = vpack.c.b16 %v2032, %v2028
    %v2877 = vpack.c.b16 %v2033, %v2029
    %v2878 = vpack.c.b16 %v2034, %v2030
    %v2879 = vpack.c.b16 %v2035, %v2031
    %v2880 = vpack.c.b16 %v2040, %v2036
    %v2881 = vpack.c.b16 %v2041, %v2037
    %v2882 = vpack.c.b16 %v2042, %v2038
    %v2883 = vpack.c.b16 %v2043, %v2039
    %v2884 = vpack.c.b16 %v2048, %v2044
    %v2885 = vpack.c.b16 %v2049, %v2045
    %v2886 = vpack.c.b16 %v2050, %v2046
    %v2887 = vpack.c.b16 %v2051, %v2047
    %v2888 = vpack.c.b16 %v2056, %v2052
    %v2889 = vpack.c.b16 %v2057, %v2053
    %v2890 = vpack.c.b16 %v2058, %v2054
    %v2891 = vpack.c.b16 %v2059, %v2055
    %v2892 = vpack.c.b16 %v2064, %v2060
    %v2893 = vpack.c.b16 %v2065, %v2061
    %v2894 = vpack.c.b16 %v2066, %v2062
    %v2895 = vpack.c.b16 %v2067, %v2063
    %v2896 = vpack.c.b16 %v2072, %v2068
    %v2897 = vpack.c.b16 %v2073, %v2069
    %v2898 = vpack.c.b16 %v2074, %v2070
    %v2899 = vpack.c.b16 %v2075, %v2071
    %v2900 = vpack.c.b16 %v2080, %v2076
    %v2901 = vpack.c.b16 %v2081, %v2077
    %v2902 = vpack.c.b16 %v2082, %v2078
    %v2903 = vpack.c.b16 %v2083, %v2079
    %v2904 = vpack.c.b16 %v2088, %v2084
    %v2905 = vpack.c.b16 %v2089, %v2085
    %v2906 = vpack.c.b16 %v2090, %v2086
    %v2907 = vpack.c.b16 %v2091, %v2087
    %v2908 = vpack.c.b16 %v2096, %v2092
    %v2909 = vpack.c.b16 %v2097, %v2093
    %v2910 = vpack.c.b16 %v2098, %v2094
    %v2911 = vpack.c.b16 %v2099, %v2095
    %v2912 = vpack.c.b16 %v2104, %v2100
    %v2913 = vpack.c.b16 %v2105, %v2101
    %v2914 = vpack.c.b16 %v2106, %v2102
    %v2915 = vpack.c.b16 %v2107, %v2103
    %v2916 = vpack.c.b16 %v2112, %v2108
    %v2917 = vpack.c.b16 %v2113, %v2109
    %v2918 = vpack.c.b16 %v2114, %v2110
    %v2919 = vpack.c.b16 %v2115, %v2111
    %v2920 = vpack.c.b16 %v2120, %v2116
    %v2921 = vpack.c.b16 %v2121, %v2117
    %v2922 = vpack.c.b16 %v2122, %v2118
    %v2923 = vpack.c.b16 %v2123, %v2119
    %v2924 = vpack.c.b16 %v2128, %v2124
    %v2925 = vpack.c.b16 %v2129, %v2125
    %v2926 = vpack.c.b16 %v2130, %v2126
    %v2927 = vpack.c.b16 %v2131, %v2127
    %v2928 = vpack.c.b16 %v2136, %v2132
    %v2929 = vpack.c.b16 %v2137, %v2133
    %v2930 = vpack.c.b16 %v2138, %v2134
    %v2931 = vpack.c.b16 %v2139, %v2135
    %v2932 = vpack.c.b16 %v2144, %v2140
    %v2933 = vpack.c.b16 %v2145, %v2141
    %v2934 = vpack.c.b16 %v2146, %v2142
    %v2935 = vpack.c.b16 %v2147, %v2143
    %v2936 = vpack.c.b16 %v2152, %v2148
    %v2937 = vpack.c.b16 %v2153, %v2149
    %v2938 = vpack.c.b16 %v2154, %v2150
    %v2939 = vpack.c.b16 %v2155, %v2151
    %v2940 = vpack.c.b16 %v2160, %v2156
    %v2941 = vpack.c.b16 %v2161, %v2157
    %v2942 = vpack.c.b16 %v2162, %v2158
    %v2943 = vpack.c.b16 %v2163, %v2159
    %v2944 = vpack.c.b16 %v2168, %v2164
    %v2945 = vpack.c.b16 %v2169, %v2165
    %v2946 = vpack.c.b16 %v2170, %v2166
    %v2947 = vpack.c.b16 %v2171, %v2167
    %v2948 = vpack.c.b16 %v2176, %v2172
    %v2949 = vpack.c.b16 %v2177, %v2173
    %v2950 = vpack.c.b16 %v2178, %v2174
    %v2951 = vpack.c.b16 %v2179, %v2175
    %v2952 = vpack.c.b16 %v2184, %v2180
    %v2953 = vpack.c.b16 %v2185, %v2181
    %v2954 = vpack.c.b16 %v2186, %v2182
    %v2955 = vpack.c.b16 %v2187, %v2183
    %v2956 = vpack.c.b16 %v2192, %v2188
    %v2957 = vpack.c.b16 %v2193, %v2189
    %v2958 = vpack.c.b16 %v2194, %v2190
    %v2959 = vpack.c.b16 %v2195, %v2191
    %v2960 = vpack.c.b16 %v2200, %v2196
    %v2961 = vpack.c.b16 %v2201, %v2197
    %v2962 = vpack.c.b16 %v2202, %v2198
    %v2963 = vpack.c.b16 %v2203, %v2199
    %v2964 = vpack.c.b16 %v2208, %v2204
    %v2965 = vpack.c.b16 %v2209, %v2205
    %v2966 = vpack.c.b16 %v2210, %v2206
    %v2967 = vpack.c.b16 %v2211, %v2207
    %v2968 = vpack.c.b16 %v2216, %v2212
    %v2969 = vpack.c.b16 %v2217, %v2213
    %v2970 = vpack.c.b16 %v2218, %v2214
    %v2971 = vpack.c.b16 %v2219, %v2215
    %v2972 = vpack.c.b16 %v2224, %v2220
    %v2973 = vpack.c.b16 %v2225, %v2221
    %v2974 = vpack.c.b16 %v2226, %v2222
    %v2975 = vpack.c.b16 %v2227, %v2223
    %v2976 = vpack.c.b16 %v2232, %v2228
    %v2977 = vpack.c.b16 %v2233, %v2229
    %v2978 = vpack.c.b16 %v2234, %v2230
    %v2979 = vpack.c.b16 %v2235, %v2231
    %v2980 = vpack.c.b16 %v2240, %v2236
    %v2981 = vpack.c.b16 %v2241, %v2237
    %v2982 = vpack.c.b16 %v2242, %v2238
    %v2983 = vpack.c.b16 %v2243, %v2239
    %v2984 = vpack.c.b16 %v2248, %v2244
    %v2985 = vpack.c.b16 %v2249, %v2245
    %v2986 = vpack.c.b16 %v2250, %v2246
    %v2987 = vpack.c.b16 %v2251, %v2247
    %v2988 = vpack.c.b16 %v2256, %v2252
    %v2989 = vpack.c.b16 %v2257, %v2253
    %v2990 = vpack.c.b16 %v2258, %v2254
    %v2991 = vpack.c.b16 %v2259, %v2255
    %v2992 = vpack.c.b16 %v2264, %v2260
    %v2993 = vpack.c.b16 %v2265, %v2261
    %v2994 = vpack.c.b16 %v2266, %v2262
    %v2995 = vpack.c.b16 %v2267, %v2263
    %v2996 = vpack.c.b16 %v2272, %v2268
    %v2997 = vpack.c.b16 %v2273, %v2269
    %v2998 = vpack.c.b16 %v2274, %v2270
    %v2999 = vpack.c.b16 %v2275, %v2271
    %v3000 = vpack.c.b16 %v2280, %v2276
    %v3001 = vpack.c.b16 %v2281, %v2277
    %v3002 = vpack.c.b16 %v2282, %v2278
    %v3003 = vpack.c.b16 %v2283, %v2279
    %v3004 = vpack.c.b16 %v2288, %v2284
    %v3005 = vpack.c.b16 %v2289, %v2285
    %v3006 = vpack.c.b16 %v2290, %v2286
    %v3007 = vpack.c.b16 %v2291, %v2287
    %v3008 = vpack.c.b16 %v2296, %v2292
    %v3009 = vpack.c.b16 %v2297, %v2293
    %v3010 = vpack.c.b16 %v2298, %v2294
    %v3011 = vpack.c.b16 %v2299, %v2295
    %v3012 = vpack.c.b16 %v2304, %v2300
    %v3013 = vpack.c.b16 %v2305, %v2301
    %v3014 = vpack.c.b16 %v2306, %v2302
    %v3015 = vpack.c.b16 %v2307, %v2303
    %v3016 = vpack.c.b16 %v2312, %v2308
    %v3017 = vpack.c.b16 %v2313, %v2309
    %v3018 = vpack.c.b16 %v2314, %v2310
    %v3019 = vpack.c.b16 %v2315, %v2311
    %v3020 = vpack.c.b16 %v2320, %v2316
    %v3021 = vpack.c.b16 %v2321, %v2317
    %v3022 = vpack.c.b16 %v2322, %v2318
    %v3023 = vpack.c.b16 %v2323, %v2319
    %v3024 = vpack.c.b16 %v2328, %v2324
    %v3025 = vpack.c.b16 %v2329, %v2325
    %v3026 = vpack.c.b16 %v2330, %v2326
    %v3027 = vpack.c.b16 %v2331, %v2327
    %v3028 = vpack.c.b16 %v2336, %v2332
    %v3029 = vpack.c.b16 %v2337, %v2333
    %v3030 = vpack.c.b16 %v2338, %v2334
    %v3031 = vpack.c.b16 %v2339, %v2335
    %v3032 = vpack.c.b16 %v2344, %v2340
    %v3033 = vpack.c.b16 %v2345, %v2341
    %v3034 = vpack.c.b16 %v2346, %v2342
    %v3035 = vpack.c.b16 %v2347, %v2343
    %v3036 = vpack.c.b16 %v2352, %v2348
    %v3037 = vpack.c.b16 %v2353, %v2349
    %v3038 = vpack.c.b16 %v2354, %v2350
    %v3039 = vpack.c.b16 %v2355, %v2351
    %v3040 = vpack.c.b16 %v2360, %v2356
    %v3041 = vpack.c.b16 %v2361, %v2357
    %v3042 = vpack.c.b16 %v2362, %v2358
    %v3043 = vpack.c.b16 %v2363, %v2359
    %v3044 = vpack.c.b16 %v2368, %v2364
    %v3045 = vpack.c.b16 %v2369, %v2365
    %v3046 = vpack.c.b16 %v2370, %v2366
    %v3047 = vpack.c.b16 %v2371, %v2367
    %v3048 = vpack.c.b16 %v2376, %v2372
    %v3049 = vpack.c.b16 %v2377, %v2373
    %v3050 = vpack.c.b16 %v2378, %v2374
    %v3051 = vpack.c.b16 %v2379, %v2375
    %v3052 = vpack.c.b16 %v2384, %v2380
    %v3053 = vpack.c.b16 %v2385, %v2381
    %v3054 = vpack.c.b16 %v2386, %v2382
    %v3055 = vpack.c.b16 %v2387, %v2383
    %v3056 = vpack.c.b16 %v2392, %v2388
    %v3057 = vpack.c.b16 %v2393, %v2389
    %v3058 = vpack.c.b16 %v2394, %v2390
    %v3059 = vpack.c.b16 %v2395, %v2391
    %v3060 = vpack.c.b16 %v2400, %v2396
    %v3061 = vpack.c.b16 %v2401, %v2397
    %v3062 = vpack.c.b16 %v2402, %v2398
    %v3063 = vpack.c.b16 %v2403, %v2399
    %v3064 = vpack.c.b16 %v2408, %v2404
    %v3065 = vpack.c.b16 %v2409, %v2405
    %v3066 = vpack.c.b16 %v2410, %v2406
    %v3067 = vpack.c.b16 %v2411, %v2407
    %v3068 = vpack.c.b16 %v2416, %v2412
    %v3069 = vpack.c.b16 %v2417, %v2413
    %v3070 = vpack.c.b16 %v2418, %v2414
    %v3071 = vpack.c.b16 %v2419, %v2415
    %v3072 = vpack.c.b16 %v2424, %v2420
    %v3073 = vpack.c.b16 %v2425, %v2421
    %v3074 = vpack.c.b16 %v2426, %v2422
    %v3075 = vpack.c.b16 %v2427, %v2423
    %v3076 = vpack.c.b16 %v2432, %v2428
    %v3077 = vpack.c.b16 %v2433, %v2429
    %v3078 = vpack.c.b16 %v2434, %v2430
    %v3079 = vpack.c.b16 %v2435, %v2431
    %v3080 = vpack.c.b16 %v2440, %v2436
    %v3081 = vpack.c.b16 %v2441, %v2437
    %v3082 = vpack.c.b16 %v2442, %v2438
    %v3083 = vpack.c.b16 %v2443, %v2439
    %v3084 = vpack.c.b16 %v2448, %v2444
    %v3085 = vpack.c.b16 %v2449, %v2445
    %v3086 = vpack.c.b16 %v2450, %v2446
    %v3087 = vpack.c.b16 %v2451, %v2447
    %v3088 = vpack.c.b16 %v2456, %v2452
    %v3089 = vpack.c.b16 %v2457, %v2453
    %v3090 = vpack.c.b16 %v2458, %v2454
    %v3091 = vpack.c.b16 %v2459, %v2455
    %v3092 = vpack.c.b16 %v2464, %v2460
    %v3093 = vpack.c.b16 %v2465, %v2461
    %v3094 = vpack.c.b16 %v2466, %v2462
    %v3095 = vpack.c.b16 %v2467, %v2463
    %v3096 = vpack.c.b16 %v2472, %v2468
    %v3097 = vpack.c.b16 %v2473, %v2469
    %v3098 = vpack.c.b16 %v2474, %v2470
    %v3099 = vpack.c.b16 %v2475, %v2471
    %v3100 = vpack.c.b16 %v2480, %v2476
    %v3101 = vpack.c.b16 %v2481, %v2477
    %v3102 = vpack.c.b16 %v2482, %v2478
    %v3103 = vpack.c.b16 %v2483, %v2479
    %v3104 = vpack.c.b16 %v2488, %v2484
    %v3105 = vpack.c.b16 %v2489, %v2485
    %v3106 = vpack.c.b16 %v2490, %v2486
    %v3107 = vpack.c.b16 %v2491, %v2487
    %v3108 = vpack.c.b16 %v2496, %v2492
    %v3109 = vpack.c.b16 %v2497, %v2493
    %v3110 = vpack.c.b16 %v2498, %v2494
    %v3111 = vpack.c.b16 %v2499, %v2495
    %v3112 = vpack.c.b16 %v2504, %v2500
    %v3113 = vpack.c.b16 %v2505, %v2501
    %v3114 = vpack.c.b16 %v2506, %v2502
    %v3115 = vpack.c.b16 %v2507, %v2503
    %v3116 = vpack.c.b16 %v2512, %v2508
    %v3117 = vpack.c.b16 %v2513, %v2509
    %v3118 = vpack.c.b16 %v2514, %v2510
    %v3119 = vpack.c.b16 %v2515, %v2511
    %v3120 = vpack.c.b16 %v2520, %v2516
    %v3121 = vpack.c.b16 %v2521, %v2517
    %v3122 = vpack.c.b16 %v2522, %v2518
    %v3123 = vpack.c.b16 %v2523, %v2519
    %v3124 = vpack.c.b16 %v2528, %v2524
    %v3125 = vpack.c.b16 %v2529, %v2525
    %v3126 = vpack.c.b16 %v2530, %v2526
    %v3127 = vpack.c.b16 %v2531, %v2527
    %v3128 = vpack.c.b16 %v2536, %v2532
    %v3129 = vpack.c.b16 %v2537, %v2533
    %v3130 = vpack.c.b16 %v2538, %v2534
    %v3131 = vpack.c.b16 %v2539, %v2535
    %v3132 = vpack.c.b16 %v2544, %v2540
    %v3133 = vpack.c.b16 %v2545, %v2541
    %v3134 = vpack.c.b16 %v2546, %v2542
    %v3135 = vpack.c.b16 %v2547, %v2543
    %v3136 = vpack.c.b16 %v2552, %v2548
    %v3137 = vpack.c.b16 %v2553, %v2549
    %v3138 = vpack.c.b16 %v2554, %v2550
    %v3139 = vpack.c.b16 %v2555, %v2551
    %v3140 = vpack.c.b16 %v2560, %v2556
    %v3141 = vpack.c.b16 %v2561, %v2557
    %v3142 = vpack.c.b16 %v2562, %v2558
    %v3143 = vpack.c.b16 %v2563, %v2559
    %v3144 = vpack.c.b16 %v2568, %v2564
    %v3145 = vpack.c.b16 %v2569, %v2565
    %v3146 = vpack.c.b16 %v2570, %v2566
    %v3147 = vpack.c.b16 %v2571, %v2567
    %3724 = vmatprep.subr.bf16.mxu0 %v2573
    %3725 = vmatpush1.bf16.msra.mxu0 %v2572
    %3726 = vmatprep.subr.bf16.mxu0 %v2577
    %3727 = vmatpush1.bf16.msra.mxu0 %v2576
    %3728 = vmatprep.subr.bf16.mxu0 %v2581
    %3729 = vmatpush1.bf16.msra.mxu0 %v2580
    %3730 = vmatprep.subr.bf16.mxu0 %v2585
    %3731 = vmatpush1.bf16.msra.mxu0 %v2584
    %3732 = vmatprep.subr.bf16.mxu0 %v2589
    %3733 = vmatpush1.bf16.msra.mxu0 %v2588
    %3734 = vmatprep.subr.bf16.mxu0 %v2593
    %3735 = vmatpush1.bf16.msra.mxu0 %v2592
    %3736 = vmatprep.subr.bf16.mxu0 %v2597
    %3737 = vmatpush1.bf16.msra.mxu0 %v2596
    %3738 = vmatprep.subr.bf16.mxu0 %v2601
    %3739 = vmatpush1.bf16.msra.mxu0 %v2600
    %3740 = vmatprep.subr.bf16.mxu0 %v2605
    %3741 = vmatpush1.bf16.msra.mxu0 %v2604
    %3742 = vmatprep.subr.bf16.mxu0 %v2609
    %3743 = vmatpush1.bf16.msra.mxu0 %v2608
    %3744 = vmatprep.subr.bf16.mxu0 %v2613
    %3745 = vmatpush1.bf16.msra.mxu0 %v2612
    %3746 = vmatprep.subr.bf16.mxu0 %v2617
    %3747 = vmatpush1.bf16.msra.mxu0 %v2616
    %3748 = vmatprep.subr.bf16.mxu0 %v2621
    %3749 = vmatpush1.bf16.msra.mxu0 %v2620
    %3750 = vmatprep.subr.bf16.mxu0 %v2625
    %3751 = vmatpush1.bf16.msra.mxu0 %v2624
    %3752 = vmatprep.subr.bf16.mxu0 %v2629
    %3753 = vmatpush1.bf16.msra.mxu0 %v2628
    %3754 = vmatprep.subr.bf16.mxu0 %v2633
    %3755 = vmatpush1.bf16.msra.mxu0 %v2632
    %3756 = vmatprep.mubr.bf16.mxu0 %v809
    %3757 = vmatmul.mubr.bf16.gmra.mrb[0].mxu0 %v808
    %v3758 = vpop.f32.mrb[0].mxu0
    %v3759 = vadd.f32 %v737, %v3758
    %v3760 = vpop.f32.mrb[0].mxu0
    %v3761 = vadd.f32 %v741, %v3760
    %v3762 = vpop.f32.mrb[0].mxu0
    %v3763 = vadd.f32 %v737, %v3762
    %v3764 = vpop.f32.mrb[0].mxu0
    %v3765 = vadd.f32 %v741, %v3764
    %3766 = vdwg.mxu0
    %3767 = vmatprep.subr.bf16.mxu0 %v2637
    %3768 = vmatpush1.bf16.msra.mxu0 %v2636
    %3769 = vmatprep.subr.bf16.mxu0 %v2641
    %3770 = vmatpush1.bf16.msra.mxu0 %v2640
    %3771 = vmatprep.subr.bf16.mxu0 %v2645
    %3772 = vmatpush1.bf16.msra.mxu0 %v2644
    %3773 = vmatprep.subr.bf16.mxu0 %v2649
    %3774 = vmatpush1.bf16.msra.mxu0 %v2648
    %3775 = vmatprep.subr.bf16.mxu0 %v2653
    %3776 = vmatpush1.bf16.msra.mxu0 %v2652
    %3777 = vmatprep.subr.bf16.mxu0 %v2657
    %3778 = vmatpush1.bf16.msra.mxu0 %v2656
    %3779 = vmatprep.subr.bf16.mxu0 %v2661
    %3780 = vmatpush1.bf16.msra.mxu0 %v2660
    %3781 = vmatprep.subr.bf16.mxu0 %v2665
    %3782 = vmatpush1.bf16.msra.mxu0 %v2664
    %3783 = vmatprep.subr.bf16.mxu0 %v2669
    %3784 = vmatpush1.bf16.msra.mxu0 %v2668
    %3785 = vmatprep.subr.bf16.mxu0 %v2673
    %3786 = vmatpush1.bf16.msra.mxu0 %v2672
    %3787 = vmatprep.subr.bf16.mxu0 %v2677
    %3788 = vmatpush1.bf16.msra.mxu0 %v2676
    %3789 = vmatprep.subr.bf16.mxu0 %v2681
    %3790 = vmatpush1.bf16.msra.mxu0 %v2680
    %3791 = vmatprep.subr.bf16.mxu0 %v2685
    %3792 = vmatpush1.bf16.msra.mxu0 %v2684
    %3793 = vmatprep.subr.bf16.mxu0 %v2689
    %3794 = vmatpush1.bf16.msra.mxu0 %v2688
    %3795 = vmatprep.subr.bf16.mxu0 %v2693
    %3796 = vmatpush1.bf16.msra.mxu0 %v2692
    %3797 = vmatprep.subr.bf16.mxu0 %v2697
    %3798 = vmatpush1.bf16.msra.mxu0 %v2696
    %3799 = vmatprep.mubr.bf16.mxu0 %v811
    %3800 = vmatmul.mubr.bf16.gmra.mrb[0].mxu0 %v810
    %v3801 = vpop.f32.mrb[0].mxu0
    %v3802 = vadd.f32 %v3759, %v3801
    %v3803 = vpop.f32.mrb[0].mxu0
    %v3804 = vadd.f32 %v3761, %v3803
    %v3805 = vpop.f32.mrb[0].mxu0
    %v3806 = vadd.f32 %v3763, %v3805
    %v3807 = vpop.f32.mrb[0].mxu0
    %v3808 = vadd.f32 %v3765, %v3807
    %3809 = vdwg.mxu0
    %3810 = vmatprep.subr.bf16.mxu0 %v2701
    %3811 = vmatpush1.bf16.msra.mxu0 %v2700
    %3812 = vmatprep.subr.bf16.mxu0 %v2705
    %3813 = vmatpush1.bf16.msra.mxu0 %v2704
    %3814 = vmatprep.subr.bf16.mxu0 %v2709
    %3815 = vmatpush1.bf16.msra.mxu0 %v2708
    %3816 = vmatprep.subr.bf16.mxu0 %v2713
    %3817 = vmatpush1.bf16.msra.mxu0 %v2712
    %3818 = vmatprep.subr.bf16.mxu0 %v2717
    %3819 = vmatpush1.bf16.msra.mxu0 %v2716
    %3820 = vmatprep.subr.bf16.mxu0 %v2721
    %3821 = vmatpush1.bf16.msra.mxu0 %v2720
    %3822 = vmatprep.subr.bf16.mxu0 %v2725
    %3823 = vmatpush1.bf16.msra.mxu0 %v2724
    %3824 = vmatprep.subr.bf16.mxu0 %v2729
    %3825 = vmatpush1.bf16.msra.mxu0 %v2728
    %3826 = vmatprep.subr.bf16.mxu0 %v2733
    %3827 = vmatpush1.bf16.msra.mxu0 %v2732
    %3828 = vmatprep.subr.bf16.mxu0 %v2737
    %3829 = vmatpush1.bf16.msra.mxu0 %v2736
    %3830 = vmatprep.subr.bf16.mxu0 %v2741
    %3831 = vmatpush1.bf16.msra.mxu0 %v2740
    %3832 = vmatprep.subr.bf16.mxu0 %v2745
    %3833 = vmatpush1.bf16.msra.mxu0 %v2744
    %3834 = vmatprep.subr.bf16.mxu0 %v2749
    %3835 = vmatpush1.bf16.msra.mxu0 %v2748
    %3836 = vmatprep.subr.bf16.mxu0 %v2753
    %3837 = vmatpush1.bf16.msra.mxu0 %v2752
    %3838 = vmatprep.subr.bf16.mxu0 %v2757
    %3839 = vmatpush1.bf16.msra.mxu0 %v2756
    %3840 = vmatprep.subr.bf16.mxu0 %v2761
    %3841 = vmatpush1.bf16.msra.mxu0 %v2760
    %3842 = vmatprep.mubr.bf16.mxu0 %v813
    %3843 = vmatmul.mubr.bf16.gmra.mrb[0].mxu0 %v812
    %v3844 = vpop.f32.mrb[0].mxu0
    %v3845 = vadd.f32 %v3802, %v3844
    %v3846 = vpop.f32.mrb[0].mxu0
    %v3847 = vadd.f32 %v3804, %v3846
    %v3848 = vpop.f32.mrb[0].mxu0
    %v3849 = vadd.f32 %v3806, %v3848
    %v3850 = vpop.f32.mrb[0].mxu0
    %v3851 = vadd.f32 %v3808, %v3850
    %3852 = vdwg.mxu0
    %3853 = vmatprep.subr.bf16.mxu0 %v2765
    %3854 = vmatpush1.bf16.msra.mxu0 %v2764
    %3855 = vmatprep.subr.bf16.mxu0 %v2769
    %3856 = vmatpush1.bf16.msra.mxu0 %v2768
    %3857 = vmatprep.subr.bf16.mxu0 %v2773
    %3858 = vmatpush1.bf16.msra.mxu0 %v2772
    %3859 = vmatprep.subr.bf16.mxu0 %v2777
    %3860 = vmatpush1.bf16.msra.mxu0 %v2776
    %3861 = vmatprep.subr.bf16.mxu0 %v2781
    %3862 = vmatpush1.bf16.msra.mxu0 %v2780
    %3863 = vmatprep.subr.bf16.mxu0 %v2785
    %3864 = vmatpush1.bf16.msra.mxu0 %v2784
    %3865 = vmatprep.subr.bf16.mxu0 %v2789
    %3866 = vmatpush1.bf16.msra.mxu0 %v2788
    %3867 = vmatprep.subr.bf16.mxu0 %v2793
    %3868 = vmatpush1.bf16.msra.mxu0 %v2792
    %3869 = vmatprep.subr.bf16.mxu0 %v2797
    %3870 = vmatpush1.bf16.msra.mxu0 %v2796
    %3871 = vmatprep.subr.bf16.mxu0 %v2801
    %3872 = vmatpush1.bf16.msra.mxu0 %v2800
    %3873 = vmatprep.subr.bf16.mxu0 %v2805
    %3874 = vmatpush1.bf16.msra.mxu0 %v2804
    %3875 = vmatprep.subr.bf16.mxu0 %v2809
    %3876 = vmatpush1.bf16.msra.mxu0 %v2808
    %3877 = vmatprep.subr.bf16.mxu0 %v2813
    %3878 = vmatpush1.bf16.msra.mxu0 %v2812
    %3879 = vmatprep.subr.bf16.mxu0 %v2817
    %3880 = vmatpush1.bf16.msra.mxu0 %v2816
    %3881 = vmatprep.subr.bf16.mxu0 %v2821
    %3882 = vmatpush1.bf16.msra.mxu0 %v2820
    %3883 = vmatprep.subr.bf16.mxu0 %v2825
    %3884 = vmatpush1.bf16.msra.mxu0 %v2824
    %3885 = vmatprep.mubr.bf16.mxu0 %v815
    %3886 = vmatmul.mubr.bf16.gmra.mrb[0].mxu0 %v814
    %v3887 = vpop.f32.mrb[0].mxu0
    %v3888 = vadd.f32 %v3845, %v3887
    %v3889 = vpop.f32.mrb[0].mxu0
    %v3890 = vadd.f32 %v3847, %v3889
    %v3891 = vpop.f32.mrb[0].mxu0
    %v3892 = vadd.f32 %v3849, %v3891
    %v3893 = vpop.f32.mrb[0].mxu0
    %v3894 = vadd.f32 %v3851, %v3893
    %3895 = vdwg.mxu0
    %3896 = vmatprep.subr.bf16.mxu0 %v2829
    %3897 = vmatpush1.bf16.msra.mxu0 %v2828
    %3898 = vmatprep.subr.bf16.mxu0 %v2833
    %3899 = vmatpush1.bf16.msra.mxu0 %v2832
    %3900 = vmatprep.subr.bf16.mxu0 %v2837
    %3901 = vmatpush1.bf16.msra.mxu0 %v2836
    %3902 = vmatprep.subr.bf16.mxu0 %v2841
    %3903 = vmatpush1.bf16.msra.mxu0 %v2840
    %3904 = vmatprep.subr.bf16.mxu0 %v2845
    %3905 = vmatpush1.bf16.msra.mxu0 %v2844
    %3906 = vmatprep.subr.bf16.mxu0 %v2849
    %3907 = vmatpush1.bf16.msra.mxu0 %v2848
    %3908 = vmatprep.subr.bf16.mxu0 %v2853
    %3909 = vmatpush1.bf16.msra.mxu0 %v2852
    %3910 = vmatprep.subr.bf16.mxu0 %v2857
    %3911 = vmatpush1.bf16.msra.mxu0 %v2856
    %3912 = vmatprep.subr.bf16.mxu0 %v2861
    %3913 = vmatpush1.bf16.msra.mxu0 %v2860
    %3914 = vmatprep.subr.bf16.mxu0 %v2865
    %3915 = vmatpush1.bf16.msra.mxu0 %v2864
    %3916 = vmatprep.subr.bf16.mxu0 %v2869
    %3917 = vmatpush1.bf16.msra.mxu0 %v2868
    %3918 = vmatprep.subr.bf16.mxu0 %v2873
    %3919 = vmatpush1.bf16.msra.mxu0 %v2872
    %3920 = vmatprep.subr.bf16.mxu0 %v2877
    %3921 = vmatpush1.bf16.msra.mxu0 %v2876
    %3922 = vmatprep.subr.bf16.mxu0 %v2881
    %3923 = vmatpush1.bf16.msra.mxu0 %v2880
    %3924 = vmatprep.subr.bf16.mxu0 %v2885
    %3925 = vmatpush1.bf16.msra.mxu0 %v2884
    %3926 = vmatprep.subr.bf16.mxu0 %v2889
    %3927 = vmatpush1.bf16.msra.mxu0 %v2888
    %3928 = vmatprep.mubr.bf16.mxu0 %v817
    %3929 = vmatmul.mubr.bf16.gmra.mrb[0].mxu0 %v816
    %v3930 = vpop.f32.mrb[0].mxu0
    %v3931 = vadd.f32 %v3888, %v3930
    %v3932 = vpop.f32.mrb[0].mxu0
    %v3933 = vadd.f32 %v3890, %v3932
    %v3934 = vpop.f32.mrb[0].mxu0
    %v3935 = vadd.f32 %v3892, %v3934
    %v3936 = vpop.f32.mrb[0].mxu0
    %v3937 = vadd.f32 %v3894, %v3936
    %3938 = vdwg.mxu0
    %3939 = vmatprep.subr.bf16.mxu0 %v2893
    %3940 = vmatpush1.bf16.msra.mxu0 %v2892
    %3941 = vmatprep.subr.bf16.mxu0 %v2897
    %3942 = vmatpush1.bf16.msra.mxu0 %v2896
    %3943 = vmatprep.subr.bf16.mxu0 %v2901
    %3944 = vmatpush1.bf16.msra.mxu0 %v2900
    %3945 = vmatprep.subr.bf16.mxu0 %v2905
    %3946 = vmatpush1.bf16.msra.mxu0 %v2904
    %3947 = vmatprep.subr.bf16.mxu0 %v2909
    %3948 = vmatpush1.bf16.msra.mxu0 %v2908
    %3949 = vmatprep.subr.bf16.mxu0 %v2913
    %3950 = vmatpush1.bf16.msra.mxu0 %v2912
    %3951 = vmatprep.subr.bf16.mxu0 %v2917
    %3952 = vmatpush1.bf16.msra.mxu0 %v2916
    %3953 = vmatprep.subr.bf16.mxu0 %v2921
    %3954 = vmatpush1.bf16.msra.mxu0 %v2920
    %3955 = vmatprep.subr.bf16.mxu0 %v2925
    %3956 = vmatpush1.bf16.msra.mxu0 %v2924
    %3957 = vmatprep.subr.bf16.mxu0 %v2929
    %3958 = vmatpush1.bf16.msra.mxu0 %v2928
    %3959 = vmatprep.subr.bf16.mxu0 %v2933
    %3960 = vmatpush1.bf16.msra.mxu0 %v2932
    %3961 = vmatprep.subr.bf16.mxu0 %v2937
    %3962 = vmatpush1.bf16.msra.mxu0 %v2936
    %3963 = vmatprep.subr.bf16.mxu0 %v2941
    %3964 = vmatpush1.bf16.msra.mxu0 %v2940
    %3965 = vmatprep.subr.bf16.mxu0 %v2945
    %3966 = vmatpush1.bf16.msra.mxu0 %v2944
    %3967 = vmatprep.subr.bf16.mxu0 %v2949
    %3968 = vmatpush1.bf16.msra.mxu0 %v2948
    %3969 = vmatprep.subr.bf16.mxu0 %v2953
    %3970 = vmatpush1.bf16.msra.mxu0 %v2952
    %3971 = vmatprep.mubr.bf16.mxu0 %v819
    %3972 = vmatmul.mubr.bf16.gmra.mrb[0].mxu0 %v818
    %v3973 = vpop.f32.mrb[0].mxu0
    %v3974 = vadd.f32 %v3931, %v3973
    %v3975 = vpop.f32.mrb[0].mxu0
    %v3976 = vadd.f32 %v3933, %v3975
    %v3977 = vpop.f32.mrb[0].mxu0
    %v3978 = vadd.f32 %v3935, %v3977
    %v3979 = vpop.f32.mrb[0].mxu0
    %v3980 = vadd.f32 %v3937, %v3979
    %3981 = vdwg.mxu0
    %3982 = vmatprep.subr.bf16.mxu0 %v2957
    %3983 = vmatpush1.bf16.msra.mxu0 %v2956
    %3984 = vmatprep.subr.bf16.mxu0 %v2961
    %3985 = vmatpush1.bf16.msra.mxu0 %v2960
    %3986 = vmatprep.subr.bf16.mxu0 %v2965
    %3987 = vmatpush1.bf16.msra.mxu0 %v2964
    %3988 = vmatprep.subr.bf16.mxu0 %v2969
    %3989 = vmatpush1.bf16.msra.mxu0 %v2968
    %3990 = vmatprep.subr.bf16.mxu0 %v2973
    %3991 = vmatpush1.bf16.msra.mxu0 %v2972
    %3992 = vmatprep.subr.bf16.mxu0 %v2977
    %3993 = vmatpush1.bf16.msra.mxu0 %v2976
    %3994 = vmatprep.subr.bf16.mxu0 %v2981
    %3995 = vmatpush1.bf16.msra.mxu0 %v2980
    %3996 = vmatprep.subr.bf16.mxu0 %v2985
    %3997 = vmatpush1.bf16.msra.mxu0 %v2984
    %3998 = vmatprep.subr.bf16.mxu0 %v2989
    %3999 = vmatpush1.bf16.msra.mxu0 %v2988
    %4000 = vmatprep.subr.bf16.mxu0 %v2993
    %4001 = vmatpush1.bf16.msra.mxu0 %v2992
    %4002 = vmatprep.subr.bf16.mxu0 %v2997
    %4003 = vmatpush1.bf16.msra.mxu0 %v2996
    %4004 = vmatprep.subr.bf16.mxu0 %v3001
    %4005 = vmatpush1.bf16.msra.mxu0 %v3000
    %4006 = vmatprep.subr.bf16.mxu0 %v3005
    %4007 = vmatpush1.bf16.msra.mxu0 %v3004
    %4008 = vmatprep.subr.bf16.mxu0 %v3009
    %4009 = vmatpush1.bf16.msra.mxu0 %v3008
    %4010 = vmatprep.subr.bf16.mxu0 %v3013
    %4011 = vmatpush1.bf16.msra.mxu0 %v3012
    %4012 = vmatprep.subr.bf16.mxu0 %v3017
    %4013 = vmatpush1.bf16.msra.mxu0 %v3016
    %4014 = vmatprep.mubr.bf16.mxu0 %v821
    %4015 = vmatmul.mubr.bf16.gmra.mrb[0].mxu0 %v820
    %v4016 = vpop.f32.mrb[0].mxu0
    %v4017 = vadd.f32 %v3974, %v4016
    %v4018 = vpop.f32.mrb[0].mxu0
    %v4019 = vadd.f32 %v3976, %v4018
    %v4020 = vpop.f32.mrb[0].mxu0
    %v4021 = vadd.f32 %v3978, %v4020
    %v4022 = vpop.f32.mrb[0].mxu0
    %v4023 = vadd.f32 %v3980, %v4022
    %4024 = vdwg.mxu0
    %4025 = vmatprep.subr.bf16.mxu0 %v3021
    %4026 = vmatpush1.bf16.msra.mxu0 %v3020
    %4027 = vmatprep.subr.bf16.mxu0 %v3025
    %4028 = vmatpush1.bf16.msra.mxu0 %v3024
    %4029 = vmatprep.subr.bf16.mxu0 %v3029
    %4030 = vmatpush1.bf16.msra.mxu0 %v3028
    %4031 = vmatprep.subr.bf16.mxu0 %v3033
    %4032 = vmatpush1.bf16.msra.mxu0 %v3032
    %4033 = vmatprep.subr.bf16.mxu0 %v3037
    %4034 = vmatpush1.bf16.msra.mxu0 %v3036
    %4035 = vmatprep.subr.bf16.mxu0 %v3041
    %4036 = vmatpush1.bf16.msra.mxu0 %v3040
    %4037 = vmatprep.subr.bf16.mxu0 %v3045
    %4038 = vmatpush1.bf16.msra.mxu0 %v3044
    %4039 = vmatprep.subr.bf16.mxu0 %v3049
    %4040 = vmatpush1.bf16.msra.mxu0 %v3048
    %4041 = vmatprep.subr.bf16.mxu0 %v3053
    %4042 = vmatpush1.bf16.msra.mxu0 %v3052
    %4043 = vmatprep.subr.bf16.mxu0 %v3057
    %4044 = vmatpush1.bf16.msra.mxu0 %v3056
    %4045 = vmatprep.subr.bf16.mxu0 %v3061
    %4046 = vmatpush1.bf16.msra.mxu0 %v3060
    %4047 = vmatprep.subr.bf16.mxu0 %v3065
    %4048 = vmatpush1.bf16.msra.mxu0 %v3064
    %4049 = vmatprep.subr.bf16.mxu0 %v3069
    %4050 = vmatpush1.bf16.msra.mxu0 %v3068
    %4051 = vmatprep.subr.bf16.mxu0 %v3073
    %4052 = vmatpush1.bf16.msra.mxu0 %v3072
    %4053 = vmatprep.subr.bf16.mxu0 %v3077
    %4054 = vmatpush1.bf16.msra.mxu0 %v3076
    %4055 = vmatprep.subr.bf16.mxu0 %v3081
    %4056 = vmatpush1.bf16.msra.mxu0 %v3080
    %4057 = vmatprep.mubr.bf16.mxu0 %v823
    %4058 = vmatmul.mubr.bf16.gmra.mrb[0].mxu0 %v822
    %v4059 = vpop.f32.mrb[0].mxu0
    %v4060 = vadd.f32 %v4017, %v4059
    %v4061 = vpop.f32.mrb[0].mxu0
    %v4062 = vadd.f32 %v4019, %v4061
    %v4063 = vpop.f32.mrb[0].mxu0
    %v4064 = vadd.f32 %v4021, %v4063
    %v4065 = vpop.f32.mrb[0].mxu0
    %v4066 = vadd.f32 %v4023, %v4065
    %4067 = vdwg.mxu0
    %4068 = vmatprep.subr.bf16.mxu0 %v3085
    %4069 = vmatpush1.bf16.msra.mxu0 %v3084
    %4070 = vmatprep.subr.bf16.mxu0 %v3089
    %4071 = vmatpush1.bf16.msra.mxu0 %v3088
    %4072 = vmatprep.subr.bf16.mxu0 %v3093
    %4073 = vmatpush1.bf16.msra.mxu0 %v3092
    %4074 = vmatprep.subr.bf16.mxu0 %v3097
    %4075 = vmatpush1.bf16.msra.mxu0 %v3096
    %4076 = vmatprep.subr.bf16.mxu0 %v3101
    %4077 = vmatpush1.bf16.msra.mxu0 %v3100
    %4078 = vmatprep.subr.bf16.mxu0 %v3105
    %4079 = vmatpush1.bf16.msra.mxu0 %v3104
    %4080 = vmatprep.subr.bf16.mxu0 %v3109
    %4081 = vmatpush1.bf16.msra.mxu0 %v3108
    %4082 = vmatprep.subr.bf16.mxu0 %v3113
    %4083 = vmatpush1.bf16.msra.mxu0 %v3112
    %4084 = vmatprep.subr.bf16.mxu0 %v3117
    %4085 = vmatpush1.bf16.msra.mxu0 %v3116
    %4086 = vmatprep.subr.bf16.mxu0 %v3121
    %4087 = vmatpush1.bf16.msra.mxu0 %v3120
    %4088 = vmatprep.subr.bf16.mxu0 %v3125
    %4089 = vmatpush1.bf16.msra.mxu0 %v3124
    %4090 = vmatprep.subr.bf16.mxu0 %v3129
    %4091 = vmatpush1.bf16.msra.mxu0 %v3128
    %4092 = vmatprep.subr.bf16.mxu0 %v3133
    %4093 = vmatpush1.bf16.msra.mxu0 %v3132
    %4094 = vmatprep.subr.bf16.mxu0 %v3137
    %4095 = vmatpush1.bf16.msra.mxu0 %v3136
    %4096 = vmatprep.subr.bf16.mxu0 %v3141
    %4097 = vmatpush1.bf16.msra.mxu0 %v3140
    %4098 = vmatprep.subr.bf16.mxu0 %v3145
    %4099 = vmatpush1.bf16.msra.mxu0 %v3144
    %4100 = vmatprep.mubr.bf16.mxu0 %v825
    %4101 = vmatmul.mubr.bf16.gmra.mrb[0].mxu0 %v824
    %v4102 = vpop.f32.mrb[0].mxu0
    %v4103 = vadd.f32 %v4060, %v4102
    %v4104 = vpop.f32.mrb[0].mxu0
    %v4105 = vadd.f32 %v4062, %v4104
    %v4106 = vpop.f32.mrb[0].mxu0
    %v4107 = vadd.f32 %v4064, %v4106
    %v4108 = vpop.f32.mrb[0].mxu0
    %v4109 = vadd.f32 %v4066, %v4108
    %4110 = vdwg.mxu0
    %4111 = vmatprep.subr.bf16.mxu0 %v2575
    %4112 = vmatpush1.bf16.msra.mxu0 %v2574
    %4113 = vmatprep.subr.bf16.mxu0 %v2579
    %4114 = vmatpush1.bf16.msra.mxu0 %v2578
    %4115 = vmatprep.subr.bf16.mxu0 %v2583
    %4116 = vmatpush1.bf16.msra.mxu0 %v2582
    %4117 = vmatprep.subr.bf16.mxu0 %v2587
    %4118 = vmatpush1.bf16.msra.mxu0 %v2586
    %4119 = vmatprep.subr.bf16.mxu0 %v2591
    %4120 = vmatpush1.bf16.msra.mxu0 %v2590
    %4121 = vmatprep.subr.bf16.mxu0 %v2595
    %4122 = vmatpush1.bf16.msra.mxu0 %v2594
    %4123 = vmatprep.subr.bf16.mxu0 %v2599
    %4124 = vmatpush1.bf16.msra.mxu0 %v2598
    %4125 = vmatprep.subr.bf16.mxu0 %v2603
    %4126 = vmatpush1.bf16.msra.mxu0 %v2602
    %4127 = vmatprep.subr.bf16.mxu0 %v2607
    %4128 = vmatpush1.bf16.msra.mxu0 %v2606
    %4129 = vmatprep.subr.bf16.mxu0 %v2611
    %4130 = vmatpush1.bf16.msra.mxu0 %v2610
    %4131 = vmatprep.subr.bf16.mxu0 %v2615
    %4132 = vmatpush1.bf16.msra.mxu0 %v2614
    %4133 = vmatprep.subr.bf16.mxu0 %v2619
    %4134 = vmatpush1.bf16.msra.mxu0 %v2618
    %4135 = vmatprep.subr.bf16.mxu0 %v2623
    %4136 = vmatpush1.bf16.msra.mxu0 %v2622
    %4137 = vmatprep.subr.bf16.mxu0 %v2627
    %4138 = vmatpush1.bf16.msra.mxu0 %v2626
    %4139 = vmatprep.subr.bf16.mxu0 %v2631
    %4140 = vmatpush1.bf16.msra.mxu0 %v2630
    %4141 = vmatprep.subr.bf16.mxu0 %v2635
    %4142 = vmatpush1.bf16.msra.mxu0 %v2634
    %4143 = vmatprep.mubr.bf16.mxu0 %v809
    %4144 = vmatmul.mubr.bf16.gmra.mrb[0].mxu0 %v808
    %v4145 = vpop.f32.mrb[0].mxu0
    %v4146 = vadd.f32 %v745, %v4145
    %v4147 = vpop.f32.mrb[0].mxu0
    %v4148 = vadd.f32 %v749, %v4147
    %v4149 = vpop.f32.mrb[0].mxu0
    %v4150 = vadd.f32 %v745, %v4149
    %v4151 = vpop.f32.mrb[0].mxu0
    %v4152 = vadd.f32 %v749, %v4151
    %4153 = vdwg.mxu0
    %4154 = vmatprep.subr.bf16.mxu0 %v2639
    %4155 = vmatpush1.bf16.msra.mxu0 %v2638
    %4156 = vmatprep.subr.bf16.mxu0 %v2643
    %4157 = vmatpush1.bf16.msra.mxu0 %v2642
    %4158 = vmatprep.subr.bf16.mxu0 %v2647
    %4159 = vmatpush1.bf16.msra.mxu0 %v2646
    %4160 = vmatprep.subr.bf16.mxu0 %v2651
    %4161 = vmatpush1.bf16.msra.mxu0 %v2650
    %4162 = vmatprep.subr.bf16.mxu0 %v2655
    %4163 = vmatpush1.bf16.msra.mxu0 %v2654
    %4164 = vmatprep.subr.bf16.mxu0 %v2659
    %4165 = vmatpush1.bf16.msra.mxu0 %v2658
    %4166 = vmatprep.subr.bf16.mxu0 %v2663
    %4167 = vmatpush1.bf16.msra.mxu0 %v2662
    %4168 = vmatprep.subr.bf16.mxu0 %v2667
    %4169 = vmatpush1.bf16.msra.mxu0 %v2666
    %4170 = vmatprep.subr.bf16.mxu0 %v2671
    %4171 = vmatpush1.bf16.msra.mxu0 %v2670
    %4172 = vmatprep.subr.bf16.mxu0 %v2675
    %4173 = vmatpush1.bf16.msra.mxu0 %v2674
    %4174 = vmatprep.subr.bf16.mxu0 %v2679
    %4175 = vmatpush1.bf16.msra.mxu0 %v2678
    %4176 = vmatprep.subr.bf16.mxu0 %v2683
    %4177 = vmatpush1.bf16.msra.mxu0 %v2682
    %4178 = vmatprep.subr.bf16.mxu0 %v2687
    %4179 = vmatpush1.bf16.msra.mxu0 %v2686
    %4180 = vmatprep.subr.bf16.mxu0 %v2691
    %4181 = vmatpush1.bf16.msra.mxu0 %v2690
    %4182 = vmatprep.subr.bf16.mxu0 %v2695
    %4183 = vmatpush1.bf16.msra.mxu0 %v2694
    %4184 = vmatprep.subr.bf16.mxu0 %v2699
    %4185 = vmatpush1.bf16.msra.mxu0 %v2698
    %4186 = vmatprep.mubr.bf16.mxu0 %v811
    %4187 = vmatmul.mubr.bf16.gmra.mrb[0].mxu0 %v810
    %v4188 = vpop.f32.mrb[0].mxu0
    %v4189 = vadd.f32 %v4146, %v4188
    %v4190 = vpop.f32.mrb[0].mxu0
    %v4191 = vadd.f32 %v4148, %v4190
    %v4192 = vpop.f32.mrb[0].mxu0
    %v4193 = vadd.f32 %v4150, %v4192
    %v4194 = vpop.f32.mrb[0].mxu0
    %v4195 = vadd.f32 %v4152, %v4194
    %4196 = vdwg.mxu0
    %4197 = vmatprep.subr.bf16.mxu0 %v2703
    %4198 = vmatpush1.bf16.msra.mxu0 %v2702
    %4199 = vmatprep.subr.bf16.mxu0 %v2707
    %4200 = vmatpush1.bf16.msra.mxu0 %v2706
    %4201 = vmatprep.subr.bf16.mxu0 %v2711
    %4202 = vmatpush1.bf16.msra.mxu0 %v2710
    %4203 = vmatprep.subr.bf16.mxu0 %v2715
    %4204 = vmatpush1.bf16.msra.mxu0 %v2714
    %4205 = vmatprep.subr.bf16.mxu0 %v2719
    %4206 = vmatpush1.bf16.msra.mxu0 %v2718
    %4207 = vmatprep.subr.bf16.mxu0 %v2723
    %4208 = vmatpush1.bf16.msra.mxu0 %v2722
    %4209 = vmatprep.subr.bf16.mxu0 %v2727
    %4210 = vmatpush1.bf16.msra.mxu0 %v2726
    %4211 = vmatprep.subr.bf16.mxu0 %v2731
    %4212 = vmatpush1.bf16.msra.mxu0 %v2730
    %4213 = vmatprep.subr.bf16.mxu0 %v2735
    %4214 = vmatpush1.bf16.msra.mxu0 %v2734
    %4215 = vmatprep.subr.bf16.mxu0 %v2739
    %4216 = vmatpush1.bf16.msra.mxu0 %v2738
    %4217 = vmatprep.subr.bf16.mxu0 %v2743
    %4218 = vmatpush1.bf16.msra.mxu0 %v2742
    %4219 = vmatprep.subr.bf16.mxu0 %v2747
    %4220 = vmatpush1.bf16.msra.mxu0 %v2746
    %4221 = vmatprep.subr.bf16.mxu0 %v2751
    %4222 = vmatpush1.bf16.msra.mxu0 %v2750
    %4223 = vmatprep.subr.bf16.mxu0 %v2755
    %4224 = vmatpush1.bf16.msra.mxu0 %v2754
    %4225 = vmatprep.subr.bf16.mxu0 %v2759
    %4226 = vmatpush1.bf16.msra.mxu0 %v2758
    %4227 = vmatprep.subr.bf16.mxu0 %v2763
    %4228 = vmatpush1.bf16.msra.mxu0 %v2762
    %4229 = vmatprep.mubr.bf16.mxu0 %v813
    %4230 = vmatmul.mubr.bf16.gmra.mrb[0].mxu0 %v812
    %v4231 = vpop.f32.mrb[0].mxu0
    %v4232 = vadd.f32 %v4189, %v4231
    %v4233 = vpop.f32.mrb[0].mxu0
    %v4234 = vadd.f32 %v4191, %v4233
    %v4235 = vpop.f32.mrb[0].mxu0
    %v4236 = vadd.f32 %v4193, %v4235
    %v4237 = vpop.f32.mrb[0].mxu0
    %v4238 = vadd.f32 %v4195, %v4237
    %4239 = vdwg.mxu0
    %4240 = vmatprep.subr.bf16.mxu0 %v2767
    %4241 = vmatpush1.bf16.msra.mxu0 %v2766
    %4242 = vmatprep.subr.bf16.mxu0 %v2771
    %4243 = vmatpush1.bf16.msra.mxu0 %v2770
    %4244 = vmatprep.subr.bf16.mxu0 %v2775
    %4245 = vmatpush1.bf16.msra.mxu0 %v2774
    %4246 = vmatprep.subr.bf16.mxu0 %v2779
    %4247 = vmatpush1.bf16.msra.mxu0 %v2778
    %4248 = vmatprep.subr.bf16.mxu0 %v2783
    %4249 = vmatpush1.bf16.msra.mxu0 %v2782
    %4250 = vmatprep.subr.bf16.mxu0 %v2787
    %4251 = vmatpush1.bf16.msra.mxu0 %v2786
    %4252 = vmatprep.subr.bf16.mxu0 %v2791
    %4253 = vmatpush1.bf16.msra.mxu0 %v2790
    %4254 = vmatprep.subr.bf16.mxu0 %v2795
    %4255 = vmatpush1.bf16.msra.mxu0 %v2794
    %4256 = vmatprep.subr.bf16.mxu0 %v2799
    %4257 = vmatpush1.bf16.msra.mxu0 %v2798
    %4258 = vmatprep.subr.bf16.mxu0 %v2803
    %4259 = vmatpush1.bf16.msra.mxu0 %v2802
    %4260 = vmatprep.subr.bf16.mxu0 %v2807
    %4261 = vmatpush1.bf16.msra.mxu0 %v2806
    %4262 = vmatprep.subr.bf16.mxu0 %v2811
    %4263 = vmatpush1.bf16.msra.mxu0 %v2810
    %4264 = vmatprep.subr.bf16.mxu0 %v2815
    %4265 = vmatpush1.bf16.msra.mxu0 %v2814
    %4266 = vmatprep.subr.bf16.mxu0 %v2819
    %4267 = vmatpush1.bf16.msra.mxu0 %v2818
    %4268 = vmatprep.subr.bf16.mxu0 %v2823
    %4269 = vmatpush1.bf16.msra.mxu0 %v2822
    %4270 = vmatprep.subr.bf16.mxu0 %v2827
    %4271 = vmatpush1.bf16.msra.mxu0 %v2826
    %4272 = vmatprep.mubr.bf16.mxu0 %v815
    %4273 = vmatmul.mubr.bf16.gmra.mrb[0].mxu0 %v814
    %v4274 = vpop.f32.mrb[0].mxu0
    %v4275 = vadd.f32 %v4232, %v4274
    %v4276 = vpop.f32.mrb[0].mxu0
    %v4277 = vadd.f32 %v4234, %v4276
    %v4278 = vpop.f32.mrb[0].mxu0
    %v4279 = vadd.f32 %v4236, %v4278
    %v4280 = vpop.f32.mrb[0].mxu0
    %v4281 = vadd.f32 %v4238, %v4280
    %4282 = vdwg.mxu0
    %4283 = vmatprep.subr.bf16.mxu0 %v2831
    %4284 = vmatpush1.bf16.msra.mxu0 %v2830
    %4285 = vmatprep.subr.bf16.mxu0 %v2835
    %4286 = vmatpush1.bf16.msra.mxu0 %v2834
    %4287 = vmatprep.subr.bf16.mxu0 %v2839
    %4288 = vmatpush1.bf16.msra.mxu0 %v2838
    %4289 = vmatprep.subr.bf16.mxu0 %v2843
    %4290 = vmatpush1.bf16.msra.mxu0 %v2842
    %4291 = vmatprep.subr.bf16.mxu0 %v2847
    %4292 = vmatpush1.bf16.msra.mxu0 %v2846
    %4293 = vmatprep.subr.bf16.mxu0 %v2851
    %4294 = vmatpush1.bf16.msra.mxu0 %v2850
    %4295 = vmatprep.subr.bf16.mxu0 %v2855
    %4296 = vmatpush1.bf16.msra.mxu0 %v2854
    %4297 = vmatprep.subr.bf16.mxu0 %v2859
    %4298 = vmatpush1.bf16.msra.mxu0 %v2858
    %4299 = vmatprep.subr.bf16.mxu0 %v2863
    %4300 = vmatpush1.bf16.msra.mxu0 %v2862
    %4301 = vmatprep.subr.bf16.mxu0 %v2867
    %4302 = vmatpush1.bf16.msra.mxu0 %v2866
    %4303 = vmatprep.subr.bf16.mxu0 %v2871
    %4304 = vmatpush1.bf16.msra.mxu0 %v2870
    %4305 = vmatprep.subr.bf16.mxu0 %v2875
    %4306 = vmatpush1.bf16.msra.mxu0 %v2874
    %4307 = vmatprep.subr.bf16.mxu0 %v2879
    %4308 = vmatpush1.bf16.msra.mxu0 %v2878
    %4309 = vmatprep.subr.bf16.mxu0 %v2883
    %4310 = vmatpush1.bf16.msra.mxu0 %v2882
    %4311 = vmatprep.subr.bf16.mxu0 %v2887
    %4312 = vmatpush1.bf16.msra.mxu0 %v2886
    %4313 = vmatprep.subr.bf16.mxu0 %v2891
    %4314 = vmatpush1.bf16.msra.mxu0 %v2890
    %4315 = vmatprep.mubr.bf16.mxu0 %v817
    %4316 = vmatmul.mubr.bf16.gmra.mrb[0].mxu0 %v816
    %v4317 = vpop.f32.mrb[0].mxu0
    %v4318 = vadd.f32 %v4275, %v4317
    %v4319 = vpop.f32.mrb[0].mxu0
    %v4320 = vadd.f32 %v4277, %v4319
    %v4321 = vpop.f32.mrb[0].mxu0
    %v4322 = vadd.f32 %v4279, %v4321
    %v4323 = vpop.f32.mrb[0].mxu0
    %v4324 = vadd.f32 %v4281, %v4323
    %4325 = vdwg.mxu0
    %4326 = vmatprep.subr.bf16.mxu0 %v2895
    %4327 = vmatpush1.bf16.msra.mxu0 %v2894
    %4328 = vmatprep.subr.bf16.mxu0 %v2899
    %4329 = vmatpush1.bf16.msra.mxu0 %v2898
    %4330 = vmatprep.subr.bf16.mxu0 %v2903
    %4331 = vmatpush1.bf16.msra.mxu0 %v2902
    %4332 = vmatprep.subr.bf16.mxu0 %v2907
    %4333 = vmatpush1.bf16.msra.mxu0 %v2906
    %4334 = vmatprep.subr.bf16.mxu0 %v2911
    %4335 = vmatpush1.bf16.msra.mxu0 %v2910
    %4336 = vmatprep.subr.bf16.mxu0 %v2915
    %4337 = vmatpush1.bf16.msra.mxu0 %v2914
    %4338 = vmatprep.subr.bf16.mxu0 %v2919
    %4339 = vmatpush1.bf16.msra.mxu0 %v2918
    %4340 = vmatprep.subr.bf16.mxu0 %v2923
    %4341 = vmatpush1.bf16.msra.mxu0 %v2922
    %4342 = vmatprep.subr.bf16.mxu0 %v2927
    %4343 = vmatpush1.bf16.msra.mxu0 %v2926
    %4344 = vmatprep.subr.bf16.mxu0 %v2931
    %4345 = vmatpush1.bf16.msra.mxu0 %v2930
    %4346 = vmatprep.subr.bf16.mxu0 %v2935
    %4347 = vmatpush1.bf16.msra.mxu0 %v2934
    %4348 = vmatprep.subr.bf16.mxu0 %v2939
    %4349 = vmatpush1.bf16.msra.mxu0 %v2938
    %4350 = vmatprep.subr.bf16.mxu0 %v2943
    %4351 = vmatpush1.bf16.msra.mxu0 %v2942
    %4352 = vmatprep.subr.bf16.mxu0 %v2947
    %4353 = vmatpush1.bf16.msra.mxu0 %v2946
    %4354 = vmatprep.subr.bf16.mxu0 %v2951
    %4355 = vmatpush1.bf16.msra.mxu0 %v2950
    %4356 = vmatprep.subr.bf16.mxu0 %v2955
    %4357 = vmatpush1.bf16.msra.mxu0 %v2954
    %4358 = vmatprep.mubr.bf16.mxu0 %v819
    %4359 = vmatmul.mubr.bf16.gmra.mrb[0].mxu0 %v818
    %v4360 = vpop.f32.mrb[0].mxu0
    %v4361 = vadd.f32 %v4318, %v4360
    %v4362 = vpop.f32.mrb[0].mxu0
    %v4363 = vadd.f32 %v4320, %v4362
    %v4364 = vpop.f32.mrb[0].mxu0
    %v4365 = vadd.f32 %v4322, %v4364
    %v4366 = vpop.f32.mrb[0].mxu0
    %v4367 = vadd.f32 %v4324, %v4366
    %4368 = vdwg.mxu0
    %4369 = vmatprep.subr.bf16.mxu0 %v2959
    %4370 = vmatpush1.bf16.msra.mxu0 %v2958
    %4371 = vmatprep.subr.bf16.mxu0 %v2963
    %4372 = vmatpush1.bf16.msra.mxu0 %v2962
    %4373 = vmatprep.subr.bf16.mxu0 %v2967
    %4374 = vmatpush1.bf16.msra.mxu0 %v2966
    %4375 = vmatprep.subr.bf16.mxu0 %v2971
    %4376 = vmatpush1.bf16.msra.mxu0 %v2970
    %4377 = vmatprep.subr.bf16.mxu0 %v2975
    %4378 = vmatpush1.bf16.msra.mxu0 %v2974
    %4379 = vmatprep.subr.bf16.mxu0 %v2979
    %4380 = vmatpush1.bf16.msra.mxu0 %v2978
    %4381 = vmatprep.subr.bf16.mxu0 %v2983
    %4382 = vmatpush1.bf16.msra.mxu0 %v2982
    %4383 = vmatprep.subr.bf16.mxu0 %v2987
    %4384 = vmatpush1.bf16.msra.mxu0 %v2986
    %4385 = vmatprep.subr.bf16.mxu0 %v2991
    %4386 = vmatpush1.bf16.msra.mxu0 %v2990
    %4387 = vmatprep.subr.bf16.mxu0 %v2995
    %4388 = vmatpush1.bf16.msra.mxu0 %v2994
    %4389 = vmatprep.subr.bf16.mxu0 %v2999
    %4390 = vmatpush1.bf16.msra.mxu0 %v2998
    %4391 = vmatprep.subr.bf16.mxu0 %v3003
    %4392 = vmatpush1.bf16.msra.mxu0 %v3002
    %4393 = vmatprep.subr.bf16.mxu0 %v3007
    %4394 = vmatpush1.bf16.msra.mxu0 %v3006
    %4395 = vmatprep.subr.bf16.mxu0 %v3011
    %4396 = vmatpush1.bf16.msra.mxu0 %v3010
    %4397 = vmatprep.subr.bf16.mxu0 %v3015
    %4398 = vmatpush1.bf16.msra.mxu0 %v3014
    %4399 = vmatprep.subr.bf16.mxu0 %v3019
    %4400 = vmatpush1.bf16.msra.mxu0 %v3018
    %4401 = vmatprep.mubr.bf16.mxu0 %v821
    %4402 = vmatmul.mubr.bf16.gmra.mrb[0].mxu0 %v820
    %v4403 = vpop.f32.mrb[0].mxu0
    %v4404 = vadd.f32 %v4361, %v4403
    %v4405 = vpop.f32.mrb[0].mxu0
    %v4406 = vadd.f32 %v4363, %v4405
    %v4407 = vpop.f32.mrb[0].mxu0
    %v4408 = vadd.f32 %v4365, %v4407
    %v4409 = vpop.f32.mrb[0].mxu0
    %v4410 = vadd.f32 %v4367, %v4409
    %4411 = vdwg.mxu0
    %4412 = vmatprep.subr.bf16.mxu0 %v3023
    %4413 = vmatpush1.bf16.msra.mxu0 %v3022
    %4414 = vmatprep.subr.bf16.mxu0 %v3027
    %4415 = vmatpush1.bf16.msra.mxu0 %v3026
    %4416 = vmatprep.subr.bf16.mxu0 %v3031
    %4417 = vmatpush1.bf16.msra.mxu0 %v3030
    %4418 = vmatprep.subr.bf16.mxu0 %v3035
    %4419 = vmatpush1.bf16.msra.mxu0 %v3034
    %4420 = vmatprep.subr.bf16.mxu0 %v3039
    %4421 = vmatpush1.bf16.msra.mxu0 %v3038
    %4422 = vmatprep.subr.bf16.mxu0 %v3043
    %4423 = vmatpush1.bf16.msra.mxu0 %v3042
    %4424 = vmatprep.subr.bf16.mxu0 %v3047
    %4425 = vmatpush1.bf16.msra.mxu0 %v3046
    %4426 = vmatprep.subr.bf16.mxu0 %v3051
    %4427 = vmatpush1.bf16.msra.mxu0 %v3050
    %4428 = vmatprep.subr.bf16.mxu0 %v3055
    %4429 = vmatpush1.bf16.msra.mxu0 %v3054
    %4430 = vmatprep.subr.bf16.mxu0 %v3059
    %4431 = vmatpush1.bf16.msra.mxu0 %v3058
    %4432 = vmatprep.subr.bf16.mxu0 %v3063
    %4433 = vmatpush1.bf16.msra.mxu0 %v3062
    %4434 = vmatprep.subr.bf16.mxu0 %v3067
    %4435 = vmatpush1.bf16.msra.mxu0 %v3066
    %4436 = vmatprep.subr.bf16.mxu0 %v3071
    %4437 = vmatpush1.bf16.msra.mxu0 %v3070
    %4438 = vmatprep.subr.bf16.mxu0 %v3075
    %4439 = vmatpush1.bf16.msra.mxu0 %v3074
    %4440 = vmatprep.subr.bf16.mxu0 %v3079
    %4441 = vmatpush1.bf16.msra.mxu0 %v3078
    %4442 = vmatprep.subr.bf16.mxu0 %v3083
    %4443 = vmatpush1.bf16.msra.mxu0 %v3082
    %4444 = vmatprep.mubr.bf16.mxu0 %v823
    %4445 = vmatmul.mubr.bf16.gmra.mrb[0].mxu0 %v822
    %v4446 = vpop.f32.mrb[0].mxu0
    %v4447 = vadd.f32 %v4404, %v4446
    %v4448 = vpop.f32.mrb[0].mxu0
    %v4449 = vadd.f32 %v4406, %v4448
    %v4450 = vpop.f32.mrb[0].mxu0
    %v4451 = vadd.f32 %v4408, %v4450
    %v4452 = vpop.f32.mrb[0].mxu0
    %v4453 = vadd.f32 %v4410, %v4452
    %4454 = vdwg.mxu0
    %4455 = vmatprep.subr.bf16.mxu0 %v3087
    %4456 = vmatpush1.bf16.msra.mxu0 %v3086
    %4457 = vmatprep.subr.bf16.mxu0 %v3091
    %4458 = vmatpush1.bf16.msra.mxu0 %v3090
    %4459 = vmatprep.subr.bf16.mxu0 %v3095
    %4460 = vmatpush1.bf16.msra.mxu0 %v3094
    %4461 = vmatprep.subr.bf16.mxu0 %v3099
    %4462 = vmatpush1.bf16.msra.mxu0 %v3098
    %4463 = vmatprep.subr.bf16.mxu0 %v3103
    %4464 = vmatpush1.bf16.msra.mxu0 %v3102
    %4465 = vmatprep.subr.bf16.mxu0 %v3107
    %4466 = vmatpush1.bf16.msra.mxu0 %v3106
    %4467 = vmatprep.subr.bf16.mxu0 %v3111
    %4468 = vmatpush1.bf16.msra.mxu0 %v3110
    %4469 = vmatprep.subr.bf16.mxu0 %v3115
    %4470 = vmatpush1.bf16.msra.mxu0 %v3114
    %4471 = vmatprep.subr.bf16.mxu0 %v3119
    %4472 = vmatpush1.bf16.msra.mxu0 %v3118
    %4473 = vmatprep.subr.bf16.mxu0 %v3123
    %4474 = vmatpush1.bf16.msra.mxu0 %v3122
    %4475 = vmatprep.subr.bf16.mxu0 %v3127
    %4476 = vmatpush1.bf16.msra.mxu0 %v3126
    %4477 = vmatprep.subr.bf16.mxu0 %v3131
    %4478 = vmatpush1.bf16.msra.mxu0 %v3130
    %4479 = vmatprep.subr.bf16.mxu0 %v3135
    %4480 = vmatpush1.bf16.msra.mxu0 %v3134
    %4481 = vmatprep.subr.bf16.mxu0 %v3139
    %4482 = vmatpush1.bf16.msra.mxu0 %v3138
    %4483 = vmatprep.subr.bf16.mxu0 %v3143
    %4484 = vmatpush1.bf16.msra.mxu0 %v3142
    %4485 = vmatprep.subr.bf16.mxu0 %v3147
    %4486 = vmatpush1.bf16.msra.mxu0 %v3146
    %4487 = vmatprep.mubr.bf16.mxu0 %v825
    %4488 = vmatmul.mubr.bf16.gmra.mrb[0].mxu0 %v824
    %v4489 = vpop.f32.mrb[0].mxu0
    %v4490 = vadd.f32 %v4447, %v4489
    %v4491 = vpop.f32.mrb[0].mxu0
    %v4492 = vadd.f32 %v4449, %v4491
    %v4493 = vpop.f32.mrb[0].mxu0
    %v4494 = vadd.f32 %v4451, %v4493
    %v4495 = vpop.f32.mrb[0].mxu0
    %v4496 = vadd.f32 %v4453, %v4495
    %4497 = vdwg.mxu0
    %v4498 = vmax.f32 %v4103, 0.0
    %v4499 = vmax.f32 %v4105, 0.0
    %v4500 = vmax.f32 %v4490, 0.0
    %v4501 = vmax.f32 %v4492, 0.0
    %v4502 = vmax.f32 %v4107, 0.0
    %v4503 = vmax.f32 %v4109, 0.0
    %v4504 = vmax.f32 %v4494, 0.0
    %v4505 = vmax.f32 %v4496, 0.0
    %v4506 = vpack.c.bf16 %v4502, %v4498
    %v4507 = vpack.c.bf16 %v4503, %v4499
    %v4508 = vpack.c.bf16 %v4504, %v4500
    %v4509 = vpack.c.bf16 %v4505, %v4501
    %v4510 = vld [vmem:[#allocation7] sm:$0xff]
    %v4511 = vld [vmem:[#allocation7 + $0x8] sm:$0xff]
    %v4512 = vld [vmem:[#allocation7 + $0x10] sm:$0xff]
    %v4513 = vld [vmem:[#allocation7 + $0x18] sm:$0xff]
    %v4514 = vld [vmem:[#allocation7 + $0x20] sm:$0xff]
    %v4515 = vld [vmem:[#allocation7 + $0x28] sm:$0xff]
    %v4516 = vld [vmem:[#allocation7 + $0x30] sm:$0xff]
    %v4517 = vld [vmem:[#allocation7 + $0x38] sm:$0xff]
    %v4518 = vld [vmem:[#allocation7 + $0x40] sm:$0xff]
    %v4519 = vld [vmem:[#allocation7 + $0x48] sm:$0xff]
    %v4520 = vld [vmem:[#allocation7 + $0x50] sm:$0xff]
    %v4521 = vld [vmem:[#allocation7 + $0x58] sm:$0xff]
    %v4522 = vld [vmem:[#allocation7 + $0x60] sm:$0xff]
    %v4523 = vld [vmem:[#allocation7 + $0x68] sm:$0xff]
    %v4524 = vld [vmem:[#allocation7 + $0x70] sm:$0xff]
    %v4525 = vld [vmem:[#allocation7 + $0x78] sm:$0xff]
    %v4526 = vld [vmem:[#allocation7 + $0x80] sm:$0xff]
    %v4527 = vld [vmem:[#allocation7 + $0x88] sm:$0xff]
    %v4528 = vld [vmem:[#allocation7 + $0x90] sm:$0xff]
    %v4529 = vld [vmem:[#allocation7 + $0x98] sm:$0xff]
    %v4530 = vld [vmem:[#allocation7 + $0xa0] sm:$0xff]
    %v4531 = vld [vmem:[#allocation7 + $0xa8] sm:$0xff]
    %v4532 = vld [vmem:[#allocation7 + $0xb0] sm:$0xff]
    %v4533 = vld [vmem:[#allocation7 + $0xb8] sm:$0xff]
    %v4534 = vld [vmem:[#allocation7 + $0xc0] sm:$0xff]
    %v4535 = vld [vmem:[#allocation7 + $0xc8] sm:$0xff]
    %v4536 = vld [vmem:[#allocation7 + $0xd0] sm:$0xff]
    %v4537 = vld [vmem:[#allocation7 + $0xd8] sm:$0xff]
    %v4538 = vld [vmem:[#allocation7 + $0xe0] sm:$0xff]
    %v4539 = vld [vmem:[#allocation7 + $0xe8] sm:$0xff]
    %v4540 = vld [vmem:[#allocation7 + $0xf0] sm:$0xff]
    %v4541 = vld [vmem:[#allocation7 + $0xf8] sm:$0xff]
    %v4542 = vld [vmem:[#allocation7 + $0x100] sm:$0xff]
    %v4543 = vld [vmem:[#allocation7 + $0x108] sm:$0xff]
    %v4544 = vld [vmem:[#allocation7 + $0x110] sm:$0xff]
    %v4545 = vld [vmem:[#allocation7 + $0x118] sm:$0xff]
    %v4546 = vld [vmem:[#allocation7 + $0x120] sm:$0xff]
    %v4547 = vld [vmem:[#allocation7 + $0x128] sm:$0xff]
    %v4548 = vld [vmem:[#allocation7 + $0x130] sm:$0xff]
    %v4549 = vld [vmem:[#allocation7 + $0x138] sm:$0xff]
    %v4550 = vld [vmem:[#allocation7 + $0x140] sm:$0xff]
    %v4551 = vld [vmem:[#allocation7 + $0x148] sm:$0xff]
    %v4552 = vld [vmem:[#allocation7 + $0x150] sm:$0xff]
    %v4553 = vld [vmem:[#allocation7 + $0x158] sm:$0xff]
    %v4554 = vld [vmem:[#allocation7 + $0x160] sm:$0xff]
    %v4555 = vld [vmem:[#allocation7 + $0x168] sm:$0xff]
    %v4556 = vld [vmem:[#allocation7 + $0x170] sm:$0xff]
    %v4557 = vld [vmem:[#allocation7 + $0x178] sm:$0xff]
    %v4558 = vld [vmem:[#allocation7 + $0x180] sm:$0xff]
    %v4559 = vld [vmem:[#allocation7 + $0x188] sm:$0xff]
    %v4560 = vld [vmem:[#allocation7 + $0x190] sm:$0xff]
    %v4561 = vld [vmem:[#allocation7 + $0x198] sm:$0xff]
    %v4562 = vld [vmem:[#allocation7 + $0x1a0] sm:$0xff]
    %v4563 = vld [vmem:[#allocation7 + $0x1a8] sm:$0xff]
    %v4564 = vld [vmem:[#allocation7 + $0x1b0] sm:$0xff]
    %v4565 = vld [vmem:[#allocation7 + $0x1b8] sm:$0xff]
    %v4566 = vld [vmem:[#allocation7 + $0x1c0] sm:$0xff]
    %v4567 = vld [vmem:[#allocation7 + $0x1c8] sm:$0xff]
    %v4568 = vld [vmem:[#allocation7 + $0x1d0] sm:$0xff]
    %v4569 = vld [vmem:[#allocation7 + $0x1d8] sm:$0xff]
    %v4570 = vld [vmem:[#allocation7 + $0x1e0] sm:$0xff]
    %v4571 = vld [vmem:[#allocation7 + $0x1e8] sm:$0xff]
    %v4572 = vld [vmem:[#allocation7 + $0x1f0] sm:$0xff]
    %v4573 = vld [vmem:[#allocation7 + $0x1f8] sm:$0xff]
    %s4574 = scalar_lea.vmem [#allocation14], 1
    %v4575 = vld [vmem:[%s4574] ss:$8 sm:$0x3]
    %v4577 = vlaneseq
    %v4578 = vshrl.u32 %v4577, 7
    %v4579 = vsub.s32 0, %v4578
    %v4580 = vrot.slane %v4575, %v4579
    %v4581 = vlaneseq
    %v4582 = vshrl.u32 %v4581, 7
    %v4583 = vsub.s32 1, %v4582
    %v4584 = vrot.slane %v4575, %v4583
    %v4651 = vunpack.c.l.b16 %v4510
    %v4652 = vunpack.c.h.b16 %v4510
    %v4653 = vunpack.c.l.b16 %v4511
    %v4654 = vunpack.c.h.b16 %v4511
    %v4655 = vunpack.c.l.b16 %v4512
    %v4656 = vunpack.c.h.b16 %v4512
    %v4657 = vunpack.c.l.b16 %v4513
    %v4658 = vunpack.c.h.b16 %v4513
    %v4659 = vunpack.c.l.b16 %v4514
    %v4660 = vunpack.c.h.b16 %v4514
    %v4661 = vunpack.c.l.b16 %v4515
    %v4662 = vunpack.c.h.b16 %v4515
    %v4663 = vunpack.c.l.b16 %v4516
    %v4664 = vunpack.c.h.b16 %v4516
    %v4665 = vunpack.c.l.b16 %v4517
    %v4666 = vunpack.c.h.b16 %v4517
    %v4667 = vunpack.c.l.b16 %v4518
    %v4668 = vunpack.c.h.b16 %v4518
    %v4669 = vunpack.c.l.b16 %v4519
    %v4670 = vunpack.c.h.b16 %v4519
    %v4671 = vunpack.c.l.b16 %v4520
    %v4672 = vunpack.c.h.b16 %v4520
    %v4673 = vunpack.c.l.b16 %v4521
    %v4674 = vunpack.c.h.b16 %v4521
    %v4675 = vunpack.c.l.b16 %v4522
    %v4676 = vunpack.c.h.b16 %v4522
    %v4677 = vunpack.c.l.b16 %v4523
    %v4678 = vunpack.c.h.b16 %v4523
    %v4679 = vunpack.c.l.b16 %v4524
    %v4680 = vunpack.c.h.b16 %v4524
    %v4681 = vunpack.c.l.b16 %v4525
    %v4682 = vunpack.c.h.b16 %v4525
    %v4683 = vunpack.c.l.b16 %v4526
    %v4684 = vunpack.c.h.b16 %v4526
    %v4685 = vunpack.c.l.b16 %v4527
    %v4686 = vunpack.c.h.b16 %v4527
    %v4687 = vunpack.c.l.b16 %v4528
    %v4688 = vunpack.c.h.b16 %v4528
    %v4689 = vunpack.c.l.b16 %v4529
    %v4690 = vunpack.c.h.b16 %v4529
    %v4691 = vunpack.c.l.b16 %v4530
    %v4692 = vunpack.c.h.b16 %v4530
    %v4693 = vunpack.c.l.b16 %v4531
    %v4694 = vunpack.c.h.b16 %v4531
    %v4695 = vunpack.c.l.b16 %v4532
    %v4696 = vunpack.c.h.b16 %v4532
    %v4697 = vunpack.c.l.b16 %v4533
    %v4698 = vunpack.c.h.b16 %v4533
    %v4699 = vunpack.c.l.b16 %v4534
    %v4700 = vunpack.c.h.b16 %v4534
    %v4701 = vunpack.c.l.b16 %v4535
    %v4702 = vunpack.c.h.b16 %v4535
    %v4703 = vunpack.c.l.b16 %v4536
    %v4704 = vunpack.c.h.b16 %v4536
    %v4705 = vunpack.c.l.b16 %v4537
    %v4706 = vunpack.c.h.b16 %v4537
    %v4707 = vunpack.c.l.b16 %v4538
    %v4708 = vunpack.c.h.b16 %v4538
    %v4709 = vunpack.c.l.b16 %v4539
    %v4710 = vunpack.c.h.b16 %v4539
    %v4711 = vunpack.c.l.b16 %v4540
    %v4712 = vunpack.c.h.b16 %v4540
    %v4713 = vunpack.c.l.b16 %v4541
    %v4714 = vunpack.c.h.b16 %v4541
    %v4715 = vunpack.c.l.b16 %v4542
    %v4716 = vunpack.c.h.b16 %v4542
    %v4717 = vunpack.c.l.b16 %v4543
    %v4718 = vunpack.c.h.b16 %v4543
    %v4719 = vunpack.c.l.b16 %v4544
    %v4720 = vunpack.c.h.b16 %v4544
    %v4721 = vunpack.c.l.b16 %v4545
    %v4722 = vunpack.c.h.b16 %v4545
    %v4723 = vunpack.c.l.b16 %v4546
    %v4724 = vunpack.c.h.b16 %v4546
    %v4725 = vunpack.c.l.b16 %v4547
    %v4726 = vunpack.c.h.b16 %v4547
    %v4727 = vunpack.c.l.b16 %v4548
    %v4728 = vunpack.c.h.b16 %v4548
    %v4729 = vunpack.c.l.b16 %v4549
    %v4730 = vunpack.c.h.b16 %v4549
    %v4731 = vunpack.c.l.b16 %v4550
    %v4732 = vunpack.c.h.b16 %v4550
    %v4733 = vunpack.c.l.b16 %v4551
    %v4734 = vunpack.c.h.b16 %v4551
    %v4735 = vunpack.c.l.b16 %v4552
    %v4736 = vunpack.c.h.b16 %v4552
    %v4737 = vunpack.c.l.b16 %v4553
    %v4738 = vunpack.c.h.b16 %v4553
    %v4739 = vunpack.c.l.b16 %v4554
    %v4740 = vunpack.c.h.b16 %v4554
    %v4741 = vunpack.c.l.b16 %v4555
    %v4742 = vunpack.c.h.b16 %v4555
    %v4743 = vunpack.c.l.b16 %v4556
    %v4744 = vunpack.c.h.b16 %v4556
    %v4745 = vunpack.c.l.b16 %v4557
    %v4746 = vunpack.c.h.b16 %v4557
    %v4747 = vunpack.c.l.b16 %v4558
    %v4748 = vunpack.c.h.b16 %v4558
    %v4749 = vunpack.c.l.b16 %v4559
    %v4750 = vunpack.c.h.b16 %v4559
    %v4751 = vunpack.c.l.b16 %v4560
    %v4752 = vunpack.c.h.b16 %v4560
    %v4753 = vunpack.c.l.b16 %v4561
    %v4754 = vunpack.c.h.b16 %v4561
    %v4755 = vunpack.c.l.b16 %v4562
    %v4756 = vunpack.c.h.b16 %v4562
    %v4757 = vunpack.c.l.b16 %v4563
    %v4758 = vunpack.c.h.b16 %v4563
    %v4759 = vunpack.c.l.b16 %v4564
    %v4760 = vunpack.c.h.b16 %v4564
    %v4761 = vunpack.c.l.b16 %v4565
    %v4762 = vunpack.c.h.b16 %v4565
    %v4763 = vunpack.c.l.b16 %v4566
    %v4764 = vunpack.c.h.b16 %v4566
    %v4765 = vunpack.c.l.b16 %v4567
    %v4766 = vunpack.c.h.b16 %v4567
    %v4767 = vunpack.c.l.b16 %v4568
    %v4768 = vunpack.c.h.b16 %v4568
    %v4769 = vunpack.c.l.b16 %v4569
    %v4770 = vunpack.c.h.b16 %v4569
    %v4771 = vunpack.c.l.b16 %v4570
    %v4772 = vunpack.c.h.b16 %v4570
    %v4773 = vunpack.c.l.b16 %v4571
    %v4774 = vunpack.c.h.b16 %v4571
    %v4775 = vunpack.c.l.b16 %v4572
    %v4776 = vunpack.c.h.b16 %v4572
    %v4777 = vunpack.c.l.b16 %v4573
    %v4778 = vunpack.c.h.b16 %v4573
    %v4779 = vpack.c.b16 %v4653, %v4651
    %v4780 = vpack.c.b16 %v4654, %v4652
    %v4781 = vpack.c.b16 %v4657, %v4655
    %v4782 = vpack.c.b16 %v4658, %v4656
    %v4783 = vpack.c.b16 %v4661, %v4659
    %v4784 = vpack.c.b16 %v4662, %v4660
    %v4785 = vpack.c.b16 %v4665, %v4663
    %v4786 = vpack.c.b16 %v4666, %v4664
    %v4787 = vpack.c.b16 %v4669, %v4667
    %v4788 = vpack.c.b16 %v4670, %v4668
    %v4789 = vpack.c.b16 %v4673, %v4671
    %v4790 = vpack.c.b16 %v4674, %v4672
    %v4791 = vpack.c.b16 %v4677, %v4675
    %v4792 = vpack.c.b16 %v4678, %v4676
    %v4793 = vpack.c.b16 %v4681, %v4679
    %v4794 = vpack.c.b16 %v4682, %v4680
    %v4795 = vpack.c.b16 %v4685, %v4683
    %v4796 = vpack.c.b16 %v4686, %v4684
    %v4797 = vpack.c.b16 %v4689, %v4687
    %v4798 = vpack.c.b16 %v4690, %v4688
    %v4799 = vpack.c.b16 %v4693, %v4691
    %v4800 = vpack.c.b16 %v4694, %v4692
    %v4801 = vpack.c.b16 %v4697, %v4695
    %v4802 = vpack.c.b16 %v4698, %v4696
    %v4803 = vpack.c.b16 %v4701, %v4699
    %v4804 = vpack.c.b16 %v4702, %v4700
    %v4805 = vpack.c.b16 %v4705, %v4703
    %v4806 = vpack.c.b16 %v4706, %v4704
    %v4807 = vpack.c.b16 %v4709, %v4707
    %v4808 = vpack.c.b16 %v4710, %v4708
    %v4809 = vpack.c.b16 %v4713, %v4711
    %v4810 = vpack.c.b16 %v4714, %v4712
    %v4811 = vpack.c.b16 %v4717, %v4715
    %v4812 = vpack.c.b16 %v4718, %v4716
    %v4813 = vpack.c.b16 %v4721, %v4719
    %v4814 = vpack.c.b16 %v4722, %v4720
    %v4815 = vpack.c.b16 %v4725, %v4723
    %v4816 = vpack.c.b16 %v4726, %v4724
    %v4817 = vpack.c.b16 %v4729, %v4727
    %v4818 = vpack.c.b16 %v4730, %v4728
    %v4819 = vpack.c.b16 %v4733, %v4731
    %v4820 = vpack.c.b16 %v4734, %v4732
    %v4821 = vpack.c.b16 %v4737, %v4735
    %v4822 = vpack.c.b16 %v4738, %v4736
    %v4823 = vpack.c.b16 %v4741, %v4739
    %v4824 = vpack.c.b16 %v4742, %v4740
    %v4825 = vpack.c.b16 %v4745, %v4743
    %v4826 = vpack.c.b16 %v4746, %v4744
    %v4827 = vpack.c.b16 %v4749, %v4747
    %v4828 = vpack.c.b16 %v4750, %v4748
    %v4829 = vpack.c.b16 %v4753, %v4751
    %v4830 = vpack.c.b16 %v4754, %v4752
    %v4831 = vpack.c.b16 %v4757, %v4755
    %v4832 = vpack.c.b16 %v4758, %v4756
    %v4833 = vpack.c.b16 %v4761, %v4759
    %v4834 = vpack.c.b16 %v4762, %v4760
    %v4835 = vpack.c.b16 %v4765, %v4763
    %v4836 = vpack.c.b16 %v4766, %v4764
    %v4837 = vpack.c.b16 %v4769, %v4767
    %v4838 = vpack.c.b16 %v4770, %v4768
    %v4839 = vpack.c.b16 %v4773, %v4771
    %v4840 = vpack.c.b16 %v4774, %v4772
    %v4841 = vpack.c.b16 %v4777, %v4775
    %v4842 = vpack.c.b16 %v4778, %v4776
    %4907 = vmatprep.subr.bf16.mxu0 %v4780
    %4908 = vmatpush1.bf16.msra.mxu0 %v4779
    %4909 = vmatprep.subr.bf16.mxu0 %v4782
    %4910 = vmatpush1.bf16.msra.mxu0 %v4781
    %4911 = vmatprep.subr.bf16.mxu0 %v4784
    %4912 = vmatpush1.bf16.msra.mxu0 %v4783
    %4913 = vmatprep.subr.bf16.mxu0 %v4786
    %4914 = vmatpush1.bf16.msra.mxu0 %v4785
    %4915 = vmatprep.subr.bf16.mxu0 %v4788
    %4916 = vmatpush1.bf16.msra.mxu0 %v4787
    %4917 = vmatprep.subr.bf16.mxu0 %v4790
    %4918 = vmatpush1.bf16.msra.mxu0 %v4789
    %4919 = vmatprep.subr.bf16.mxu0 %v4792
    %4920 = vmatpush1.bf16.msra.mxu0 %v4791
    %4921 = vmatprep.subr.bf16.mxu0 %v4794
    %4922 = vmatpush1.bf16.msra.mxu0 %v4793
    %4923 = vmatprep.subr.bf16.mxu0 %v4796
    %4924 = vmatpush1.bf16.msra.mxu0 %v4795
    %4925 = vmatprep.subr.bf16.mxu0 %v4798
    %4926 = vmatpush1.bf16.msra.mxu0 %v4797
    %4927 = vmatprep.subr.bf16.mxu0 %v4800
    %4928 = vmatpush1.bf16.msra.mxu0 %v4799
    %4929 = vmatprep.subr.bf16.mxu0 %v4802
    %4930 = vmatpush1.bf16.msra.mxu0 %v4801
    %4931 = vmatprep.subr.bf16.mxu0 %v4804
    %4932 = vmatpush1.bf16.msra.mxu0 %v4803
    %4933 = vmatprep.subr.bf16.mxu0 %v4806
    %4934 = vmatpush1.bf16.msra.mxu0 %v4805
    %4935 = vmatprep.subr.bf16.mxu0 %v4808
    %4936 = vmatpush1.bf16.msra.mxu0 %v4807
    %4937 = vmatprep.subr.bf16.mxu0 %v4810
    %4938 = vmatpush1.bf16.msra.mxu0 %v4809
    %4939 = vmatprep.mubr.bf16.mxu0 %v4507
    %4940 = vmatmul.mubr.bf16.gmra.mrb[0].mxu0 %v4506
    %v4941 = vpop.f32.mrb[0].mxu0
    %v4942 = vadd.f32 %v4580, %v4941
    %v4943 = vpop.f32.mrb[0].mxu0
    %v4944 = vadd.f32 %v4584, %v4943
    %v4945 = vpop.f32.mrb[0].mxu0
    %v4946 = vadd.f32 %v4580, %v4945
    %v4947 = vpop.f32.mrb[0].mxu0
    %v4948 = vadd.f32 %v4584, %v4947
    %4949 = vdwg.mxu0
    %4950 = vmatprep.subr.bf16.mxu0 %v4812
    %4951 = vmatpush1.bf16.msra.mxu0 %v4811
    %4952 = vmatprep.subr.bf16.mxu0 %v4814
    %4953 = vmatpush1.bf16.msra.mxu0 %v4813
    %4954 = vmatprep.subr.bf16.mxu0 %v4816
    %4955 = vmatpush1.bf16.msra.mxu0 %v4815
    %4956 = vmatprep.subr.bf16.mxu0 %v4818
    %4957 = vmatpush1.bf16.msra.mxu0 %v4817
    %4958 = vmatprep.subr.bf16.mxu0 %v4820
    %4959 = vmatpush1.bf16.msra.mxu0 %v4819
    %4960 = vmatprep.subr.bf16.mxu0 %v4822
    %4961 = vmatpush1.bf16.msra.mxu0 %v4821
    %4962 = vmatprep.subr.bf16.mxu0 %v4824
    %4963 = vmatpush1.bf16.msra.mxu0 %v4823
    %4964 = vmatprep.subr.bf16.mxu0 %v4826
    %4965 = vmatpush1.bf16.msra.mxu0 %v4825
    %4966 = vmatprep.subr.bf16.mxu0 %v4828
    %4967 = vmatpush1.bf16.msra.mxu0 %v4827
    %4968 = vmatprep.subr.bf16.mxu0 %v4830
    %4969 = vmatpush1.bf16.msra.mxu0 %v4829
    %4970 = vmatprep.subr.bf16.mxu0 %v4832
    %4971 = vmatpush1.bf16.msra.mxu0 %v4831
    %4972 = vmatprep.subr.bf16.mxu0 %v4834
    %4973 = vmatpush1.bf16.msra.mxu0 %v4833
    %4974 = vmatprep.subr.bf16.mxu0 %v4836
    %4975 = vmatpush1.bf16.msra.mxu0 %v4835
    %4976 = vmatprep.subr.bf16.mxu0 %v4838
    %4977 = vmatpush1.bf16.msra.mxu0 %v4837
    %4978 = vmatprep.subr.bf16.mxu0 %v4840
    %4979 = vmatpush1.bf16.msra.mxu0 %v4839
    %4980 = vmatprep.subr.bf16.mxu0 %v4842
    %4981 = vmatpush1.bf16.msra.mxu0 %v4841
    %4982 = vmatprep.mubr.bf16.mxu0 %v4509
    %4983 = vmatmul.mubr.bf16.gmra.mrb[0].mxu0 %v4508
    %v4984 = vpop.f32.mrb[0].mxu0
    %v4985 = vadd.f32 %v4942, %v4984
    %v4986 = vpop.f32.mrb[0].mxu0
    %v4987 = vadd.f32 %v4944, %v4986
    %v4988 = vpop.f32.mrb[0].mxu0
    %v4989 = vadd.f32 %v4946, %v4988
    %v4990 = vpop.f32.mrb[0].mxu0
    %v4991 = vadd.f32 %v4948, %v4990
    %4992 = vdwg.mxu0
    %v4993 = vmax.f32 %v4985, 0.0
    %v4994 = vmax.f32 %v4987, 0.0
    %v4995 = vmax.f32 %v4989, 0.0
    %v4996 = vmax.f32 %v4991, 0.0
    %v4997 = vpack.c.bf16 %v4995, %v4993
    %v4998 = vpack.c.bf16 %v4996, %v4994
    %v4999 = vld [vmem:[#allocation8] sm:$0xf]
    %v5000 = vld [vmem:[#allocation8 + $0x4] sm:$0xf]
    %v5001 = vld [vmem:[#allocation8 + $0x8] sm:$0xf]
    %v5002 = vld [vmem:[#allocation8 + $0xc] sm:$0xf]
    %v5003 = vld [vmem:[#allocation8 + $0x10] sm:$0xf]
    %v5004 = vld [vmem:[#allocation8 + $0x14] sm:$0xf]
    %v5005 = vld [vmem:[#allocation8 + $0x18] sm:$0xf]
    %v5006 = vld [vmem:[#allocation8 + $0x1c] sm:$0xf]
    %v5007 = vld [vmem:[#allocation8 + $0x20] sm:$0xf]
    %v5008 = vld [vmem:[#allocation8 + $0x24] sm:$0xf]
    %v5009 = vld [vmem:[#allocation8 + $0x28] sm:$0xf]
    %v5010 = vld [vmem:[#allocation8 + $0x2c] sm:$0xf]
    %v5011 = vld [vmem:[#allocation8 + $0x30] sm:$0xf]
    %v5012 = vld [vmem:[#allocation8 + $0x34] sm:$0xf]
    %v5013 = vld [vmem:[#allocation8 + $0x38] sm:$0xf]
    %v5014 = vld [vmem:[#allocation8 + $0x3c] sm:$0xf]
    %v5015 = vld [vmem:[#allocation8 + $0x40] sm:$0xf]
    %v5016 = vld [vmem:[#allocation8 + $0x44] sm:$0xf]
    %v5017 = vld [vmem:[#allocation8 + $0x48] sm:$0xf]
    %v5018 = vld [vmem:[#allocation8 + $0x4c] sm:$0xf]
    %v5019 = vld [vmem:[#allocation8 + $0x50] sm:$0xf]
    %v5020 = vld [vmem:[#allocation8 + $0x54] sm:$0xf]
    %v5021 = vld [vmem:[#allocation8 + $0x58] sm:$0xf]
    %v5022 = vld [vmem:[#allocation8 + $0x5c] sm:$0xf]
    %v5023 = vld [vmem:[#allocation8 + $0x60] sm:$0xf]
    %v5024 = vld [vmem:[#allocation8 + $0x64] sm:$0xf]
    %v5025 = vld [vmem:[#allocation8 + $0x68] sm:$0xf]
    %v5026 = vld [vmem:[#allocation8 + $0x6c] sm:$0xf]
    %v5027 = vld [vmem:[#allocation8 + $0x70] sm:$0xf]
    %v5028 = vld [vmem:[#allocation8 + $0x74] sm:$0xf]
    %v5029 = vld [vmem:[#allocation8 + $0x78] sm:$0xf]
    %v5030 = vld [vmem:[#allocation8 + $0x7c] sm:$0xf]
    %v5031 = vld [vmem:[#allocation14 + $0x2] ss:$0 sm:$0xff]
    %v5064 = vunpack.c.l.b16 %v4999
    %v5065 = vunpack.c.l.b16 %v5000
    %v5066 = vunpack.c.l.b16 %v5001
    %v5067 = vunpack.c.l.b16 %v5002
    %v5068 = vunpack.c.l.b16 %v5003
    %v5069 = vunpack.c.l.b16 %v5004
    %v5070 = vunpack.c.l.b16 %v5005
    %v5071 = vunpack.c.l.b16 %v5006
    %v5072 = vunpack.c.l.b16 %v5007
    %v5073 = vunpack.c.l.b16 %v5008
    %v5074 = vunpack.c.l.b16 %v5009
    %v5075 = vunpack.c.l.b16 %v5010
    %v5076 = vunpack.c.l.b16 %v5011
    %v5077 = vunpack.c.l.b16 %v5012
    %v5078 = vunpack.c.l.b16 %v5013
    %v5079 = vunpack.c.l.b16 %v5014
    %v5080 = vunpack.c.l.b16 %v5015
    %v5081 = vunpack.c.l.b16 %v5016
    %v5082 = vunpack.c.l.b16 %v5017
    %v5083 = vunpack.c.l.b16 %v5018
    %v5084 = vunpack.c.l.b16 %v5019
    %v5085 = vunpack.c.l.b16 %v5020
    %v5086 = vunpack.c.l.b16 %v5021
    %v5087 = vunpack.c.l.b16 %v5022
    %v5088 = vunpack.c.l.b16 %v5023
    %v5089 = vunpack.c.l.b16 %v5024
    %v5090 = vunpack.c.l.b16 %v5025
    %v5091 = vunpack.c.l.b16 %v5026
    %v5092 = vunpack.c.l.b16 %v5027
    %v5093 = vunpack.c.l.b16 %v5028
    %v5094 = vunpack.c.l.b16 %v5029
    %v5095 = vunpack.c.l.b16 %v5030
    %v5096 = vpack.c.b16 %v5065, %v5064
    %v5097 = vpack.c.b16 %v5067, %v5066
    %v5098 = vpack.c.b16 %v5069, %v5068
    %v5099 = vpack.c.b16 %v5071, %v5070
    %v5100 = vpack.c.b16 %v5073, %v5072
    %v5101 = vpack.c.b16 %v5075, %v5074
    %v5102 = vpack.c.b16 %v5077, %v5076
    %v5103 = vpack.c.b16 %v5079, %v5078
    %v5104 = vpack.c.b16 %v5081, %v5080
    %v5105 = vpack.c.b16 %v5083, %v5082
    %v5106 = vpack.c.b16 %v5085, %v5084
    %v5107 = vpack.c.b16 %v5087, %v5086
    %v5108 = vpack.c.b16 %v5089, %v5088
    %v5109 = vpack.c.b16 %v5091, %v5090
    %v5110 = vpack.c.b16 %v5093, %v5092
    %v5111 = vpack.c.b16 %v5095, %v5094
    %5128 = vmatprep.subr.bf16.mxu0 0
    %5129 = vmatpush1.bf16.msra.mxu0 %v5096
    %5130 = vmatprep.subr.bf16.mxu0 0
    %5131 = vmatpush1.bf16.msra.mxu0 %v5097
    %5132 = vmatprep.subr.bf16.mxu0 0
    %5133 = vmatpush1.bf16.msra.mxu0 %v5098
    %5134 = vmatprep.subr.bf16.mxu0 0
    %5135 = vmatpush1.bf16.msra.mxu0 %v5099
    %5136 = vmatprep.subr.bf16.mxu0 0
    %5137 = vmatpush1.bf16.msra.mxu0 %v5100
    %5138 = vmatprep.subr.bf16.mxu0 0
    %5139 = vmatpush1.bf16.msra.mxu0 %v5101
    %5140 = vmatprep.subr.bf16.mxu0 0
    %5141 = vmatpush1.bf16.msra.mxu0 %v5102
    %5142 = vmatprep.subr.bf16.mxu0 0
    %5143 = vmatpush1.bf16.msra.mxu0 %v5103
    %5144 = vmatprep.subr.bf16.mxu0 0
    %5145 = vmatpush1.bf16.msra.mxu0 %v5104
    %5146 = vmatprep.subr.bf16.mxu0 0
    %5147 = vmatpush1.bf16.msra.mxu0 %v5105
    %5148 = vmatprep.subr.bf16.mxu0 0
    %5149 = vmatpush1.bf16.msra.mxu0 %v5106
    %5150 = vmatprep.subr.bf16.mxu0 0
    %5151 = vmatpush1.bf16.msra.mxu0 %v5107
    %5152 = vmatprep.subr.bf16.mxu0 0
    %5153 = vmatpush1.bf16.msra.mxu0 %v5108
    %5154 = vmatprep.subr.bf16.mxu0 0
    %5155 = vmatpush1.bf16.msra.mxu0 %v5109
    %5156 = vmatprep.subr.bf16.mxu0 0
    %5157 = vmatpush1.bf16.msra.mxu0 %v5110
    %5158 = vmatprep.subr.bf16.mxu0 0
    %5159 = vmatpush1.bf16.msra.mxu0 %v5111
    %5160 = vmatprep.mubr.bf16.mxu0 %v4998
    %5161 = vmatmul.mubr.bf16.gmra.mrb[0].mxu0 %v4997
    %v5162 = vpop.f32.mrb[0].mxu0
    %v5163 = vadd.f32 %v5031, %v5162
    %v5164 = vpop.f32.mrb[0].mxu0
    %v5165 = vpop.f32.mrb[0].mxu0
    %v5166 = vadd.f32 %v5031, %v5165
    %v5167 = vpop.f32.mrb[0].mxu0
    %5168 = vdwg.mxu0
    %v5169 = vmax.f32 %v5163, 0.0
    %v5170 = vmax.f32 %v5166, 0.0
    %v5171 = vpack.c.bf16 %v5170, %v5169
    %v5172 = vld [vmem:[#allocation10] sm:$0xf]
    %v5173 = vld [vmem:[#allocation10 + $0x4] sm:$0xf]
    %v5174 = vld [vmem:[#allocation10 + $0x8] sm:$0xf]
    %v5175 = vld [vmem:[#allocation10 + $0xc] sm:$0xf]
    %v5176 = vld [vmem:[#allocation10 + $0x10] sm:$0xf]
    %v5177 = vld [vmem:[#allocation10 + $0x14] sm:$0xf]
    %v5178 = vld [vmem:[#allocation10 + $0x18] sm:$0xf]
    %v5179 = vld [vmem:[#allocation10 + $0x1c] sm:$0xf]
    %v5180 = vld [vmem:[#allocation10 + $0x20] sm:$0xf]
    %v5181 = vld [vmem:[#allocation10 + $0x24] sm:$0xf]
    %v5182 = vld [vmem:[#allocation10 + $0x28] sm:$0xf]
    %v5183 = vld [vmem:[#allocation10 + $0x2c] sm:$0xf]
    %v5184 = vld [vmem:[#allocation10 + $0x30] sm:$0xf]
    %v5185 = vld [vmem:[#allocation10 + $0x34] sm:$0xf]
    %v5186 = vld [vmem:[#allocation10 + $0x38] sm:$0xf]
    %v5187 = vld [vmem:[#allocation10 + $0x3c] sm:$0xf]
    %v5188 = vld [vmem:[#allocation14 + $0x3] ss:$0 sm:$0xff]
    %v5205 = vunpack.c.l.b16 %v5172
    %v5206 = vunpack.c.l.b16 %v5173
    %v5207 = vunpack.c.l.b16 %v5174
    %v5208 = vunpack.c.l.b16 %v5175
    %v5209 = vunpack.c.l.b16 %v5176
    %v5210 = vunpack.c.l.b16 %v5177
    %v5211 = vunpack.c.l.b16 %v5178
    %v5212 = vunpack.c.l.b16 %v5179
    %v5213 = vunpack.c.l.b16 %v5180
    %v5214 = vunpack.c.l.b16 %v5181
    %v5215 = vunpack.c.l.b16 %v5182
    %v5216 = vunpack.c.l.b16 %v5183
    %v5217 = vunpack.c.l.b16 %v5184
    %v5218 = vunpack.c.l.b16 %v5185
    %v5219 = vunpack.c.l.b16 %v5186
    %v5220 = vunpack.c.l.b16 %v5187
    %v5221 = vpack.c.b16 %v5206, %v5205
    %v5222 = vpack.c.b16 %v5208, %v5207
    %v5223 = vpack.c.b16 %v5210, %v5209
    %v5224 = vpack.c.b16 %v5212, %v5211
    %v5225 = vpack.c.b16 %v5214, %v5213
    %v5226 = vpack.c.b16 %v5216, %v5215
    %v5227 = vpack.c.b16 %v5218, %v5217
    %v5228 = vpack.c.b16 %v5220, %v5219
    %5237 = vmatprep.subr.bf16.mxu0 0
    %5238 = vmatpush1.bf16.msra.mxu0 %v5221
    %5239 = vmatprep.subr.bf16.mxu0 0
    %5240 = vmatpush1.bf16.msra.mxu0 %v5222
    %5241 = vmatprep.subr.bf16.mxu0 0
    %5242 = vmatpush1.bf16.msra.mxu0 %v5223
    %5243 = vmatprep.subr.bf16.mxu0 0
    %5244 = vmatpush1.bf16.msra.mxu0 %v5224
    %5245 = vmatprep.subr.bf16.mxu0 0
    %5246 = vmatpush1.bf16.msra.mxu0 %v5225
    %5247 = vmatprep.subr.bf16.mxu0 0
    %5248 = vmatpush1.bf16.msra.mxu0 %v5226
    %5249 = vmatprep.subr.bf16.mxu0 0
    %5250 = vmatpush1.bf16.msra.mxu0 %v5227
    %5251 = vmatprep.subr.bf16.mxu0 0
    %5252 = vmatpush1.bf16.msra.mxu0 %v5228
    %5253 = vmatprep.subr.bf16.mxu0 0
    %5254 = vmatpush1.bf16.msra.mxu0 0
    %5255 = vmatprep.subr.bf16.mxu0 0
    %5256 = vmatpush1.bf16.msra.mxu0 0
    %5257 = vmatprep.subr.bf16.mxu0 0
    %5258 = vmatpush1.bf16.msra.mxu0 0
    %5259 = vmatprep.subr.bf16.mxu0 0
    %5260 = vmatpush1.bf16.msra.mxu0 0
    %5261 = vmatprep.subr.bf16.mxu0 0
    %5262 = vmatpush1.bf16.msra.mxu0 0
    %5263 = vmatprep.subr.bf16.mxu0 0
    %5264 = vmatpush1.bf16.msra.mxu0 0
    %5265 = vmatprep.subr.bf16.mxu0 0
    %5266 = vmatpush1.bf16.msra.mxu0 0
    %5267 = vmatprep.subr.bf16.mxu0 0
    %5268 = vmatpush1.bf16.msra.mxu0 0
    %5269 = vmatprep.mubr.bf16.mxu0 0
    %5270 = vmatmul.mubr.bf16.gmra.mrb[0].mxu0 %v5171
    %v5271 = vpop.f32.mrb[0].mxu0
    %v5272 = vadd.f32 %v5188, %v5271
    %v5273 = vpop.f32.mrb[0].mxu0
    %v5274 = vpop.f32.mrb[0].mxu0
    %v5275 = vadd.f32 %v5188, %v5274
    %v5276 = vpop.f32.mrb[0].mxu0
    %5277 = vdwg.mxu0
    %v5278 = vmax.f32 %v5272, 0.0
    %v5279 = vmax.f32 %v5275, 0.0
    %v5280 = vpack.c.bf16 %v5279, %v5278
    %v5281 = vld [vmem:[#allocation11] sm:$0xf]
    %v5282 = vld [vmem:[#allocation11 + $0x4] sm:$0xf]
    %v5283 = vld [vmem:[#allocation11 + $0x8] sm:$0xf]
    %v5284 = vld [vmem:[#allocation11 + $0xc] sm:$0xf]
    %v5285 = vld [vmem:[#allocation11 + $0x10] sm:$0xf]
    %v5286 = vld [vmem:[#allocation11 + $0x14] sm:$0xf]
    %v5287 = vld [vmem:[#allocation11 + $0x18] sm:$0xf]
    %v5288 = vld [vmem:[#allocation11 + $0x1c] sm:$0xf]
    %v5289 = vld [vmem:[#allocation11 + $0x20] sm:$0xf]
    %v5290 = vld [vmem:[#allocation11 + $0x24] sm:$0xf]
    %v5291 = vld [vmem:[#allocation11 + $0x28] sm:$0xf]
    %v5292 = vld [vmem:[#allocation11 + $0x2c] sm:$0xf]
    %v5293 = vld [vmem:[#allocation11 + $0x30] sm:$0xf]
    %v5294 = vld [vmem:[#allocation11 + $0x34] sm:$0xf]
    %v5295 = vld [vmem:[#allocation11 + $0x38] sm:$0xf]
    %v5296 = vld [vmem:[#allocation11 + $0x3c] sm:$0xf]
    %v5297 = vld [vmem:[#allocation14 + $0x4] ss:$0 sm:$0xff]
    %v5314 = vunpack.c.l.b16 %v5281
    %v5315 = vunpack.c.l.b16 %v5282
    %v5316 = vunpack.c.l.b16 %v5283
    %v5317 = vunpack.c.l.b16 %v5284
    %v5318 = vunpack.c.l.b16 %v5285
    %v5319 = vunpack.c.l.b16 %v5286
    %v5320 = vunpack.c.l.b16 %v5287
    %v5321 = vunpack.c.l.b16 %v5288
    %v5322 = vunpack.c.l.b16 %v5289
    %v5323 = vunpack.c.l.b16 %v5290
    %v5324 = vunpack.c.l.b16 %v5291
    %v5325 = vunpack.c.l.b16 %v5292
    %v5326 = vunpack.c.l.b16 %v5293
    %v5327 = vunpack.c.l.b16 %v5294
    %v5328 = vunpack.c.l.b16 %v5295
    %v5329 = vunpack.c.l.b16 %v5296
    %v5330 = vpack.c.b16 %v5315, %v5314
    %v5331 = vpack.c.b16 %v5317, %v5316
    %v5332 = vpack.c.b16 %v5319, %v5318
    %v5333 = vpack.c.b16 %v5321, %v5320
    %v5334 = vpack.c.b16 %v5323, %v5322
    %v5335 = vpack.c.b16 %v5325, %v5324
    %v5336 = vpack.c.b16 %v5327, %v5326
    %v5337 = vpack.c.b16 %v5329, %v5328
    %5346 = vmatprep.subr.bf16.mxu0 0
    %5347 = vmatpush1.bf16.msra.mxu0 %v5330
    %5348 = vmatprep.subr.bf16.mxu0 0
    %5349 = vmatpush1.bf16.msra.mxu0 %v5331
    %5350 = vmatprep.subr.bf16.mxu0 0
    %5351 = vmatpush1.bf16.msra.mxu0 %v5332
    %5352 = vmatprep.subr.bf16.mxu0 0
    %5353 = vmatpush1.bf16.msra.mxu0 %v5333
    %5354 = vmatprep.subr.bf16.mxu0 0
    %5355 = vmatpush1.bf16.msra.mxu0 %v5334
    %5356 = vmatprep.subr.bf16.mxu0 0
    %5357 = vmatpush1.bf16.msra.mxu0 %v5335
    %5358 = vmatprep.subr.bf16.mxu0 0
    %5359 = vmatpush1.bf16.msra.mxu0 %v5336
    %5360 = vmatprep.subr.bf16.mxu0 0
    %5361 = vmatpush1.bf16.msra.mxu0 %v5337
    %5362 = vmatprep.subr.bf16.mxu0 0
    %5363 = vmatpush1.bf16.msra.mxu0 0
    %5364 = vmatprep.subr.bf16.mxu0 0
    %5365 = vmatpush1.bf16.msra.mxu0 0
    %5366 = vmatprep.subr.bf16.mxu0 0
    %5367 = vmatpush1.bf16.msra.mxu0 0
    %5368 = vmatprep.subr.bf16.mxu0 0
    %5369 = vmatpush1.bf16.msra.mxu0 0
    %5370 = vmatprep.subr.bf16.mxu0 0
    %5371 = vmatpush1.bf16.msra.mxu0 0
    %5372 = vmatprep.subr.bf16.mxu0 0
    %5373 = vmatpush1.bf16.msra.mxu0 0
    %5374 = vmatprep.subr.bf16.mxu0 0
    %5375 = vmatpush1.bf16.msra.mxu0 0
    %5376 = vmatprep.subr.bf16.mxu0 0
    %5377 = vmatpush1.bf16.msra.mxu0 0
    %5378 = vmatprep.mubr.bf16.mxu0 0
    %5379 = vmatmul.mubr.bf16.gmra.mrb[0].mxu0 %v5280
    %v5380 = vpop.f32.mrb[0].mxu0
    %v5381 = vadd.f32 %v5297, %v5380
    %v5382 = vpop.f32.mrb[0].mxu0
    %v5383 = vpop.f32.mrb[0].mxu0
    %v5384 = vadd.f32 %v5297, %v5383
    %v5385 = vpop.f32.mrb[0].mxu0
    %5386 = vdwg.mxu0
    %v5387 = vmax.f32 %v5381, 0.0
    %v5388 = vmax.f32 %v5384, 0.0
    %v5389 = vpack.c.bf16 %v5388, %v5387
    %v5390 = vld [vmem:[#allocation13] sm:$0xf]
    %v5391 = vld [vmem:[#allocation13 + $0x4] sm:$0xf]
    %v5392 = vld [vmem:[#allocation13 + $0x8] sm:$0xf]
    %v5393 = vld [vmem:[#allocation13 + $0xc] sm:$0xf]
    %v5394 = vld [vmem:[#allocation13 + $0x10] sm:$0xf]
    %v5395 = vld [vmem:[#allocation13 + $0x14] sm:$0xf]
    %v5396 = vld [vmem:[#allocation13 + $0x18] sm:$0xf]
    %v5397 = vld [vmem:[#allocation13 + $0x1c] sm:$0xf]
    %v5398 = vld [vmem:[#allocation13 + $0x20] sm:$0xf]
    %v5399 = vld [vmem:[#allocation13 + $0x24] sm:$0xf]
    %v5400 = vld [vmem:[#allocation13 + $0x28] sm:$0xf]
    %v5401 = vld [vmem:[#allocation13 + $0x2c] sm:$0xf]
    %v5402 = vld [vmem:[#allocation13 + $0x30] sm:$0xf]
    %v5403 = vld [vmem:[#allocation13 + $0x34] sm:$0xf]
    %v5404 = vld [vmem:[#allocation13 + $0x38] sm:$0xf]
    %v5405 = vld [vmem:[#allocation13 + $0x3c] sm:$0xf]
    %v5406 = vld [vmem:[#allocation14 + $0x5] ss:$0 sm:$0xff]
    %v5423 = vunpack.c.l.b16 %v5390
    %v5424 = vunpack.c.l.b16 %v5391
    %v5425 = vunpack.c.l.b16 %v5392
    %v5426 = vunpack.c.l.b16 %v5393
    %v5427 = vunpack.c.l.b16 %v5394
    %v5428 = vunpack.c.l.b16 %v5395
    %v5429 = vunpack.c.l.b16 %v5396
    %v5430 = vunpack.c.l.b16 %v5397
    %v5431 = vunpack.c.l.b16 %v5398
    %v5432 = vunpack.c.l.b16 %v5399
    %v5433 = vunpack.c.l.b16 %v5400
    %v5434 = vunpack.c.l.b16 %v5401
    %v5435 = vunpack.c.l.b16 %v5402
    %v5436 = vunpack.c.l.b16 %v5403
    %v5437 = vunpack.c.l.b16 %v5404
    %v5438 = vunpack.c.l.b16 %v5405
    %v5439 = vpack.c.b16 %v5424, %v5423
    %v5440 = vpack.c.b16 %v5426, %v5425
    %v5441 = vpack.c.b16 %v5428, %v5427
    %v5442 = vpack.c.b16 %v5430, %v5429
    %v5443 = vpack.c.b16 %v5432, %v5431
    %v5444 = vpack.c.b16 %v5434, %v5433
    %v5445 = vpack.c.b16 %v5436, %v5435
    %v5446 = vpack.c.b16 %v5438, %v5437
    %5455 = vmatprep.subr.bf16.mxu0 0
    %5456 = vmatpush1.bf16.msra.mxu0 %v5439
    %5457 = vmatprep.subr.bf16.mxu0 0
    %5458 = vmatpush1.bf16.msra.mxu0 %v5440
    %5459 = vmatprep.subr.bf16.mxu0 0
    %5460 = vmatpush1.bf16.msra.mxu0 %v5441
    %5461 = vmatprep.subr.bf16.mxu0 0
    %5462 = vmatpush1.bf16.msra.mxu0 %v5442
    %5463 = vmatprep.subr.bf16.mxu0 0
    %5464 = vmatpush1.bf16.msra.mxu0 %v5443
    %5465 = vmatprep.subr.bf16.mxu0 0
    %5466 = vmatpush1.bf16.msra.mxu0 %v5444
    %5467 = vmatprep.subr.bf16.mxu0 0
    %5468 = vmatpush1.bf16.msra.mxu0 %v5445
    %5469 = vmatprep.subr.bf16.mxu0 0
    %5470 = vmatpush1.bf16.msra.mxu0 %v5446
    %5471 = vmatprep.subr.bf16.mxu0 0
    %5472 = vmatpush1.bf16.msra.mxu0 0
    %5473 = vmatprep.subr.bf16.mxu0 0
    %5474 = vmatpush1.bf16.msra.mxu0 0
    %5475 = vmatprep.subr.bf16.mxu0 0
    %5476 = vmatpush1.bf16.msra.mxu0 0
    %5477 = vmatprep.subr.bf16.mxu0 0
    %5478 = vmatpush1.bf16.msra.mxu0 0
    %5479 = vmatprep.subr.bf16.mxu0 0
    %5480 = vmatpush1.bf16.msra.mxu0 0
    %5481 = vmatprep.subr.bf16.mxu0 0
    %5482 = vmatpush1.bf16.msra.mxu0 0
    %5483 = vmatprep.subr.bf16.mxu0 0
    %5484 = vmatpush1.bf16.msra.mxu0 0
    %5485 = vmatprep.subr.bf16.mxu0 0
    %5486 = vmatpush1.bf16.msra.mxu0 0
    %5487 = vmatprep.mubr.bf16.mxu0 0
    %5488 = vmatmul.mubr.bf16.gmra.mrb[0].mxu0 %v5389
    %v5489 = vpop.f32.mrb[0].mxu0
    %v5490 = vadd.f32 %v5406, %v5489
    %v5491 = vpop.f32.mrb[0].mxu0
    %v5492 = vpop.f32.mrb[0].mxu0
    %v5493 = vadd.f32 %v5406, %v5492
    %v5494 = vpop.f32.mrb[0].mxu0
    %5495 = vdwg.mxu0
    %5496 = vst [vmem:[#allocation16] sm:$0xff] %v5490
    %5497 = vst [vmem:[#allocation16 + $0x8] sm:$0xff] %v5493
    // Predicated region
    $region66: #{tpu_custom_call.1} parent=1 // pred_check
      _
    $region67: #{tpu_custom_call.1} parent=1 // pred_check_branch
      %5499 = sbr.rel (0) target = $region69
    $region68: #{tpu_custom_call.1} parent=1 // pred_region
      %s5501 = ssub.s32 256, 256
      %5502 = vsyncadd [#allocation4], %s5501
      %s5503 = sshll.u32 [#allocation16], 4
      %s5504 = int_to_ptr.vmem [resolvable:$true] %s5503
      %5509 = dma.vmem_to_hbm [thread:$0]  %s5504, 256, %s8, [#allocation4], 128, 128, 8
    $region69: #{tpu_custom_call.1} parent=1 // pred_fallthru
      _
    // Predicated region
    $region70: #{tpu_custom_call.1} parent=1 // pred_check
      _
    $region71: #{tpu_custom_call.1} parent=1 // pred_check_branch
      %5511 = sbr.rel (0) target = $region73
    $region72: #{tpu_custom_call.1} parent=1 // pred_region
      %5512 = dma.done [#allocation4], 256
    $region73: #{tpu_custom_call.1} parent=1 // pred_fallthru
      _
    %5513 = vsyncpa [#allocation3], 1
    %5514 = vsyncpa [#allocation6], 1
    %5515 = vsyncpa [#allocation9], 1
    %5516 = vsyncpa [#allocation12], 1
    %5517 = vsyncpa [#allocation15], 1
    %5518 = vsyncpa [#allocation4], 1

</llo_original>
